<compile_context>
chip_gen: v7x
topology: tpu7x:2x2x1
jax: 0.10.0
libtpu: 0.0.40
codegen_flags: <defaults>
</compile_context>

<pallas_src>
import functools

import jax
import jax.numpy as jnp
import numpy as np
from jax import lax
from jax.experimental import pallas as pl
from jax.experimental.pallas import tpu as pltpu


# --------------------------------- utilities ---------------------------------

def _round_up(x, m):
    return ((x + m - 1) // m) * m


def _pad_axis(x, axis, target):
    if x.shape[axis] == target:
        return x
    cfg = [(0, 0)] * x.ndim
    cfg[axis] = (0, target - x.shape[axis])
    return jnp.pad(x, cfg)


def _pad_gate_cols(w, H, Hp):
    """(rows, 3H) -> (rows, 3*Hp): pad each of the r/z/n gate blocks to Hp lanes."""
    return jnp.concatenate(
        [_pad_axis(w[:, g * H:(g + 1) * H], 1, Hp) for g in range(3)], axis=1)


def _gru_cell(gi, gh, bhn, h, H):
    """PyTorch GRU cell. gi already contains b_ih (+ b_hh for r/z); bhn = b_hh_n."""
    r = jax.nn.sigmoid(gi[:, 0:H] + gh[:, 0:H])
    z = jax.nn.sigmoid(gi[:, H:2 * H] + gh[:, H:2 * H])
    n = jnp.tanh(gi[:, 2 * H:3 * H] + r * (gh[:, 2 * H:3 * H] + bhn))
    return (1.0 - z) * n + z * h


# ---------------------------------- kernels -----------------------------------

def bigru_layer_kernel(x_ref, wih_ref, whhf_ref, whhr_ref, bi_ref, bhnf_ref, bhnr_ref,
                       out_ref, hf_ref, hr_ref, gi_scr, *, T, H):
    """Fused forward+reverse GRU layer, time-major, lane-padded.

    x_ref   : (T, Bp, Ein_p)     wih_ref : (Ein_p, 6H)  cols = [fwd r,z,n | rev r,z,n]
    whh*_ref: (H, 3H)            bi_ref  : (1, 6H)  = b_ih + [b_hh_r, b_hh_z, 0]
    bhn*_ref: (1, H)             out_ref : (T, Bp, 2H)  = [fwd | rev]
    h*_ref  : (Bp, H)            gi_scr  : (T, Bp, 6H)  VMEM scratch
    """
    Bp, Ep = x_ref.shape[1], x_ref.shape[2]

    # One big MXU matmul for all timesteps & both directions (off the serial path).
    gi = jnp.dot(x_ref[...].reshape(T * Bp, Ep), wih_ref[...],
                 preferred_element_type=jnp.float32) + bi_ref[...]
    gi_scr[...] = gi.reshape(T, Bp, 6 * H)

    # Hoisted broadcasts (JAX does not CSE broadcast_in_dim inside the loop).
    bhn_f = jnp.broadcast_to(bhnf_ref[...], (Bp, H))
    bhn_r = jnp.broadcast_to(bhnr_ref[...], (Bp, H))

    def step(i, carry):
        hf, hr = carry
        tf = i
        tr = T - 1 - i
        # Two independent (Bp,H)x(H,3H) GEMMs -> ILP across directions.
        ghf = jnp.dot(hf, whhf_ref[...], preferred_element_type=jnp.float32)
        ghr = jnp.dot(hr, whhr_ref[...], preferred_element_type=jnp.float32)
        gi_f = gi_scr[tf]
        gi_r = gi_scr[tr]
        hf_new = _gru_cell(gi_f[:, 0:3 * H], ghf, bhn_f, hf, H)
        hr_new = _gru_cell(gi_r[:, 3 * H:6 * H], ghr, bhn_r, hr, H)
        out_ref[tf, :, 0:H] = hf_new              # lane-aligned full-vreg stores
        out_ref[tr, :, H:2 * H] = hr_new
        return hf_new, hr_new

    h0 = jnp.zeros((Bp, H), jnp.float32)
    hf_fin, hr_fin = lax.fori_loop(0, T, step, (h0, h0), unroll=True)
    hf_ref[...] = hf_fin
    hr_ref[...] = hr_fin


def gru_layer_kernel(x_ref, wih_ref, whh_ref, bi_ref, bhn_ref,
                     out_ref, h_ref, gi_scr, *, T, H):
    """Unidirectional GRU layer (use_birnn=False path)."""
    Bp, Ep = x_ref.shape[1], x_ref.shape[2]
    gi = jnp.dot(x_ref[...].reshape(T * Bp, Ep), wih_ref[...],
                 preferred_element_type=jnp.float32) + bi_ref[...]
    gi_scr[...] = gi.reshape(T, Bp, 3 * H)
    bhn = jnp.broadcast_to(bhn_ref[...], (Bp, H))

    def step(t, h):
        gh = jnp.dot(h, whh_ref[...], preferred_element_type=jnp.float32)
        h_new = _gru_cell(gi_scr[t], gh, bhn, h, H)
        out_ref[t] = h_new
        return h_new

    h_fin = lax.fori_loop(0, T, step, jnp.zeros((Bp, H), jnp.float32), unroll=True)
    h_ref[...] = h_fin


# ------------------------------ pallas_call wrappers ---------------------------

def run_bigru_layer(x_tm, lp, *, Hp):
    T, Bp, _ = x_tm.shape
    kernel = functools.partial(bigru_layer_kernel, T=T, H=Hp)
    vmem = pl.BlockSpec(memory_space=pltpu.MemorySpace.VMEM)
    return pl.pallas_call(
        kernel,
        out_shape=(jax.ShapeDtypeStruct((T, Bp, 2 * Hp), jnp.float32),
                   jax.ShapeDtypeStruct((Bp, Hp), jnp.float32),
                   jax.ShapeDtypeStruct((Bp, Hp), jnp.float32)),
        in_specs=[vmem] * 7,
        out_specs=(vmem, vmem, vmem),
        scratch_shapes=[pltpu.VMEM((T, Bp, 6 * Hp), jnp.float32)],
    )(x_tm, lp["wih"], lp["whh_f"], lp["whh_r"], lp["bi"], lp["bhn_f"], lp["bhn_r"])


def run_gru_layer(x_tm, lp, *, Hp):
    T, Bp, _ = x_tm.shape
    kernel = functools.partial(gru_layer_kernel, T=T, H=Hp)
    vmem = pl.BlockSpec(memory_space=pltpu.MemorySpace.VMEM)
    return pl.pallas_call(
        kernel,
        out_shape=(jax.ShapeDtypeStruct((T, Bp, Hp), jnp.float32),
                   jax.ShapeDtypeStruct((Bp, Hp), jnp.float32)),
        in_specs=[vmem] * 5,
        out_specs=(vmem, vmem),
        scratch_shapes=[pltpu.VMEM((T, Bp, 3 * Hp), jnp.float32)],
    )(x_tm, lp["wih"], lp["whh"], lp["bi"], lp["bhn"])


# -------------------------------- parameters -----------------------------------

def init_torch_style_params(key, vocab_size, embed_dim, hidden_dim, n_layers, use_birnn):
    """Parameters with PyTorch shapes/init (Embedding ~ N(0,1); GRU ~ U(+-1/sqrt(H)))."""
    dirs = 2 if use_birnn else 1
    key, k_e = jax.random.split(key)
    embed = jax.random.normal(k_e, (vocab_size, embed_dim), jnp.float32)
    bound = float(hidden_dim) ** -0.5
    layers = []
    for li in range(n_layers):
        in_dim = embed_dim if li == 0 else hidden_dim * dirs
        dlist = []
        for _ in range(dirs):
            key, k1, k2, k3, k4 = jax.random.split(key, 5)
            dlist.append(dict(
                w_ih=jax.random.uniform(k1, (3 * hidden_dim, in_dim), jnp.float32, -bound, bound),
                w_hh=jax.random.uniform(k2, (3 * hidden_dim, hidden_dim), jnp.float32, -bound, bound),
                b_ih=jax.random.uniform(k3, (3 * hidden_dim,), jnp.float32, -bound, bound),
                b_hh=jax.random.uniform(k4, (3 * hidden_dim,), jnp.float32, -bound, bound)))
        layers.append(dlist)
    return {"embed": embed, "gru": layers}


def prepare_params(raw, embed_dim, hidden_dim, use_birnn):
    """Convert PyTorch-layout weights into the padded, gate-fused kernel layout."""
    dirs = 2 if use_birnn else 1
    H = hidden_dim
    Hp = _round_up(H, 128)
    Ep = _round_up(embed_dim, 128)
    out = {"embed": raw["embed"], "gru": [],
           "config": dict(H=H, Hp=Hp, Ep=Ep, dirs=dirs)}
    for li, dlist in enumerate(raw["gru"]):
        prepped = []
        for p in dlist:
            wih_t = _pad_gate_cols(p["w_ih"].T, H, Hp)             # (in_dim, 3Hp)
            if li == 0:
                wih_t = _pad_axis(wih_t, 0, Ep)                    # (Ep, 3Hp)
            elif dirs == 2:
                # rows [0:H] = fwd half of the concat input, rows [H:2H] = rev half,
                # remapped onto the padded (fwd|rev) lane layout of the previous layer.
                wih_t = jnp.concatenate(
                    [_pad_axis(wih_t[0:H], 0, Hp),
                     _pad_axis(wih_t[H:2 * H], 0, Hp)], axis=0)    # (2Hp, 3Hp)
            else:
                wih_t = _pad_axis(wih_t, 0, Hp)                    # (Hp, 3Hp)
            whh_t = _pad_axis(_pad_gate_cols(p["w_hh"].T, H, Hp), 0, Hp)   # (Hp, 3Hp)
            b_ih = _pad_gate_cols(p["b_ih"].reshape(1, 3 * H), H, Hp)      # (1, 3Hp)
            b_hh = _pad_gate_cols(p["b_hh"].reshape(1, 3 * H), H, Hp)      # (1, 3Hp)
            bi = b_ih.at[:, 0:2 * Hp].add(b_hh[:, 0:2 * Hp])       # fold b_hh_{r,z}
            bhn = b_hh[:, 2 * Hp:3 * Hp]                           # keep b_hh_n in-loop
            prepped.append((wih_t, whh_t, bi, bhn))
        if dirs == 2:
            (wf, whf, bif, bhnf), (wr, whr, bir, bhnr) = prepped
            out["gru"].append(dict(
                wih=jnp.concatenate([wf, wr], axis=1),   # (in_p, 6Hp)
                bi=jnp.concatenate([bif, bir], axis=1),  # (1, 6Hp)
                whh_f=whf, whh_r=whr, bhn_f=bhnf, bhn_r=bhnr))
        else:
            (wf, whf, bif, bhnf), = prepped
            out["gru"].append(dict(wih=wf, bi=bif, whh=whf, bhn=bhnf))
    return out


# ---------------------------------- forward ------------------------------------

def enc_rnn_forward(params, inputs):
    """inputs: (B, T) int32 -> (enc_outs (B,T,H*dirs), hidden (L*dirs, B, H))."""
    cfg = params["config"]
    H, Hp, Ep, dirs = cfg["H"], cfg["Hp"], cfg["Ep"], cfg["dirs"]
    B, T = inputs.shape
    Bp = _round_up(B, 8)

    embs = jnp.take(params["embed"], inputs, axis=0)               # (B, T, E) gather (glue)
    # Dropout(embs) -> identity (eval mode).
    x_tm = jnp.transpose(embs, (1, 0, 2)).astype(jnp.float32)      # (T, B, E)
    x_tm = _pad_axis(_pad_axis(x_tm, 1, Bp), 2, Ep)                # (T, Bp, Ep)

    hiddens = []
    layer_in = x_tm
    for lp in params["gru"]:
        if dirs == 2:
            layer_in, hf, hr = run_bigru_layer(layer_in, lp, Hp=Hp)
            hiddens.append(hf[:B, :H])
            hiddens.append(hr[:B, :H])
        else:
            layer_in, hl = run_gru_layer(layer_in, lp, Hp=Hp)
            hiddens.append(hl[:B, :H])

    if dirs == 2:
        enc = jnp.concatenate(
            [layer_in[:, :B, :H], layer_in[:, :B, Hp:Hp + H]], axis=-1)
    else:
        enc = layer_in[:, :B, :H]
    enc_outs = jnp.transpose(enc, (1, 0, 2))                       # (B, T, H*dirs)
    hidden = jnp.stack(hiddens, axis=0)                            # (L*dirs, B, H)
    # Dropout(enc_outs) -> identity (eval mode).
    return enc_outs, hidden


# --------------------------------- reference ------------------------------------

def reference_forward(raw, inputs, hidden_dim, use_birnn):
    """Pure NumPy float64 PyTorch-GRU reference (eval mode)."""
    H = hidden_dim
    emb = np.asarray(raw["embed"], np.float64)
    x = emb[np.asarray(inputs)]                                    # (B, T, E)
    B, T, _ = x.shape
    layer_in = x
    hiddens = []
    for dlist in raw["gru"]:
        outs = []
        for d, p in enumerate(dlist):
            w_ih = np.asarray(p["w_ih"], np.float64)
            w_hh = np.asarray(p["w_hh"], np.float64)
            b_ih = np.asarray(p["b_ih"], np.float64)
            b_hh = np.asarray(p["b_hh"], np.float64)
            h = np.zeros((B, H))
            out = np.zeros((B, T, H))
            order = range(T - 1, -1, -1) if d == 1 else range(T)
            for t in order:
                gi = layer_in[:, t] @ w_ih.T + b_ih
                gh = h @ w_hh.T + b_hh
                r = 1.0 / (1.0 + np.exp(-(gi[:, :H] + gh[:, :H])))
                z = 1.0 / (1.0 + np.exp(-(gi[:, H:2 * H] + gh[:, H:2 * H])))
                n = np.tanh(gi[:, 2 * H:] + r * gh[:, 2 * H:])
                h = (1.0 - z) * n + z * h
                out[:, t] = h
            outs.append(out)
            hiddens.append(h)
        layer_in = np.concatenate(outs, axis=-1)
    return layer_in, np.stack(hiddens, axis=0)


if __name__ == "__main__":
    vocab_size, embed_dim, hidden_dim = 50, 32, 32
    n_layers, use_birnn, dout = 2, True, 0.1   # dout unused (eval-mode identity)
    B, T = 2, 8

    key = jax.random.PRNGKey(0)
    key, k_in = jax.random.split(key)
    raw = init_torch_style_params(key, vocab_size, embed_dim, hidden_dim, n_layers, use_birnn)
    params = prepare_params(raw, embed_dim, hidden_dim, use_birnn)
    inputs = jax.random.randint(k_in, (B, T), 0, vocab_size, dtype=jnp.int32)

    enc_outs, hidden = enc_rnn_forward(params, inputs)
    jax.block_until_ready((enc_outs, hidden))

    dirs = 2 if use_birnn else 1
    assert enc_outs.shape == (B, T, hidden_dim * dirs)
    assert hidden.shape == (n_layers * dirs, B, hidden_dim)

    ref_outs, ref_hidden = reference_forward(raw, inputs, hidden_dim, use_birnn)
    np.testing.assert_allclose(np.asarray(enc_outs), ref_outs, atol=2e-2, rtol=2e-2)
    np.testing.assert_allclose(np.asarray(hidden), ref_hidden, atol=2e-2, rtol=2e-2)
    print("KERNEL_OK")
</pallas_src>

<mosaic_0001>
module attributes {stable_mosaic.version = 11 : i64} {
  func.func @bigru_layer_kernel(%arg0: memref<8x8x128xf32, #tpu.memory_space<vmem>>, %arg1: memref<128x768xf32, #tpu.memory_space<vmem>>, %arg2: memref<128x384xf32, #tpu.memory_space<vmem>>, %arg3: memref<128x384xf32, #tpu.memory_space<vmem>>, %arg4: memref<1x768xf32, #tpu.memory_space<vmem>>, %arg5: memref<1x128xf32, #tpu.memory_space<vmem>>, %arg6: memref<1x128xf32, #tpu.memory_space<vmem>>, %arg7: memref<8x8x256xf32, #tpu.memory_space<vmem>>, %arg8: memref<8x128xf32, #tpu.memory_space<vmem>>, %arg9: memref<8x128xf32, #tpu.memory_space<vmem>>, %arg10: memref<8x8x768xf32, #tpu.memory_space<vmem>>) attributes {dimension_semantics = [], scalar_prefetch = 0 : i64, scratch_operands = 1 : i64, tpu.core_type = #tpu.core_type<tc>} {
    %c0 = arith.constant 0 : index
    %c0_0 = arith.constant 0 : index
    %c0_1 = arith.constant 0 : index
    %0 = vector.load %arg0[%c0, %c0_0, %c0_1] : memref<8x8x128xf32, #tpu.memory_space<vmem>>, vector<8x8x128xf32>
    %1 = vector.shape_cast %0 : vector<8x8x128xf32> to vector<64x128xf32>
    %c0_2 = arith.constant 0 : index
    %c0_3 = arith.constant 0 : index
    %2 = vector.load %arg1[%c0_2, %c0_3] : memref<128x768xf32, #tpu.memory_space<vmem>>, vector<128x768xf32>
    %cst = arith.constant dense<0.000000e+00> : vector<64x768xf32>
    %3 = tpu.matmul %1, %2, %cst {dimension_numbers = #tpu.dot_dimension_numbers<[1], [0], [0], [1], [0, 0, 1, 1], [], []>} : vector<64x128xf32>, vector<128x768xf32>, vector<64x768xf32> -> vector<64x768xf32>
    %c0_4 = arith.constant 0 : index
    %c0_5 = arith.constant 0 : index
    %4 = vector.load %arg4[%c0_4, %c0_5] : memref<1x768xf32, #tpu.memory_space<vmem>>, vector<1x768xf32>
    %5 = vector.broadcast %4 : vector<1x768xf32> to vector<64x768xf32>
    %6 = arith.addf %3, %5 : vector<64x768xf32>
    %7 = vector.shape_cast %6 : vector<64x768xf32> to vector<8x8x768xf32>
    %c0_6 = arith.constant 0 : index
    %c0_7 = arith.constant 0 : index
    %c0_8 = arith.constant 0 : index
    %8 = vector.load %arg10[%c0_6, %c0_7, %c0_8] : memref<8x8x768xf32, #tpu.memory_space<vmem>>, vector<8x8x768xf32>
    tpu.vector_store %arg10[%c0_6, %c0_7, %c0_8], %7 {strides = array<i32>} : memref<8x8x768xf32, #tpu.memory_space<vmem>>, vector<8x8x768xf32>,
    %c0_9 = arith.constant 0 : index
    %c0_10 = arith.constant 0 : index
    %9 = vector.load %arg5[%c0_9, %c0_10] : memref<1x128xf32, #tpu.memory_space<vmem>>, vector<1x128xf32>
    %10 = vector.shape_cast %9 : vector<1x128xf32> to vector<1x128xf32>
    %11 = vector.broadcast %10 : vector<1x128xf32> to vector<8x128xf32>
    %c0_11 = arith.constant 0 : index
    %c0_12 = arith.constant 0 : index
    %12 = vector.load %arg6[%c0_11, %c0_12] : memref<1x128xf32, #tpu.memory_space<vmem>>, vector<1x128xf32>
    %13 = vector.shape_cast %12 : vector<1x128xf32> to vector<1x128xf32>
    %14 = vector.broadcast %13 : vector<1x128xf32> to vector<8x128xf32>
    %cst_13 = arith.constant 0.000000e+00 : f32
    %15 = vector.broadcast %cst_13 : f32 to vector<8x128xf32>
    %c0_i32 = arith.constant 0 : i32
    %c7_i32 = arith.constant 7 : i32
    %16 = arith.subi %c7_i32, %c0_i32 : i32
    %c0_14 = arith.constant 0 : index
    %c0_15 = arith.constant 0 : index
    %17 = vector.load %arg2[%c0_14, %c0_15] : memref<128x384xf32, #tpu.memory_space<vmem>>, vector<128x384xf32>
    %cst_16 = arith.constant dense<0.000000e+00> : vector<8x384xf32>
    %18 = tpu.matmul %15, %17, %cst_16 {dimension_numbers = #tpu.dot_dimension_numbers<[1], [0], [0], [1], [0, 0, 1, 1], [], []>} : vector<8x128xf32>, vector<128x384xf32>, vector<8x384xf32> -> vector<8x384xf32>
    %c0_17 = arith.constant 0 : index
    %c0_18 = arith.constant 0 : index
    %19 = vector.load %arg3[%c0_17, %c0_18] : memref<128x384xf32, #tpu.memory_space<vmem>>, vector<128x384xf32>
    %cst_19 = arith.constant dense<0.000000e+00> : vector<8x384xf32>
    %20 = tpu.matmul %15, %19, %cst_19 {dimension_numbers = #tpu.dot_dimension_numbers<[1], [0], [0], [1], [0, 0, 1, 1], [], []>} : vector<8x128xf32>, vector<128x384xf32>, vector<8x384xf32> -> vector<8x384xf32>
    %21 = arith.index_cast %c0_i32 : i32 to index
    %c0_20 = arith.constant 0 : index
    %c0_21 = arith.constant 0 : index
    %22 = vector.load %arg10[%21, %c0_20, %c0_21] : memref<8x8x768xf32, #tpu.memory_space<vmem>>, vector<1x8x768xf32>
    %23 = vector.shape_cast %22 : vector<1x8x768xf32> to vector<8x768xf32>
    %24 = arith.index_cast %16 : i32 to index
    %c0_22 = arith.constant 0 : index
    %c0_23 = arith.constant 0 : index
    %25 = vector.load %arg10[%24, %c0_22, %c0_23] : memref<8x8x768xf32, #tpu.memory_space<vmem>>, vector<1x8x768xf32>
    %26 = vector.shape_cast %25 : vector<1x8x768xf32> to vector<8x768xf32>
    %27 = vector.extract_strided_slice %23 {offsets = [0, 0], sizes = [8, 384], strides = [1, 1]} : vector<8x768xf32> to vector<8x384xf32>
    %28 = vector.extract_strided_slice %27 {offsets = [0, 0], sizes = [8, 128], strides = [1, 1]} : vector<8x384xf32> to vector<8x128xf32>
    %29 = vector.extract_strided_slice %18 {offsets = [0, 0], sizes = [8, 128], strides = [1, 1]} : vector<8x384xf32> to vector<8x128xf32>
    %30 = arith.addf %28, %29 : vector<8x128xf32>
    %31 = arith.negf %30 : vector<8x128xf32>
    %32 = math.exp %31 : vector<8x128xf32>
    %cst_24 = arith.constant 1.000000e+00 : f32
    %33 = vector.broadcast %cst_24 : f32 to vector<8x128xf32>
    %34 = arith.addf %33, %32 : vector<8x128xf32>
    %35 = arith.divf %33, %34 : vector<8x128xf32>
    %36 = vector.extract_strided_slice %27 {offsets = [0, 128], sizes = [8, 128], strides = [1, 1]} : vector<8x384xf32> to vector<8x128xf32>
    %37 = vector.extract_strided_slice %18 {offsets = [0, 128], sizes = [8, 128], strides = [1, 1]} : vector<8x384xf32> to vector<8x128xf32>
    %38 = arith.addf %36, %37 : vector<8x128xf32>
    %39 = arith.negf %38 : vector<8x128xf32>
    %40 = math.exp %39 : vector<8x128xf32>
    %cst_25 = arith.constant 1.000000e+00 : f32
    %41 = vector.broadcast %cst_25 : f32 to vector<8x128xf32>
    %42 = arith.addf %41, %40 : vector<8x128xf32>
    %43 = arith.divf %41, %42 : vector<8x128xf32>
    %44 = vector.extract_strided_slice %27 {offsets = [0, 256], sizes = [8, 128], strides = [1, 1]} : vector<8x384xf32> to vector<8x128xf32>
    %45 = vector.extract_strided_slice %18 {offsets = [0, 256], sizes = [8, 128], strides = [1, 1]} : vector<8x384xf32> to vector<8x128xf32>
    %46 = arith.addf %45, %11 : vector<8x128xf32>
    %47 = arith.mulf %35, %46 : vector<8x128xf32>
    %48 = arith.addf %44, %47 : vector<8x128xf32>
    %49 = math.tanh %48 : vector<8x128xf32>
    %cst_26 = arith.constant 1.000000e+00 : f32
    %50 = vector.broadcast %cst_26 : f32 to vector<8x128xf32>
    %51 = arith.subf %50, %43 : vector<8x128xf32>
    %52 = arith.mulf %51, %49 : vector<8x128xf32>
    %53 = arith.mulf %43, %15 : vector<8x128xf32>
    %54 = arith.addf %52, %53 : vector<8x128xf32>
    %55 = vector.extract_strided_slice %26 {offsets = [0, 384], sizes = [8, 384], strides = [1, 1]} : vector<8x768xf32> to vector<8x384xf32>
    %56 = vector.extract_strided_slice %55 {offsets = [0, 0], sizes = [8, 128], strides = [1, 1]} : vector<8x384xf32> to vector<8x128xf32>
    %57 = vector.extract_strided_slice %20 {offsets = [0, 0], sizes = [8, 128], strides = [1, 1]} : vector<8x384xf32> to vector<8x128xf32>
    %58 = arith.addf %56, %57 : vector<8x128xf32>
    %59 = arith.negf %58 : vector<8x128xf32>
    %60 = math.exp %59 : vector<8x128xf32>
    %cst_27 = arith.constant 1.000000e+00 : f32
    %61 = vector.broadcast %cst_27 : f32 to vector<8x128xf32>
    %62 = arith.addf %61, %60 : vector<8x128xf32>
    %63 = arith.divf %61, %62 : vector<8x128xf32>
    %64 = vector.extract_strided_slice %55 {offsets = [0, 128], sizes = [8, 128], strides = [1, 1]} : vector<8x384xf32> to vector<8x128xf32>
    %65 = vector.extract_strided_slice %20 {offsets = [0, 128], sizes = [8, 128], strides = [1, 1]} : vector<8x384xf32> to vector<8x128xf32>
    %66 = arith.addf %64, %65 : vector<8x128xf32>
    %67 = arith.negf %66 : vector<8x128xf32>
    %68 = math.exp %67 : vector<8x128xf32>
    %cst_28 = arith.constant 1.000000e+00 : f32
    %69 = vector.broadcast %cst_28 : f32 to vector<8x128xf32>
    %70 = arith.addf %69, %68 : vector<8x128xf32>
    %71 = arith.divf %69, %70 : vector<8x128xf32>
    %72 = vector.extract_strided_slice %55 {offsets = [0, 256], sizes = [8, 128], strides = [1, 1]} : vector<8x384xf32> to vector<8x128xf32>
    %73 = vector.extract_strided_slice %20 {offsets = [0, 256], sizes = [8, 128], strides = [1, 1]} : vector<8x384xf32> to vector<8x128xf32>
    %74 = arith.addf %73, %14 : vector<8x128xf32>
    %75 = arith.mulf %63, %74 : vector<8x128xf32>
    %76 = arith.addf %72, %75 : vector<8x128xf32>
    %77 = math.tanh %76 : vector<8x128xf32>
    %cst_29 = arith.constant 1.000000e+00 : f32
    %78 = vector.broadcast %cst_29 : f32 to vector<8x128xf32>
    %79 = arith.subf %78, %71 : vector<8x128xf32>
    %80 = arith.mulf %79, %77 : vector<8x128xf32>
    %81 = arith.mulf %71, %15 : vector<8x128xf32>
    %82 = arith.addf %80, %81 : vector<8x128xf32>
    %83 = arith.index_cast %c0_i32 : i32 to index
    %c0_30 = arith.constant 0 : index
    %c0_31 = arith.constant 0 : index
    %84 = vector.load %arg7[%83, %c0_30, %c0_31] : memref<8x8x256xf32, #tpu.memory_space<vmem>>, vector<1x8x128xf32>
    %85 = vector.shape_cast %84 : vector<1x8x128xf32> to vector<8x128xf32>
    %86 = vector.shape_cast %54 : vector<8x128xf32> to vector<1x8x128xf32>
    tpu.vector_store %arg7[%83, %c0_30, %c0_31], %86 {strides = array<i32>} : memref<8x8x256xf32, #tpu.memory_space<vmem>>, vector<1x8x128xf32>,
    %87 = arith.index_cast %16 : i32 to index
    %c0_32 = arith.constant 0 : index
    %c128 = arith.constant 128 : index
    %88 = vector.load %arg7[%87, %c0_32, %c128] : memref<8x8x256xf32, #tpu.memory_space<vmem>>, vector<1x8x128xf32>
    %89 = vector.shape_cast %88 : vector<1x8x128xf32> to vector<8x128xf32>
    %90 = vector.shape_cast %82 : vector<8x128xf32> to vector<1x8x128xf32>
    tpu.vector_store %arg7[%87, %c0_32, %c128], %90 {strides = array<i32>} : memref<8x8x256xf32, #tpu.memory_space<vmem>>, vector<1x8x128xf32>,
    %c1_i32 = arith.constant 1 : i32
    %c7_i32_33 = arith.constant 7 : i32
    %91 = arith.subi %c7_i32_33, %c1_i32 : i32
    %c0_34 = arith.constant 0 : index
    %c0_35 = arith.constant 0 : index
    %92 = vector.load %arg2[%c0_34, %c0_35] : memref<128x384xf32, #tpu.memory_space<vmem>>, vector<128x384xf32>
    %cst_36 = arith.constant dense<0.000000e+00> : vector<8x384xf32>
    %93 = tpu.matmul %54, %92, %cst_36 {dimension_numbers = #tpu.dot_dimension_numbers<[1], [0], [0], [1], [0, 0, 1, 1], [], []>} : vector<8x128xf32>, vector<128x384xf32>, vector<8x384xf32> -> vector<8x384xf32>
    %c0_37 = arith.constant 0 : index
    %c0_38 = arith.constant 0 : index
    %94 = vector.load %arg3[%c0_37, %c0_38] : memref<128x384xf32, #tpu.memory_space<vmem>>, vector<128x384xf32>
    %cst_39 = arith.constant dense<0.000000e+00> : vector<8x384xf32>
    %95 = tpu.matmul %82, %94, %cst_39 {dimension_numbers = #tpu.dot_dimension_numbers<[1], [0], [0], [1], [0, 0, 1, 1], [], []>} : vector<8x128xf32>, vector<128x384xf32>, vector<8x384xf32> -> vector<8x384xf32>
    %96 = arith.index_cast %c1_i32 : i32 to index
    %c0_40 = arith.constant 0 : index
    %c0_41 = arith.constant 0 : index
    %97 = vector.load %arg10[%96, %c0_40, %c0_41] : memref<8x8x768xf32, #tpu.memory_space<vmem>>, vector<1x8x768xf32>
    %98 = vector.shape_cast %97 : vector<1x8x768xf32> to vector<8x768xf32>
    %99 = arith.index_cast %91 : i32 to index
    %c0_42 = arith.constant 0 : index
    %c0_43 = arith.constant 0 : index
    %100 = vector.load %arg10[%99, %c0_42, %c0_43] : memref<8x8x768xf32, #tpu.memory_space<vmem>>, vector<1x8x768xf32>
    %101 = vector.shape_cast %100 : vector<1x8x768xf32> to vector<8x768xf32>
    %102 = vector.extract_strided_slice %98 {offsets = [0, 0], sizes = [8, 384], strides = [1, 1]} : vector<8x768xf32> to vector<8x384xf32>
    %103 = vector.extract_strided_slice %102 {offsets = [0, 0], sizes = [8, 128], strides = [1, 1]} : vector<8x384xf32> to vector<8x128xf32>
    %104 = vector.extract_strided_slice %93 {offsets = [0, 0], sizes = [8, 128], strides = [1, 1]} : vector<8x384xf32> to vector<8x128xf32>
    %105 = arith.addf %103, %104 : vector<8x128xf32>
    %106 = arith.negf %105 : vector<8x128xf32>
    %107 = math.exp %106 : vector<8x128xf32>
    %cst_44 = arith.constant 1.000000e+00 : f32
    %108 = vector.broadcast %cst_44 : f32 to vector<8x128xf32>
    %109 = arith.addf %108, %107 : vector<8x128xf32>
    %110 = arith.divf %108, %109 : vector<8x128xf32>
    %111 = vector.extract_strided_slice %102 {offsets = [0, 128], sizes = [8, 128], strides = [1, 1]} : vector<8x384xf32> to vector<8x128xf32>
    %112 = vector.extract_strided_slice %93 {offsets = [0, 128], sizes = [8, 128], strides = [1, 1]} : vector<8x384xf32> to vector<8x128xf32>
    %113 = arith.addf %111, %112 : vector<8x128xf32>
    %114 = arith.negf %113 : vector<8x128xf32>
    %115 = math.exp %114 : vector<8x128xf32>
    %cst_45 = arith.constant 1.000000e+00 : f32
    %116 = vector.broadcast %cst_45 : f32 to vector<8x128xf32>
    %117 = arith.addf %116, %115 : vector<8x128xf32>
    %118 = arith.divf %116, %117 : vector<8x128xf32>
    %119 = vector.extract_strided_slice %102 {offsets = [0, 256], sizes = [8, 128], strides = [1, 1]} : vector<8x384xf32> to vector<8x128xf32>
    %120 = vector.extract_strided_slice %93 {offsets = [0, 256], sizes = [8, 128], strides = [1, 1]} : vector<8x384xf32> to vector<8x128xf32>
    %121 = arith.addf %120, %11 : vector<8x128xf32>
    %122 = arith.mulf %110, %121 : vector<8x128xf32>
    %123 = arith.addf %119, %122 : vector<8x128xf32>
    %124 = math.tanh %123 : vector<8x128xf32>
    %cst_46 = arith.constant 1.000000e+00 : f32
    %125 = vector.broadcast %cst_46 : f32 to vector<8x128xf32>
    %126 = arith.subf %125, %118 : vector<8x128xf32>
    %127 = arith.mulf %126, %124 : vector<8x128xf32>
    %128 = arith.mulf %118, %54 : vector<8x128xf32>
    %129 = arith.addf %127, %128 : vector<8x128xf32>
    %130 = vector.extract_strided_slice %101 {offsets = [0, 384], sizes = [8, 384], strides = [1, 1]} : vector<8x768xf32> to vector<8x384xf32>
    %131 = vector.extract_strided_slice %130 {offsets = [0, 0], sizes = [8, 128], strides = [1, 1]} : vector<8x384xf32> to vector<8x128xf32>
    %132 = vector.extract_strided_slice %95 {offsets = [0, 0], sizes = [8, 128], strides = [1, 1]} : vector<8x384xf32> to vector<8x128xf32>
    %133 = arith.addf %131, %132 : vector<8x128xf32>
    %134 = arith.negf %133 : vector<8x128xf32>
    %135 = math.exp %134 : vector<8x128xf32>
    %cst_47 = arith.constant 1.000000e+00 : f32
    %136 = vector.broadcast %cst_47 : f32 to vector<8x128xf32>
    %137 = arith.addf %136, %135 : vector<8x128xf32>
    %138 = arith.divf %136, %137 : vector<8x128xf32>
    %139 = vector.extract_strided_slice %130 {offsets = [0, 128], sizes = [8, 128], strides = [1, 1]} : vector<8x384xf32> to vector<8x128xf32>
    %140 = vector.extract_strided_slice %95 {offsets = [0, 128], sizes = [8, 128], strides = [1, 1]} : vector<8x384xf32> to vector<8x128xf32>
    %141 = arith.addf %139, %140 : vector<8x128xf32>
    %142 = arith.negf %141 : vector<8x128xf32>
    %143 = math.exp %142 : vector<8x128xf32>
    %cst_48 = arith.constant 1.000000e+00 : f32
    %144 = vector.broadcast %cst_48 : f32 to vector<8x128xf32>
    %145 = arith.addf %144, %143 : vector<8x128xf32>
    %146 = arith.divf %144, %145 : vector<8x128xf32>
    %147 = vector.extract_strided_slice %130 {offsets = [0, 256], sizes = [8, 128], strides = [1, 1]} : vector<8x384xf32> to vector<8x128xf32>
    %148 = vector.extract_strided_slice %95 {offsets = [0, 256], sizes = [8, 128], strides = [1, 1]} : vector<8x384xf32> to vector<8x128xf32>
    %149 = arith.addf %148, %14 : vector<8x128xf32>
    %150 = arith.mulf %138, %149 : vector<8x128xf32>
    %151 = arith.addf %147, %150 : vector<8x128xf32>
    %152 = math.tanh %151 : vector<8x128xf32>
    %cst_49 = arith.constant 1.000000e+00 : f32
    %153 = vector.broadcast %cst_49 : f32 to vector<8x128xf32>
    %154 = arith.subf %153, %146 : vector<8x128xf32>
    %155 = arith.mulf %154, %152 : vector<8x128xf32>
    %156 = arith.mulf %146, %82 : vector<8x128xf32>
    %157 = arith.addf %155, %156 : vector<8x128xf32>
    %158 = arith.index_cast %c1_i32 : i32 to index
    %c0_50 = arith.constant 0 : index
    %c0_51 = arith.constant 0 : index
    %159 = vector.load %arg7[%158, %c0_50, %c0_51] : memref<8x8x256xf32, #tpu.memory_space<vmem>>, vector<1x8x128xf32>
    %160 = vector.shape_cast %159 : vector<1x8x128xf32> to vector<8x128xf32>
    %161 = vector.shape_cast %129 : vector<8x128xf32> to vector<1x8x128xf32>
    tpu.vector_store %arg7[%158, %c0_50, %c0_51], %161 {strides = array<i32>} : memref<8x8x256xf32, #tpu.memory_space<vmem>>, vector<1x8x128xf32>,
    %162 = arith.index_cast %91 : i32 to index
    %c0_52 = arith.constant 0 : index
    %c128_53 = arith.constant 128 : index
    %163 = vector.load %arg7[%162, %c0_52, %c128_53] : memref<8x8x256xf32, #tpu.memory_space<vmem>>, vector<1x8x128xf32>
    %164 = vector.shape_cast %163 : vector<1x8x128xf32> to vector<8x128xf32>
    %165 = vector.shape_cast %157 : vector<8x128xf32> to vector<1x8x128xf32>
    tpu.vector_store %arg7[%162, %c0_52, %c128_53], %165 {strides = array<i32>} : memref<8x8x256xf32, #tpu.memory_space<vmem>>, vector<1x8x128xf32>,
    %c2_i32 = arith.constant 2 : i32
    %c7_i32_54 = arith.constant 7 : i32
    %166 = arith.subi %c7_i32_54, %c2_i32 : i32
    %c0_55 = arith.constant 0 : index
    %c0_56 = arith.constant 0 : index
    %167 = vector.load %arg2[%c0_55, %c0_56] : memref<128x384xf32, #tpu.memory_space<vmem>>, vector<128x384xf32>
    %cst_57 = arith.constant dense<0.000000e+00> : vector<8x384xf32>
    %168 = tpu.matmul %129, %167, %cst_57 {dimension_numbers = #tpu.dot_dimension_numbers<[1], [0], [0], [1], [0, 0, 1, 1], [], []>} : vector<8x128xf32>, vector<128x384xf32>, vector<8x384xf32> -> vector<8x384xf32>
    %c0_58 = arith.constant 0 : index
    %c0_59 = arith.constant 0 : index
    %169 = vector.load %arg3[%c0_58, %c0_59] : memref<128x384xf32, #tpu.memory_space<vmem>>, vector<128x384xf32>
    %cst_60 = arith.constant dense<0.000000e+00> : vector<8x384xf32>
    %170 = tpu.matmul %157, %169, %cst_60 {dimension_numbers = #tpu.dot_dimension_numbers<[1], [0], [0], [1], [0, 0, 1, 1], [], []>} : vector<8x128xf32>, vector<128x384xf32>, vector<8x384xf32> -> vector<8x384xf32>
    %171 = arith.index_cast %c2_i32 : i32 to index
    %c0_61 = arith.constant 0 : index
    %c0_62 = arith.constant 0 : index
    %172 = vector.load %arg10[%171, %c0_61, %c0_62] : memref<8x8x768xf32, #tpu.memory_space<vmem>>, vector<1x8x768xf32>
    %173 = vector.shape_cast %172 : vector<1x8x768xf32> to vector<8x768xf32>
    %174 = arith.index_cast %166 : i32 to index
    %c0_63 = arith.constant 0 : index
    %c0_64 = arith.constant 0 : index
    %175 = vector.load %arg10[%174, %c0_63, %c0_64] : memref<8x8x768xf32, #tpu.memory_space<vmem>>, vector<1x8x768xf32>
    %176 = vector.shape_cast %175 : vector<1x8x768xf32> to vector<8x768xf32>
    %177 = vector.extract_strided_slice %173 {offsets = [0, 0], sizes = [8, 384], strides = [1, 1]} : vector<8x768xf32> to vector<8x384xf32>
    %178 = vector.extract_strided_slice %177 {offsets = [0, 0], sizes = [8, 128], strides = [1, 1]} : vector<8x384xf32> to vector<8x128xf32>
    %179 = vector.extract_strided_slice %168 {offsets = [0, 0], sizes = [8, 128], strides = [1, 1]} : vector<8x384xf32> to vector<8x128xf32>
    %180 = arith.addf %178, %179 : vector<8x128xf32>
    %181 = arith.negf %180 : vector<8x128xf32>
    %182 = math.exp %181 : vector<8x128xf32>
    %cst_65 = arith.constant 1.000000e+00 : f32
    %183 = vector.broadcast %cst_65 : f32 to vector<8x128xf32>
    %184 = arith.addf %183, %182 : vector<8x128xf32>
    %185 = arith.divf %183, %184 : vector<8x128xf32>
    %186 = vector.extract_strided_slice %177 {offsets = [0, 128], sizes = [8, 128], strides = [1, 1]} : vector<8x384xf32> to vector<8x128xf32>
    %187 = vector.extract_strided_slice %168 {offsets = [0, 128], sizes = [8, 128], strides = [1, 1]} : vector<8x384xf32> to vector<8x128xf32>
    %188 = arith.addf %186, %187 : vector<8x128xf32>
    %189 = arith.negf %188 : vector<8x128xf32>
    %190 = math.exp %189 : vector<8x128xf32>
    %cst_66 = arith.constant 1.000000e+00 : f32
    %191 = vector.broadcast %cst_66 : f32 to vector<8x128xf32>
    %192 = arith.addf %191, %190 : vector<8x128xf32>
    %193 = arith.divf %191, %192 : vector<8x128xf32>
    %194 = vector.extract_strided_slice %177 {offsets = [0, 256], sizes = [8, 128], strides = [1, 1]} : vector<8x384xf32> to vector<8x128xf32>
    %195 = vector.extract_strided_slice %168 {offsets = [0, 256], sizes = [8, 128], strides = [1, 1]} : vector<8x384xf32> to vector<8x128xf32>
    %196 = arith.addf %195, %11 : vector<8x128xf32>
    %197 = arith.mulf %185, %196 : vector<8x128xf32>
    %198 = arith.addf %194, %197 : vector<8x128xf32>
    %199 = math.tanh %198 : vector<8x128xf32>
    %cst_67 = arith.constant 1.000000e+00 : f32
    %200 = vector.broadcast %cst_67 : f32 to vector<8x128xf32>
    %201 = arith.subf %200, %193 : vector<8x128xf32>
    %202 = arith.mulf %201, %199 : vector<8x128xf32>
    %203 = arith.mulf %193, %129 : vector<8x128xf32>
    %204 = arith.addf %202, %203 : vector<8x128xf32>
    %205 = vector.extract_strided_slice %176 {offsets = [0, 384], sizes = [8, 384], strides = [1, 1]} : vector<8x768xf32> to vector<8x384xf32>
    %206 = vector.extract_strided_slice %205 {offsets = [0, 0], sizes = [8, 128], strides = [1, 1]} : vector<8x384xf32> to vector<8x128xf32>
    %207 = vector.extract_strided_slice %170 {offsets = [0, 0], sizes = [8, 128], strides = [1, 1]} : vector<8x384xf32> to vector<8x128xf32>
    %208 = arith.addf %206, %207 : vector<8x128xf32>
    %209 = arith.negf %208 : vector<8x128xf32>
    %210 = math.exp %209 : vector<8x128xf32>
    %cst_68 = arith.constant 1.000000e+00 : f32
    %211 = vector.broadcast %cst_68 : f32 to vector<8x128xf32>
    %212 = arith.addf %211, %210 : vector<8x128xf32>
    %213 = arith.divf %211, %212 : vector<8x128xf32>
    %214 = vector.extract_strided_slice %205 {offsets = [0, 128], sizes = [8, 128], strides = [1, 1]} : vector<8x384xf32> to vector<8x128xf32>
    %215 = vector.extract_strided_slice %170 {offsets = [0, 128], sizes = [8, 128], strides = [1, 1]} : vector<8x384xf32> to vector<8x128xf32>
    %216 = arith.addf %214, %215 : vector<8x128xf32>
    %217 = arith.negf %216 : vector<8x128xf32>
    %218 = math.exp %217 : vector<8x128xf32>
    %cst_69 = arith.constant 1.000000e+00 : f32
    %219 = vector.broadcast %cst_69 : f32 to vector<8x128xf32>
    %220 = arith.addf %219, %218 : vector<8x128xf32>
    %221 = arith.divf %219, %220 : vector<8x128xf32>
    %222 = vector.extract_strided_slice %205 {offsets = [0, 256], sizes = [8, 128], strides = [1, 1]} : vector<8x384xf32> to vector<8x128xf32>
    %223 = vector.extract_strided_slice %170 {offsets = [0, 256], sizes = [8, 128], strides = [1, 1]} : vector<8x384xf32> to vector<8x128xf32>
    %224 = arith.addf %223, %14 : vector<8x128xf32>
    %225 = arith.mulf %213, %224 : vector<8x128xf32>
    %226 = arith.addf %222, %225 : vector<8x128xf32>
    %227 = math.tanh %226 : vector<8x128xf32>
    %cst_70 = arith.constant 1.000000e+00 : f32
    %228 = vector.broadcast %cst_70 : f32 to vector<8x128xf32>
    %229 = arith.subf %228, %221 : vector<8x128xf32>
    %230 = arith.mulf %229, %227 : vector<8x128xf32>
    %231 = arith.mulf %221, %157 : vector<8x128xf32>
    %232 = arith.addf %230, %231 : vector<8x128xf32>
    %233 = arith.index_cast %c2_i32 : i32 to index
    %c0_71 = arith.constant 0 : index
    %c0_72 = arith.constant 0 : index
    %234 = vector.load %arg7[%233, %c0_71, %c0_72] : memref<8x8x256xf32, #tpu.memory_space<vmem>>, vector<1x8x128xf32>
    %235 = vector.shape_cast %234 : vector<1x8x128xf32> to vector<8x128xf32>
    %236 = vector.shape_cast %204 : vector<8x128xf32> to vector<1x8x128xf32>
    tpu.vector_store %arg7[%233, %c0_71, %c0_72], %236 {strides = array<i32>} : memref<8x8x256xf32, #tpu.memory_space<vmem>>, vector<1x8x128xf32>,
    %237 = arith.index_cast %166 : i32 to index
    %c0_73 = arith.constant 0 : index
    %c128_74 = arith.constant 128 : index
    %238 = vector.load %arg7[%237, %c0_73, %c128_74] : memref<8x8x256xf32, #tpu.memory_space<vmem>>, vector<1x8x128xf32>
    %239 = vector.shape_cast %238 : vector<1x8x128xf32> to vector<8x128xf32>
    %240 = vector.shape_cast %232 : vector<8x128xf32> to vector<1x8x128xf32>
    tpu.vector_store %arg7[%237, %c0_73, %c128_74], %240 {strides = array<i32>} : memref<8x8x256xf32, #tpu.memory_space<vmem>>, vector<1x8x128xf32>,
    %c3_i32 = arith.constant 3 : i32
    %c7_i32_75 = arith.constant 7 : i32
    %241 = arith.subi %c7_i32_75, %c3_i32 : i32
    %c0_76 = arith.constant 0 : index
    %c0_77 = arith.constant 0 : index
    %242 = vector.load %arg2[%c0_76, %c0_77] : memref<128x384xf32, #tpu.memory_space<vmem>>, vector<128x384xf32>
    %cst_78 = arith.constant dense<0.000000e+00> : vector<8x384xf32>
    %243 = tpu.matmul %204, %242, %cst_78 {dimension_numbers = #tpu.dot_dimension_numbers<[1], [0], [0], [1], [0, 0, 1, 1], [], []>} : vector<8x128xf32>, vector<128x384xf32>, vector<8x384xf32> -> vector<8x384xf32>
    %c0_79 = arith.constant 0 : index
    %c0_80 = arith.constant 0 : index
    %244 = vector.load %arg3[%c0_79, %c0_80] : memref<128x384xf32, #tpu.memory_space<vmem>>, vector<128x384xf32>
    %cst_81 = arith.constant dense<0.000000e+00> : vector<8x384xf32>
    %245 = tpu.matmul %232, %244, %cst_81 {dimension_numbers = #tpu.dot_dimension_numbers<[1], [0], [0], [1], [0, 0, 1, 1], [], []>} : vector<8x128xf32>, vector<128x384xf32>, vector<8x384xf32> -> vector<8x384xf32>
    %246 = arith.index_cast %c3_i32 : i32 to index
    %c0_82 = arith.constant 0 : index
    %c0_83 = arith.constant 0 : index
    %247 = vector.load %arg10[%246, %c0_82, %c0_83] : memref<8x8x768xf32, #tpu.memory_space<vmem>>, vector<1x8x768xf32>
    %248 = vector.shape_cast %247 : vector<1x8x768xf32> to vector<8x768xf32>
    %249 = arith.index_cast %241 : i32 to index
    %c0_84 = arith.constant 0 : index
    %c0_85 = arith.constant 0 : index
    %250 = vector.load %arg10[%249, %c0_84, %c0_85] : memref<8x8x768xf32, #tpu.memory_space<vmem>>, vector<1x8x768xf32>
    %251 = vector.shape_cast %250 : vector<1x8x768xf32> to vector<8x768xf32>
    %252 = vector.extract_strided_slice %248 {offsets = [0, 0], sizes = [8, 384], strides = [1, 1]} : vector<8x768xf32> to vector<8x384xf32>
    %253 = vector.extract_strided_slice %252 {offsets = [0, 0], sizes = [8, 128], strides = [1, 1]} : vector<8x384xf32> to vector<8x128xf32>
    %254 = vector.extract_strided_slice %243 {offsets = [0, 0], sizes = [8, 128], strides = [1, 1]} : vector<8x384xf32> to vector<8x128xf32>
    %255 = arith.addf %253, %254 : vector<8x128xf32>
    %256 = arith.negf %255 : vector<8x128xf32>
    %257 = math.exp %256 : vector<8x128xf32>
    %cst_86 = arith.constant 1.000000e+00 : f32
    %258 = vector.broadcast %cst_86 : f32 to vector<8x128xf32>
    %259 = arith.addf %258, %257 : vector<8x128xf32>
    %260 = arith.divf %258, %259 : vector<8x128xf32>
    %261 = vector.extract_strided_slice %252 {offsets = [0, 128], sizes = [8, 128], strides = [1, 1]} : vector<8x384xf32> to vector<8x128xf32>
    %262 = vector.extract_strided_slice %243 {offsets = [0, 128], sizes = [8, 128], strides = [1, 1]} : vector<8x384xf32> to vector<8x128xf32>
    %263 = arith.addf %261, %262 : vector<8x128xf32>
    %264 = arith.negf %263 : vector<8x128xf32>
    %265 = math.exp %264 : vector<8x128xf32>
    %cst_87 = arith.constant 1.000000e+00 : f32
    %266 = vector.broadcast %cst_87 : f32 to vector<8x128xf32>
    %267 = arith.addf %266, %265 : vector<8x128xf32>
    %268 = arith.divf %266, %267 : vector<8x128xf32>
    %269 = vector.extract_strided_slice %252 {offsets = [0, 256], sizes = [8, 128], strides = [1, 1]} : vector<8x384xf32> to vector<8x128xf32>
    %270 = vector.extract_strided_slice %243 {offsets = [0, 256], sizes = [8, 128], strides = [1, 1]} : vector<8x384xf32> to vector<8x128xf32>
    %271 = arith.addf %270, %11 : vector<8x128xf32>
    %272 = arith.mulf %260, %271 : vector<8x128xf32>
    %273 = arith.addf %269, %272 : vector<8x128xf32>
    %274 = math.tanh %273 : vector<8x128xf32>
    %cst_88 = arith.constant 1.000000e+00 : f32
    %275 = vector.broadcast %cst_88 : f32 to vector<8x128xf32>
    %276 = arith.subf %275, %268 : vector<8x128xf32>
    %277 = arith.mulf %276, %274 : vector<8x128xf32>
    %278 = arith.mulf %268, %204 : vector<8x128xf32>
    %279 = arith.addf %277, %278 : vector<8x128xf32>
    %280 = vector.extract_strided_slice %251 {offsets = [0, 384], sizes = [8, 384], strides = [1, 1]} : vector<8x768xf32> to vector<8x384xf32>
    %281 = vector.extract_strided_slice %280 {offsets = [0, 0], sizes = [8, 128], strides = [1, 1]} : vector<8x384xf32> to vector<8x128xf32>
    %282 = vector.extract_strided_slice %245 {offsets = [0, 0], sizes = [8, 128], strides = [1, 1]} : vector<8x384xf32> to vector<8x128xf32>
    %283 = arith.addf %281, %282 : vector<8x128xf32>
    %284 = arith.negf %283 : vector<8x128xf32>
    %285 = math.exp %284 : vector<8x128xf32>
    %cst_89 = arith.constant 1.000000e+00 : f32
    %286 = vector.broadcast %cst_89 : f32 to vector<8x128xf32>
    %287 = arith.addf %286, %285 : vector<8x128xf32>
    %288 = arith.divf %286, %287 : vector<8x128xf32>
    %289 = vector.extract_strided_slice %280 {offsets = [0, 128], sizes = [8, 128], strides = [1, 1]} : vector<8x384xf32> to vector<8x128xf32>
    %290 = vector.extract_strided_slice %245 {offsets = [0, 128], sizes = [8, 128], strides = [1, 1]} : vector<8x384xf32> to vector<8x128xf32>
    %291 = arith.addf %289, %290 : vector<8x128xf32>
    %292 = arith.negf %291 : vector<8x128xf32>
    %293 = math.exp %292 : vector<8x128xf32>
    %cst_90 = arith.constant 1.000000e+00 : f32
    %294 = vector.broadcast %cst_90 : f32 to vector<8x128xf32>
    %295 = arith.addf %294, %293 : vector<8x128xf32>
    %296 = arith.divf %294, %295 : vector<8x128xf32>
    %297 = vector.extract_strided_slice %280 {offsets = [0, 256], sizes = [8, 128], strides = [1, 1]} : vector<8x384xf32> to vector<8x128xf32>
    %298 = vector.extract_strided_slice %245 {offsets = [0, 256], sizes = [8, 128], strides = [1, 1]} : vector<8x384xf32> to vector<8x128xf32>
    %299 = arith.addf %298, %14 : vector<8x128xf32>
    %300 = arith.mulf %288, %299 : vector<8x128xf32>
    %301 = arith.addf %297, %300 : vector<8x128xf32>
    %302 = math.tanh %301 : vector<8x128xf32>
    %cst_91 = arith.constant 1.000000e+00 : f32
    %303 = vector.broadcast %cst_91 : f32 to vector<8x128xf32>
    %304 = arith.subf %303, %296 : vector<8x128xf32>
    %305 = arith.mulf %304, %302 : vector<8x128xf32>
    %306 = arith.mulf %296, %232 : vector<8x128xf32>
    %307 = arith.addf %305, %306 : vector<8x128xf32>
    %308 = arith.index_cast %c3_i32 : i32 to index
    %c0_92 = arith.constant 0 : index
    %c0_93 = arith.constant 0 : index
    %309 = vector.load %arg7[%308, %c0_92, %c0_93] : memref<8x8x256xf32, #tpu.memory_space<vmem>>, vector<1x8x128xf32>
    %310 = vector.shape_cast %309 : vector<1x8x128xf32> to vector<8x128xf32>
    %311 = vector.shape_cast %279 : vector<8x128xf32> to vector<1x8x128xf32>
    tpu.vector_store %arg7[%308, %c0_92, %c0_93], %311 {strides = array<i32>} : memref<8x8x256xf32, #tpu.memory_space<vmem>>, vector<1x8x128xf32>,
    %312 = arith.index_cast %241 : i32 to index
    %c0_94 = arith.constant 0 : index
    %c128_95 = arith.constant 128 : index
    %313 = vector.load %arg7[%312, %c0_94, %c128_95] : memref<8x8x256xf32, #tpu.memory_space<vmem>>, vector<1x8x128xf32>
    %314 = vector.shape_cast %313 : vector<1x8x128xf32> to vector<8x128xf32>
    %315 = vector.shape_cast %307 : vector<8x128xf32> to vector<1x8x128xf32>
    tpu.vector_store %arg7[%312, %c0_94, %c128_95], %315 {strides = array<i32>} : memref<8x8x256xf32, #tpu.memory_space<vmem>>, vector<1x8x128xf32>,
    %c4_i32 = arith.constant 4 : i32
    %c7_i32_96 = arith.constant 7 : i32
    %316 = arith.subi %c7_i32_96, %c4_i32 : i32
    %c0_97 = arith.constant 0 : index
    %c0_98 = arith.constant 0 : index
    %317 = vector.load %arg2[%c0_97, %c0_98] : memref<128x384xf32, #tpu.memory_space<vmem>>, vector<128x384xf32>
    %cst_99 = arith.constant dense<0.000000e+00> : vector<8x384xf32>
    %318 = tpu.matmul %279, %317, %cst_99 {dimension_numbers = #tpu.dot_dimension_numbers<[1], [0], [0], [1], [0, 0, 1, 1], [], []>} : vector<8x128xf32>, vector<128x384xf32>, vector<8x384xf32> -> vector<8x384xf32>
    %c0_100 = arith.constant 0 : index
    %c0_101 = arith.constant 0 : index
    %319 = vector.load %arg3[%c0_100, %c0_101] : memref<128x384xf32, #tpu.memory_space<vmem>>, vector<128x384xf32>
    %cst_102 = arith.constant dense<0.000000e+00> : vector<8x384xf32>
    %320 = tpu.matmul %307, %319, %cst_102 {dimension_numbers = #tpu.dot_dimension_numbers<[1], [0], [0], [1], [0, 0, 1, 1], [], []>} : vector<8x128xf32>, vector<128x384xf32>, vector<8x384xf32> -> vector<8x384xf32>
    %321 = arith.index_cast %c4_i32 : i32 to index
    %c0_103 = arith.constant 0 : index
    %c0_104 = arith.constant 0 : index
    %322 = vector.load %arg10[%321, %c0_103, %c0_104] : memref<8x8x768xf32, #tpu.memory_space<vmem>>, vector<1x8x768xf32>
    %323 = vector.shape_cast %322 : vector<1x8x768xf32> to vector<8x768xf32>
    %324 = arith.index_cast %316 : i32 to index
    %c0_105 = arith.constant 0 : index
    %c0_106 = arith.constant 0 : index
    %325 = vector.load %arg10[%324, %c0_105, %c0_106] : memref<8x8x768xf32, #tpu.memory_space<vmem>>, vector<1x8x768xf32>
    %326 = vector.shape_cast %325 : vector<1x8x768xf32> to vector<8x768xf32>
    %327 = vector.extract_strided_slice %323 {offsets = [0, 0], sizes = [8, 384], strides = [1, 1]} : vector<8x768xf32> to vector<8x384xf32>
    %328 = vector.extract_strided_slice %327 {offsets = [0, 0], sizes = [8, 128], strides = [1, 1]} : vector<8x384xf32> to vector<8x128xf32>
    %329 = vector.extract_strided_slice %318 {offsets = [0, 0], sizes = [8, 128], strides = [1, 1]} : vector<8x384xf32> to vector<8x128xf32>
    %330 = arith.addf %328, %329 : vector<8x128xf32>
    %331 = arith.negf %330 : vector<8x128xf32>
    %332 = math.exp %331 : vector<8x128xf32>
    %cst_107 = arith.constant 1.000000e+00 : f32
    %333 = vector.broadcast %cst_107 : f32 to vector<8x128xf32>
    %334 = arith.addf %333, %332 : vector<8x128xf32>
    %335 = arith.divf %333, %334 : vector<8x128xf32>
    %336 = vector.extract_strided_slice %327 {offsets = [0, 128], sizes = [8, 128], strides = [1, 1]} : vector<8x384xf32> to vector<8x128xf32>
    %337 = vector.extract_strided_slice %318 {offsets = [0, 128], sizes = [8, 128], strides = [1, 1]} : vector<8x384xf32> to vector<8x128xf32>
    %338 = arith.addf %336, %337 : vector<8x128xf32>
    %339 = arith.negf %338 : vector<8x128xf32>
    %340 = math.exp %339 : vector<8x128xf32>
    %cst_108 = arith.constant 1.000000e+00 : f32
    %341 = vector.broadcast %cst_108 : f32 to vector<8x128xf32>
    %342 = arith.addf %341, %340 : vector<8x128xf32>
    %343 = arith.divf %341, %342 : vector<8x128xf32>
    %344 = vector.extract_strided_slice %327 {offsets = [0, 256], sizes = [8, 128], strides = [1, 1]} : vector<8x384xf32> to vector<8x128xf32>
    %345 = vector.extract_strided_slice %318 {offsets = [0, 256], sizes = [8, 128], strides = [1, 1]} : vector<8x384xf32> to vector<8x128xf32>
    %346 = arith.addf %345, %11 : vector<8x128xf32>
    %347 = arith.mulf %335, %346 : vector<8x128xf32>
    %348 = arith.addf %344, %347 : vector<8x128xf32>
    %349 = math.tanh %348 : vector<8x128xf32>
    %cst_109 = arith.constant 1.000000e+00 : f32
    %350 = vector.broadcast %cst_109 : f32 to vector<8x128xf32>
    %351 = arith.subf %350, %343 : vector<8x128xf32>
    %352 = arith.mulf %351, %349 : vector<8x128xf32>
    %353 = arith.mulf %343, %279 : vector<8x128xf32>
    %354 = arith.addf %352, %353 : vector<8x128xf32>
    %355 = vector.extract_strided_slice %326 {offsets = [0, 384], sizes = [8, 384], strides = [1, 1]} : vector<8x768xf32> to vector<8x384xf32>
    %356 = vector.extract_strided_slice %355 {offsets = [0, 0], sizes = [8, 128], strides = [1, 1]} : vector<8x384xf32> to vector<8x128xf32>
    %357 = vector.extract_strided_slice %320 {offsets = [0, 0], sizes = [8, 128], strides = [1, 1]} : vector<8x384xf32> to vector<8x128xf32>
    %358 = arith.addf %356, %357 : vector<8x128xf32>
    %359 = arith.negf %358 : vector<8x128xf32>
    %360 = math.exp %359 : vector<8x128xf32>
    %cst_110 = arith.constant 1.000000e+00 : f32
    %361 = vector.broadcast %cst_110 : f32 to vector<8x128xf32>
    %362 = arith.addf %361, %360 : vector<8x128xf32>
    %363 = arith.divf %361, %362 : vector<8x128xf32>
    %364 = vector.extract_strided_slice %355 {offsets = [0, 128], sizes = [8, 128], strides = [1, 1]} : vector<8x384xf32> to vector<8x128xf32>
    %365 = vector.extract_strided_slice %320 {offsets = [0, 128], sizes = [8, 128], strides = [1, 1]} : vector<8x384xf32> to vector<8x128xf32>
    %366 = arith.addf %364, %365 : vector<8x128xf32>
    %367 = arith.negf %366 : vector<8x128xf32>
    %368 = math.exp %367 : vector<8x128xf32>
    %cst_111 = arith.constant 1.000000e+00 : f32
    %369 = vector.broadcast %cst_111 : f32 to vector<8x128xf32>
    %370 = arith.addf %369, %368 : vector<8x128xf32>
    %371 = arith.divf %369, %370 : vector<8x128xf32>
    %372 = vector.extract_strided_slice %355 {offsets = [0, 256], sizes = [8, 128], strides = [1, 1]} : vector<8x384xf32> to vector<8x128xf32>
    %373 = vector.extract_strided_slice %320 {offsets = [0, 256], sizes = [8, 128], strides = [1, 1]} : vector<8x384xf32> to vector<8x128xf32>
    %374 = arith.addf %373, %14 : vector<8x128xf32>
    %375 = arith.mulf %363, %374 : vector<8x128xf32>
    %376 = arith.addf %372, %375 : vector<8x128xf32>
    %377 = math.tanh %376 : vector<8x128xf32>
    %cst_112 = arith.constant 1.000000e+00 : f32
    %378 = vector.broadcast %cst_112 : f32 to vector<8x128xf32>
    %379 = arith.subf %378, %371 : vector<8x128xf32>
    %380 = arith.mulf %379, %377 : vector<8x128xf32>
    %381 = arith.mulf %371, %307 : vector<8x128xf32>
    %382 = arith.addf %380, %381 : vector<8x128xf32>
    %383 = arith.index_cast %c4_i32 : i32 to index
    %c0_113 = arith.constant 0 : index
    %c0_114 = arith.constant 0 : index
    %384 = vector.load %arg7[%383, %c0_113, %c0_114] : memref<8x8x256xf32, #tpu.memory_space<vmem>>, vector<1x8x128xf32>
    %385 = vector.shape_cast %384 : vector<1x8x128xf32> to vector<8x128xf32>
    %386 = vector.shape_cast %354 : vector<8x128xf32> to vector<1x8x128xf32>
    tpu.vector_store %arg7[%383, %c0_113, %c0_114], %386 {strides = array<i32>} : memref<8x8x256xf32, #tpu.memory_space<vmem>>, vector<1x8x128xf32>,
    %387 = arith.index_cast %316 : i32 to index
    %c0_115 = arith.constant 0 : index
    %c128_116 = arith.constant 128 : index
    %388 = vector.load %arg7[%387, %c0_115, %c128_116] : memref<8x8x256xf32, #tpu.memory_space<vmem>>, vector<1x8x128xf32>
    %389 = vector.shape_cast %388 : vector<1x8x128xf32> to vector<8x128xf32>
    %390 = vector.shape_cast %382 : vector<8x128xf32> to vector<1x8x128xf32>
    tpu.vector_store %arg7[%387, %c0_115, %c128_116], %390 {strides = array<i32>} : memref<8x8x256xf32, #tpu.memory_space<vmem>>, vector<1x8x128xf32>,
    %c5_i32 = arith.constant 5 : i32
    %c7_i32_117 = arith.constant 7 : i32
    %391 = arith.subi %c7_i32_117, %c5_i32 : i32
    %c0_118 = arith.constant 0 : index
    %c0_119 = arith.constant 0 : index
    %392 = vector.load %arg2[%c0_118, %c0_119] : memref<128x384xf32, #tpu.memory_space<vmem>>, vector<128x384xf32>
    %cst_120 = arith.constant dense<0.000000e+00> : vector<8x384xf32>
    %393 = tpu.matmul %354, %392, %cst_120 {dimension_numbers = #tpu.dot_dimension_numbers<[1], [0], [0], [1], [0, 0, 1, 1], [], []>} : vector<8x128xf32>, vector<128x384xf32>, vector<8x384xf32> -> vector<8x384xf32>
    %c0_121 = arith.constant 0 : index
    %c0_122 = arith.constant 0 : index
    %394 = vector.load %arg3[%c0_121, %c0_122] : memref<128x384xf32, #tpu.memory_space<vmem>>, vector<128x384xf32>
    %cst_123 = arith.constant dense<0.000000e+00> : vector<8x384xf32>
    %395 = tpu.matmul %382, %394, %cst_123 {dimension_numbers = #tpu.dot_dimension_numbers<[1], [0], [0], [1], [0, 0, 1, 1], [], []>} : vector<8x128xf32>, vector<128x384xf32>, vector<8x384xf32> -> vector<8x384xf32>
    %396 = arith.index_cast %c5_i32 : i32 to index
    %c0_124 = arith.constant 0 : index
    %c0_125 = arith.constant 0 : index
    %397 = vector.load %arg10[%396, %c0_124, %c0_125] : memref<8x8x768xf32, #tpu.memory_space<vmem>>, vector<1x8x768xf32>
    %398 = vector.shape_cast %397 : vector<1x8x768xf32> to vector<8x768xf32>
    %399 = arith.index_cast %391 : i32 to index
    %c0_126 = arith.constant 0 : index
    %c0_127 = arith.constant 0 : index
    %400 = vector.load %arg10[%399, %c0_126, %c0_127] : memref<8x8x768xf32, #tpu.memory_space<vmem>>, vector<1x8x768xf32>
    %401 = vector.shape_cast %400 : vector<1x8x768xf32> to vector<8x768xf32>
    %402 = vector.extract_strided_slice %398 {offsets = [0, 0], sizes = [8, 384], strides = [1, 1]} : vector<8x768xf32> to vector<8x384xf32>
    %403 = vector.extract_strided_slice %402 {offsets = [0, 0], sizes = [8, 128], strides = [1, 1]} : vector<8x384xf32> to vector<8x128xf32>
    %404 = vector.extract_strided_slice %393 {offsets = [0, 0], sizes = [8, 128], strides = [1, 1]} : vector<8x384xf32> to vector<8x128xf32>
    %405 = arith.addf %403, %404 : vector<8x128xf32>
    %406 = arith.negf %405 : vector<8x128xf32>
    %407 = math.exp %406 : vector<8x128xf32>
    %cst_128 = arith.constant 1.000000e+00 : f32
    %408 = vector.broadcast %cst_128 : f32 to vector<8x128xf32>
    %409 = arith.addf %408, %407 : vector<8x128xf32>
    %410 = arith.divf %408, %409 : vector<8x128xf32>
    %411 = vector.extract_strided_slice %402 {offsets = [0, 128], sizes = [8, 128], strides = [1, 1]} : vector<8x384xf32> to vector<8x128xf32>
    %412 = vector.extract_strided_slice %393 {offsets = [0, 128], sizes = [8, 128], strides = [1, 1]} : vector<8x384xf32> to vector<8x128xf32>
    %413 = arith.addf %411, %412 : vector<8x128xf32>
    %414 = arith.negf %413 : vector<8x128xf32>
    %415 = math.exp %414 : vector<8x128xf32>
    %cst_129 = arith.constant 1.000000e+00 : f32
    %416 = vector.broadcast %cst_129 : f32 to vector<8x128xf32>
    %417 = arith.addf %416, %415 : vector<8x128xf32>
    %418 = arith.divf %416, %417 : vector<8x128xf32>
    %419 = vector.extract_strided_slice %402 {offsets = [0, 256], sizes = [8, 128], strides = [1, 1]} : vector<8x384xf32> to vector<8x128xf32>
    %420 = vector.extract_strided_slice %393 {offsets = [0, 256], sizes = [8, 128], strides = [1, 1]} : vector<8x384xf32> to vector<8x128xf32>
    %421 = arith.addf %420, %11 : vector<8x128xf32>
    %422 = arith.mulf %410, %421 : vector<8x128xf32>
    %423 = arith.addf %419, %422 : vector<8x128xf32>
    %424 = math.tanh %423 : vector<8x128xf32>
    %cst_130 = arith.constant 1.000000e+00 : f32
    %425 = vector.broadcast %cst_130 : f32 to vector<8x128xf32>
    %426 = arith.subf %425, %418 : vector<8x128xf32>
    %427 = arith.mulf %426, %424 : vector<8x128xf32>
    %428 = arith.mulf %418, %354 : vector<8x128xf32>
    %429 = arith.addf %427, %428 : vector<8x128xf32>
    %430 = vector.extract_strided_slice %401 {offsets = [0, 384], sizes = [8, 384], strides = [1, 1]} : vector<8x768xf32> to vector<8x384xf32>
    %431 = vector.extract_strided_slice %430 {offsets = [0, 0], sizes = [8, 128], strides = [1, 1]} : vector<8x384xf32> to vector<8x128xf32>
    %432 = vector.extract_strided_slice %395 {offsets = [0, 0], sizes = [8, 128], strides = [1, 1]} : vector<8x384xf32> to vector<8x128xf32>
    %433 = arith.addf %431, %432 : vector<8x128xf32>
    %434 = arith.negf %433 : vector<8x128xf32>
    %435 = math.exp %434 : vector<8x128xf32>
    %cst_131 = arith.constant 1.000000e+00 : f32
    %436 = vector.broadcast %cst_131 : f32 to vector<8x128xf32>
    %437 = arith.addf %436, %435 : vector<8x128xf32>
    %438 = arith.divf %436, %437 : vector<8x128xf32>
    %439 = vector.extract_strided_slice %430 {offsets = [0, 128], sizes = [8, 128], strides = [1, 1]} : vector<8x384xf32> to vector<8x128xf32>
    %440 = vector.extract_strided_slice %395 {offsets = [0, 128], sizes = [8, 128], strides = [1, 1]} : vector<8x384xf32> to vector<8x128xf32>
    %441 = arith.addf %439, %440 : vector<8x128xf32>
    %442 = arith.negf %441 : vector<8x128xf32>
    %443 = math.exp %442 : vector<8x128xf32>
    %cst_132 = arith.constant 1.000000e+00 : f32
    %444 = vector.broadcast %cst_132 : f32 to vector<8x128xf32>
    %445 = arith.addf %444, %443 : vector<8x128xf32>
    %446 = arith.divf %444, %445 : vector<8x128xf32>
    %447 = vector.extract_strided_slice %430 {offsets = [0, 256], sizes = [8, 128], strides = [1, 1]} : vector<8x384xf32> to vector<8x128xf32>
    %448 = vector.extract_strided_slice %395 {offsets = [0, 256], sizes = [8, 128], strides = [1, 1]} : vector<8x384xf32> to vector<8x128xf32>
    %449 = arith.addf %448, %14 : vector<8x128xf32>
    %450 = arith.mulf %438, %449 : vector<8x128xf32>
    %451 = arith.addf %447, %450 : vector<8x128xf32>
    %452 = math.tanh %451 : vector<8x128xf32>
    %cst_133 = arith.constant 1.000000e+00 : f32
    %453 = vector.broadcast %cst_133 : f32 to vector<8x128xf32>
    %454 = arith.subf %453, %446 : vector<8x128xf32>
    %455 = arith.mulf %454, %452 : vector<8x128xf32>
    %456 = arith.mulf %446, %382 : vector<8x128xf32>
    %457 = arith.addf %455, %456 : vector<8x128xf32>
    %458 = arith.index_cast %c5_i32 : i32 to index
    %c0_134 = arith.constant 0 : index
    %c0_135 = arith.constant 0 : index
    %459 = vector.load %arg7[%458, %c0_134, %c0_135] : memref<8x8x256xf32, #tpu.memory_space<vmem>>, vector<1x8x128xf32>
    %460 = vector.shape_cast %459 : vector<1x8x128xf32> to vector<8x128xf32>
    %461 = vector.shape_cast %429 : vector<8x128xf32> to vector<1x8x128xf32>
    tpu.vector_store %arg7[%458, %c0_134, %c0_135], %461 {strides = array<i32>} : memref<8x8x256xf32, #tpu.memory_space<vmem>>, vector<1x8x128xf32>,
    %462 = arith.index_cast %391 : i32 to index
    %c0_136 = arith.constant 0 : index
    %c128_137 = arith.constant 128 : index
    %463 = vector.load %arg7[%462, %c0_136, %c128_137] : memref<8x8x256xf32, #tpu.memory_space<vmem>>, vector<1x8x128xf32>
    %464 = vector.shape_cast %463 : vector<1x8x128xf32> to vector<8x128xf32>
    %465 = vector.shape_cast %457 : vector<8x128xf32> to vector<1x8x128xf32>
    tpu.vector_store %arg7[%462, %c0_136, %c128_137], %465 {strides = array<i32>} : memref<8x8x256xf32, #tpu.memory_space<vmem>>, vector<1x8x128xf32>,
    %c6_i32 = arith.constant 6 : i32
    %c7_i32_138 = arith.constant 7 : i32
    %466 = arith.subi %c7_i32_138, %c6_i32 : i32
    %c0_139 = arith.constant 0 : index
    %c0_140 = arith.constant 0 : index
    %467 = vector.load %arg2[%c0_139, %c0_140] : memref<128x384xf32, #tpu.memory_space<vmem>>, vector<128x384xf32>
    %cst_141 = arith.constant dense<0.000000e+00> : vector<8x384xf32>
    %468 = tpu.matmul %429, %467, %cst_141 {dimension_numbers = #tpu.dot_dimension_numbers<[1], [0], [0], [1], [0, 0, 1, 1], [], []>} : vector<8x128xf32>, vector<128x384xf32>, vector<8x384xf32> -> vector<8x384xf32>
    %c0_142 = arith.constant 0 : index
    %c0_143 = arith.constant 0 : index
    %469 = vector.load %arg3[%c0_142, %c0_143] : memref<128x384xf32, #tpu.memory_space<vmem>>, vector<128x384xf32>
    %cst_144 = arith.constant dense<0.000000e+00> : vector<8x384xf32>
    %470 = tpu.matmul %457, %469, %cst_144 {dimension_numbers = #tpu.dot_dimension_numbers<[1], [0], [0], [1], [0, 0, 1, 1], [], []>} : vector<8x128xf32>, vector<128x384xf32>, vector<8x384xf32> -> vector<8x384xf32>
    %471 = arith.index_cast %c6_i32 : i32 to index
    %c0_145 = arith.constant 0 : index
    %c0_146 = arith.constant 0 : index
    %472 = vector.load %arg10[%471, %c0_145, %c0_146] : memref<8x8x768xf32, #tpu.memory_space<vmem>>, vector<1x8x768xf32>
    %473 = vector.shape_cast %472 : vector<1x8x768xf32> to vector<8x768xf32>
    %474 = arith.index_cast %466 : i32 to index
    %c0_147 = arith.constant 0 : index
    %c0_148 = arith.constant 0 : index
    %475 = vector.load %arg10[%474, %c0_147, %c0_148] : memref<8x8x768xf32, #tpu.memory_space<vmem>>, vector<1x8x768xf32>
    %476 = vector.shape_cast %475 : vector<1x8x768xf32> to vector<8x768xf32>
    %477 = vector.extract_strided_slice %473 {offsets = [0, 0], sizes = [8, 384], strides = [1, 1]} : vector<8x768xf32> to vector<8x384xf32>
    %478 = vector.extract_strided_slice %477 {offsets = [0, 0], sizes = [8, 128], strides = [1, 1]} : vector<8x384xf32> to vector<8x128xf32>
    %479 = vector.extract_strided_slice %468 {offsets = [0, 0], sizes = [8, 128], strides = [1, 1]} : vector<8x384xf32> to vector<8x128xf32>
    %480 = arith.addf %478, %479 : vector<8x128xf32>
    %481 = arith.negf %480 : vector<8x128xf32>
    %482 = math.exp %481 : vector<8x128xf32>
    %cst_149 = arith.constant 1.000000e+00 : f32
    %483 = vector.broadcast %cst_149 : f32 to vector<8x128xf32>
    %484 = arith.addf %483, %482 : vector<8x128xf32>
    %485 = arith.divf %483, %484 : vector<8x128xf32>
    %486 = vector.extract_strided_slice %477 {offsets = [0, 128], sizes = [8, 128], strides = [1, 1]} : vector<8x384xf32> to vector<8x128xf32>
    %487 = vector.extract_strided_slice %468 {offsets = [0, 128], sizes = [8, 128], strides = [1, 1]} : vector<8x384xf32> to vector<8x128xf32>
    %488 = arith.addf %486, %487 : vector<8x128xf32>
    %489 = arith.negf %488 : vector<8x128xf32>
    %490 = math.exp %489 : vector<8x128xf32>
    %cst_150 = arith.constant 1.000000e+00 : f32
    %491 = vector.broadcast %cst_150 : f32 to vector<8x128xf32>
    %492 = arith.addf %491, %490 : vector<8x128xf32>
    %493 = arith.divf %491, %492 : vector<8x128xf32>
    %494 = vector.extract_strided_slice %477 {offsets = [0, 256], sizes = [8, 128], strides = [1, 1]} : vector<8x384xf32> to vector<8x128xf32>
    %495 = vector.extract_strided_slice %468 {offsets = [0, 256], sizes = [8, 128], strides = [1, 1]} : vector<8x384xf32> to vector<8x128xf32>
    %496 = arith.addf %495, %11 : vector<8x128xf32>
    %497 = arith.mulf %485, %496 : vector<8x128xf32>
    %498 = arith.addf %494, %497 : vector<8x128xf32>
    %499 = math.tanh %498 : vector<8x128xf32>
    %cst_151 = arith.constant 1.000000e+00 : f32
    %500 = vector.broadcast %cst_151 : f32 to vector<8x128xf32>
    %501 = arith.subf %500, %493 : vector<8x128xf32>
    %502 = arith.mulf %501, %499 : vector<8x128xf32>
    %503 = arith.mulf %493, %429 : vector<8x128xf32>
    %504 = arith.addf %502, %503 : vector<8x128xf32>
    %505 = vector.extract_strided_slice %476 {offsets = [0, 384], sizes = [8, 384], strides = [1, 1]} : vector<8x768xf32> to vector<8x384xf32>
    %506 = vector.extract_strided_slice %505 {offsets = [0, 0], sizes = [8, 128], strides = [1, 1]} : vector<8x384xf32> to vector<8x128xf32>
    %507 = vector.extract_strided_slice %470 {offsets = [0, 0], sizes = [8, 128], strides = [1, 1]} : vector<8x384xf32> to vector<8x128xf32>
    %508 = arith.addf %506, %507 : vector<8x128xf32>
    %509 = arith.negf %508 : vector<8x128xf32>
    %510 = math.exp %509 : vector<8x128xf32>
    %cst_152 = arith.constant 1.000000e+00 : f32
    %511 = vector.broadcast %cst_152 : f32 to vector<8x128xf32>
    %512 = arith.addf %511, %510 : vector<8x128xf32>
    %513 = arith.divf %511, %512 : vector<8x128xf32>
    %514 = vector.extract_strided_slice %505 {offsets = [0, 128], sizes = [8, 128], strides = [1, 1]} : vector<8x384xf32> to vector<8x128xf32>
    %515 = vector.extract_strided_slice %470 {offsets = [0, 128], sizes = [8, 128], strides = [1, 1]} : vector<8x384xf32> to vector<8x128xf32>
    %516 = arith.addf %514, %515 : vector<8x128xf32>
    %517 = arith.negf %516 : vector<8x128xf32>
    %518 = math.exp %517 : vector<8x128xf32>
    %cst_153 = arith.constant 1.000000e+00 : f32
    %519 = vector.broadcast %cst_153 : f32 to vector<8x128xf32>
    %520 = arith.addf %519, %518 : vector<8x128xf32>
    %521 = arith.divf %519, %520 : vector<8x128xf32>
    %522 = vector.extract_strided_slice %505 {offsets = [0, 256], sizes = [8, 128], strides = [1, 1]} : vector<8x384xf32> to vector<8x128xf32>
    %523 = vector.extract_strided_slice %470 {offsets = [0, 256], sizes = [8, 128], strides = [1, 1]} : vector<8x384xf32> to vector<8x128xf32>
    %524 = arith.addf %523, %14 : vector<8x128xf32>
    %525 = arith.mulf %513, %524 : vector<8x128xf32>
    %526 = arith.addf %522, %525 : vector<8x128xf32>
    %527 = math.tanh %526 : vector<8x128xf32>
    %cst_154 = arith.constant 1.000000e+00 : f32
    %528 = vector.broadcast %cst_154 : f32 to vector<8x128xf32>
    %529 = arith.subf %528, %521 : vector<8x128xf32>
    %530 = arith.mulf %529, %527 : vector<8x128xf32>
    %531 = arith.mulf %521, %457 : vector<8x128xf32>
    %532 = arith.addf %530, %531 : vector<8x128xf32>
    %533 = arith.index_cast %c6_i32 : i32 to index
    %c0_155 = arith.constant 0 : index
    %c0_156 = arith.constant 0 : index
    %534 = vector.load %arg7[%533, %c0_155, %c0_156] : memref<8x8x256xf32, #tpu.memory_space<vmem>>, vector<1x8x128xf32>
    %535 = vector.shape_cast %534 : vector<1x8x128xf32> to vector<8x128xf32>
    %536 = vector.shape_cast %504 : vector<8x128xf32> to vector<1x8x128xf32>
    tpu.vector_store %arg7[%533, %c0_155, %c0_156], %536 {strides = array<i32>} : memref<8x8x256xf32, #tpu.memory_space<vmem>>, vector<1x8x128xf32>,
    %537 = arith.index_cast %466 : i32 to index
    %c0_157 = arith.constant 0 : index
    %c128_158 = arith.constant 128 : index
    %538 = vector.load %arg7[%537, %c0_157, %c128_158] : memref<8x8x256xf32, #tpu.memory_space<vmem>>, vector<1x8x128xf32>
    %539 = vector.shape_cast %538 : vector<1x8x128xf32> to vector<8x128xf32>
    %540 = vector.shape_cast %532 : vector<8x128xf32> to vector<1x8x128xf32>
    tpu.vector_store %arg7[%537, %c0_157, %c128_158], %540 {strides = array<i32>} : memref<8x8x256xf32, #tpu.memory_space<vmem>>, vector<1x8x128xf32>,
    %c7_i32_159 = arith.constant 7 : i32
    %c7_i32_160 = arith.constant 7 : i32
    %541 = arith.subi %c7_i32_160, %c7_i32_159 : i32
    %c0_161 = arith.constant 0 : index
    %c0_162 = arith.constant 0 : index
    %542 = vector.load %arg2[%c0_161, %c0_162] : memref<128x384xf32, #tpu.memory_space<vmem>>, vector<128x384xf32>
    %cst_163 = arith.constant dense<0.000000e+00> : vector<8x384xf32>
    %543 = tpu.matmul %504, %542, %cst_163 {dimension_numbers = #tpu.dot_dimension_numbers<[1], [0], [0], [1], [0, 0, 1, 1], [], []>} : vector<8x128xf32>, vector<128x384xf32>, vector<8x384xf32> -> vector<8x384xf32>
    %c0_164 = arith.constant 0 : index
    %c0_165 = arith.constant 0 : index
    %544 = vector.load %arg3[%c0_164, %c0_165] : memref<128x384xf32, #tpu.memory_space<vmem>>, vector<128x384xf32>
    %cst_166 = arith.constant dense<0.000000e+00> : vector<8x384xf32>
    %545 = tpu.matmul %532, %544, %cst_166 {dimension_numbers = #tpu.dot_dimension_numbers<[1], [0], [0], [1], [0, 0, 1, 1], [], []>} : vector<8x128xf32>, vector<128x384xf32>, vector<8x384xf32> -> vector<8x384xf32>
    %546 = arith.index_cast %c7_i32_159 : i32 to index
    %c0_167 = arith.constant 0 : index
    %c0_168 = arith.constant 0 : index
    %547 = vector.load %arg10[%546, %c0_167, %c0_168] : memref<8x8x768xf32, #tpu.memory_space<vmem>>, vector<1x8x768xf32>
    %548 = vector.shape_cast %547 : vector<1x8x768xf32> to vector<8x768xf32>
    %549 = arith.index_cast %541 : i32 to index
    %c0_169 = arith.constant 0 : index
    %c0_170 = arith.constant 0 : index
    %550 = vector.load %arg10[%549, %c0_169, %c0_170] : memref<8x8x768xf32, #tpu.memory_space<vmem>>, vector<1x8x768xf32>
    %551 = vector.shape_cast %550 : vector<1x8x768xf32> to vector<8x768xf32>
    %552 = vector.extract_strided_slice %548 {offsets = [0, 0], sizes = [8, 384], strides = [1, 1]} : vector<8x768xf32> to vector<8x384xf32>
    %553 = vector.extract_strided_slice %552 {offsets = [0, 0], sizes = [8, 128], strides = [1, 1]} : vector<8x384xf32> to vector<8x128xf32>
    %554 = vector.extract_strided_slice %543 {offsets = [0, 0], sizes = [8, 128], strides = [1, 1]} : vector<8x384xf32> to vector<8x128xf32>
    %555 = arith.addf %553, %554 : vector<8x128xf32>
    %556 = arith.negf %555 : vector<8x128xf32>
    %557 = math.exp %556 : vector<8x128xf32>
    %cst_171 = arith.constant 1.000000e+00 : f32
    %558 = vector.broadcast %cst_171 : f32 to vector<8x128xf32>
    %559 = arith.addf %558, %557 : vector<8x128xf32>
    %560 = arith.divf %558, %559 : vector<8x128xf32>
    %561 = vector.extract_strided_slice %552 {offsets = [0, 128], sizes = [8, 128], strides = [1, 1]} : vector<8x384xf32> to vector<8x128xf32>
    %562 = vector.extract_strided_slice %543 {offsets = [0, 128], sizes = [8, 128], strides = [1, 1]} : vector<8x384xf32> to vector<8x128xf32>
    %563 = arith.addf %561, %562 : vector<8x128xf32>
    %564 = arith.negf %563 : vector<8x128xf32>
    %565 = math.exp %564 : vector<8x128xf32>
    %cst_172 = arith.constant 1.000000e+00 : f32
    %566 = vector.broadcast %cst_172 : f32 to vector<8x128xf32>
    %567 = arith.addf %566, %565 : vector<8x128xf32>
    %568 = arith.divf %566, %567 : vector<8x128xf32>
    %569 = vector.extract_strided_slice %552 {offsets = [0, 256], sizes = [8, 128], strides = [1, 1]} : vector<8x384xf32> to vector<8x128xf32>
    %570 = vector.extract_strided_slice %543 {offsets = [0, 256], sizes = [8, 128], strides = [1, 1]} : vector<8x384xf32> to vector<8x128xf32>
    %571 = arith.addf %570, %11 : vector<8x128xf32>
    %572 = arith.mulf %560, %571 : vector<8x128xf32>
    %573 = arith.addf %569, %572 : vector<8x128xf32>
    %574 = math.tanh %573 : vector<8x128xf32>
    %cst_173 = arith.constant 1.000000e+00 : f32
    %575 = vector.broadcast %cst_173 : f32 to vector<8x128xf32>
    %576 = arith.subf %575, %568 : vector<8x128xf32>
    %577 = arith.mulf %576, %574 : vector<8x128xf32>
    %578 = arith.mulf %568, %504 : vector<8x128xf32>
    %579 = arith.addf %577, %578 : vector<8x128xf32>
    %580 = vector.extract_strided_slice %551 {offsets = [0, 384], sizes = [8, 384], strides = [1, 1]} : vector<8x768xf32> to vector<8x384xf32>
    %581 = vector.extract_strided_slice %580 {offsets = [0, 0], sizes = [8, 128], strides = [1, 1]} : vector<8x384xf32> to vector<8x128xf32>
    %582 = vector.extract_strided_slice %545 {offsets = [0, 0], sizes = [8, 128], strides = [1, 1]} : vector<8x384xf32> to vector<8x128xf32>
    %583 = arith.addf %581, %582 : vector<8x128xf32>
    %584 = arith.negf %583 : vector<8x128xf32>
    %585 = math.exp %584 : vector<8x128xf32>
    %cst_174 = arith.constant 1.000000e+00 : f32
    %586 = vector.broadcast %cst_174 : f32 to vector<8x128xf32>
    %587 = arith.addf %586, %585 : vector<8x128xf32>
    %588 = arith.divf %586, %587 : vector<8x128xf32>
    %589 = vector.extract_strided_slice %580 {offsets = [0, 128], sizes = [8, 128], strides = [1, 1]} : vector<8x384xf32> to vector<8x128xf32>
    %590 = vector.extract_strided_slice %545 {offsets = [0, 128], sizes = [8, 128], strides = [1, 1]} : vector<8x384xf32> to vector<8x128xf32>
    %591 = arith.addf %589, %590 : vector<8x128xf32>
    %592 = arith.negf %591 : vector<8x128xf32>
    %593 = math.exp %592 : vector<8x128xf32>
    %cst_175 = arith.constant 1.000000e+00 : f32
    %594 = vector.broadcast %cst_175 : f32 to vector<8x128xf32>
    %595 = arith.addf %594, %593 : vector<8x128xf32>
    %596 = arith.divf %594, %595 : vector<8x128xf32>
    %597 = vector.extract_strided_slice %580 {offsets = [0, 256], sizes = [8, 128], strides = [1, 1]} : vector<8x384xf32> to vector<8x128xf32>
    %598 = vector.extract_strided_slice %545 {offsets = [0, 256], sizes = [8, 128], strides = [1, 1]} : vector<8x384xf32> to vector<8x128xf32>
    %599 = arith.addf %598, %14 : vector<8x128xf32>
    %600 = arith.mulf %588, %599 : vector<8x128xf32>
    %601 = arith.addf %597, %600 : vector<8x128xf32>
    %602 = math.tanh %601 : vector<8x128xf32>
    %cst_176 = arith.constant 1.000000e+00 : f32
    %603 = vector.broadcast %cst_176 : f32 to vector<8x128xf32>
    %604 = arith.subf %603, %596 : vector<8x128xf32>
    %605 = arith.mulf %604, %602 : vector<8x128xf32>
    %606 = arith.mulf %596, %532 : vector<8x128xf32>
    %607 = arith.addf %605, %606 : vector<8x128xf32>
    %608 = arith.index_cast %c7_i32_159 : i32 to index
    %c0_177 = arith.constant 0 : index
    %c0_178 = arith.constant 0 : index
    %609 = vector.load %arg7[%608, %c0_177, %c0_178] : memref<8x8x256xf32, #tpu.memory_space<vmem>>, vector<1x8x128xf32>
    %610 = vector.shape_cast %609 : vector<1x8x128xf32> to vector<8x128xf32>
    %611 = vector.shape_cast %579 : vector<8x128xf32> to vector<1x8x128xf32>
    tpu.vector_store %arg7[%608, %c0_177, %c0_178], %611 {strides = array<i32>} : memref<8x8x256xf32, #tpu.memory_space<vmem>>, vector<1x8x128xf32>,
    %612 = arith.index_cast %541 : i32 to index
    %c0_179 = arith.constant 0 : index
    %c128_180 = arith.constant 128 : index
    %613 = vector.load %arg7[%612, %c0_179, %c128_180] : memref<8x8x256xf32, #tpu.memory_space<vmem>>, vector<1x8x128xf32>
    %614 = vector.shape_cast %613 : vector<1x8x128xf32> to vector<8x128xf32>
    %615 = vector.shape_cast %607 : vector<8x128xf32> to vector<1x8x128xf32>
    tpu.vector_store %arg7[%612, %c0_179, %c128_180], %615 {strides = array<i32>} : memref<8x8x256xf32, #tpu.memory_space<vmem>>, vector<1x8x128xf32>,
    %c8_i32 = arith.constant 8 : i32
    %c0_181 = arith.constant 0 : index
    %c0_182 = arith.constant 0 : index
    %616 = vector.load %arg8[%c0_181, %c0_182] : memref<8x128xf32, #tpu.memory_space<vmem>>, vector<8x128xf32>
    tpu.vector_store %arg8[%c0_181, %c0_182], %579 {strides = array<i32>} : memref<8x128xf32, #tpu.memory_space<vmem>>, vector<8x128xf32>,
    %c0_183 = arith.constant 0 : index
    %c0_184 = arith.constant 0 : index
    %617 = vector.load %arg9[%c0_183, %c0_184] : memref<8x128xf32, #tpu.memory_space<vmem>>, vector<8x128xf32>
    tpu.vector_store %arg9[%c0_183, %c0_184], %607 {strides = array<i32>} : memref<8x128xf32, #tpu.memory_space<vmem>>, vector<8x128xf32>,
    return
  }
}

</mosaic_0001>

<llo_original>
// kernel: tpu_custom_call.1
$region0: #{tpu_custom_call.1}
  #allocation0 [shape = 'u32[]', space=smem, size = 0x4, offset = 0x4, fixed_abs, tag = 'smem constant byte address 0x4 - core index']
  #allocation1 [shape = 'u32[144,128]{1,0:T(1,128)}', space=vmem, size = 0x12000, scoped, tag = 'internal scratch']
  #allocation2 [shape = 'f32[8,8,768]{2,1,0:T(8,128)}', space=vmem, size = 0x30000, scoped, tag = 'scratch operand']
  %s0 = inlined_call_operand.hbm [shape: f32[8,8,128], index: 0, kind: input, shape index: {}]
  %s1 = inlined_call_operand.hbm [shape: f32[128,768], index: 1, kind: input, shape index: {}]
  %s2 = inlined_call_operand.hbm [shape: f32[128,384], index: 2, kind: input, shape index: {}]
  %s3 = inlined_call_operand.hbm [shape: f32[128,384], index: 3, kind: input, shape index: {}]
  %s4 = inlined_call_operand.vmem [shape: f32[1,768], index: 4, kind: input, shape index: {}]
  %s5 = inlined_call_operand.vmem [shape: f32[1,128], index: 5, kind: input, shape index: {}]
  %s6 = inlined_call_operand.vmem [shape: f32[1,128], index: 6, kind: input, shape index: {}]
  %s7 = inlined_call_operand.hbm [shape: f32[8,8,256], index: 7, kind: output, shape index: {0}]
  %s8 = inlined_call_operand.hbm [shape: f32[8,128], index: 8, kind: output, shape index: {1}]
  %s9 = inlined_call_operand.hbm [shape: f32[8,128], index: 9, kind: output, shape index: {2}]
  %10 = xla_tuple %s7, %s8, %s9
  %s11 = sld [smem:[#allocation0]]
  $region70: #{tpu_custom_call.1} parent=0
    _
  %s13 = ssub.s32 1, %s11
  %s14 = scalar_select 0, %s13, %s11
  $region1: #{tpu_custom_call.1} parent=0
    #allocation3 [shape = 'u8[32768]{0}', space=vmem, size = 0x8000, scoped, tag = 'input window, operand 0, single buffered']
    #allocation4 [shape = 's32[1]{0}', space=sflag, size = 0x4, scoped, tag = 'scoped memory for tpu_custom_call.1']
    #allocation5 [shape = 's32[1]{0}', space=sflag, size = 0x4, scoped, tag = 'scoped memory for tpu_custom_call.1']
    #allocation6 [shape = 'u8[393216]{0}', space=vmem, size = 0x60000, scoped, tag = 'input window, operand 1, single buffered']
    #allocation7 [shape = 's32[1]{0}', space=sflag, size = 0x4, scoped, tag = 'scoped memory for tpu_custom_call.1']
    #allocation8 [shape = 'u8[196608]{0}', space=vmem, size = 0x30000, scoped, tag = 'input window, operand 2, single buffered']
    #allocation9 [shape = 'u8[196608]{0}', space=vmem, size = 0x30000, scoped, tag = 'input window, operand 3, single buffered']
    #allocation10 [shape = 's32[1]{0}', space=sflag, size = 0x4, scoped, tag = 'scoped memory for tpu_custom_call.1']
    #allocation11 [shape = 'u8[65536]{0}', space=vmem, size = 0x10000, scoped, tag = 'output window, operand 0, single buffered']
    #allocation12 [shape = 'u8[4096]{0}', space=vmem, size = 0x1000, scoped, tag = 'output window, operand 1, single buffered']
    #allocation13 [shape = 's32[1]{0}', space=sflag, size = 0x4, scoped, tag = 'scoped memory for tpu_custom_call.1']
    #allocation14 [shape = 'u8[4096]{0}', space=vmem, size = 0x1000, scoped, tag = 'output window, operand 2, single buffered']
    %15 = vsyncpa [#allocation4], 0
    %16 = vsyncpa [#allocation7], 0
    %17 = vsyncpa [#allocation10], 0
    %18 = vsyncpa [#allocation5], 0
    %19 = vsyncpa [#allocation13], 0
    // Predicated region
    $region2: #{tpu_custom_call.1} parent=1 // pred_check
      _
    $region3: #{tpu_custom_call.1} parent=1 // pred_check_branch
      %21 = sbr.rel (0) target = $region5
    $region4: #{tpu_custom_call.1} parent=1 // pred_region
      %s23 = ssub.s32 1024, 1024
      %24 = vsyncadd [#allocation4], %s23
      %s25 = sshll.u32 [#allocation3], 4
      %s26 = int_to_ptr.vmem [resolvable:$true] %s25
      %31 = dma.hbm_to_vmem [thread:$0]  %s0, 1024, %s26, [#allocation4], 128, 128, 8
    $region5: #{tpu_custom_call.1} parent=1 // pred_fallthru
      _
    // Predicated region
    $region6: #{tpu_custom_call.1} parent=1 // pred_check
      _
    $region7: #{tpu_custom_call.1} parent=1 // pred_check_branch
      %33 = sbr.rel (0) target = $region9
    $region8: #{tpu_custom_call.1} parent=1 // pred_region
      %s35 = ssub.s32 12288, 12288
      %36 = vsyncadd [#allocation7], %s35
      %s37 = sshll.u32 [#allocation6], 4
      %s38 = int_to_ptr.vmem [resolvable:$true] %s37
      %43 = dma.hbm_to_vmem [thread:$0]  %s1, 12288, %s38, [#allocation7], 768, 768, 48
    $region9: #{tpu_custom_call.1} parent=1 // pred_fallthru
      _
    // Predicated region
    $region10: #{tpu_custom_call.1} parent=1 // pred_check
      _
    $region11: #{tpu_custom_call.1} parent=1 // pred_check_branch
      %45 = sbr.rel (0) target = $region13
    $region12: #{tpu_custom_call.1} parent=1 // pred_region
      %s47 = ssub.s32 6144, 6144
      %48 = vsyncadd [#allocation7], %s47
      %s49 = sshll.u32 [#allocation8], 4
      %s50 = int_to_ptr.vmem [resolvable:$true] %s49
      %55 = dma.hbm_to_vmem [thread:$0]  %s2, 6144, %s50, [#allocation7], 384, 384, 24
    $region13: #{tpu_custom_call.1} parent=1 // pred_fallthru
      _
    // Predicated region
    $region14: #{tpu_custom_call.1} parent=1 // pred_check
      _
    $region15: #{tpu_custom_call.1} parent=1 // pred_check_branch
      %57 = sbr.rel (0) target = $region17
    $region16: #{tpu_custom_call.1} parent=1 // pred_region
      %s59 = ssub.s32 6144, 6144
      %60 = vsyncadd [#allocation10], %s59
      %s61 = sshll.u32 [#allocation9], 4
      %s62 = int_to_ptr.vmem [resolvable:$true] %s61
      %67 = dma.hbm_to_vmem [thread:$0]  %s3, 6144, %s62, [#allocation10], 384, 384, 24
    $region17: #{tpu_custom_call.1} parent=1 // pred_fallthru
      _
    // Predicated region
    $region18: #{tpu_custom_call.1} parent=1 // pred_check
      _
    $region19: #{tpu_custom_call.1} parent=1 // pred_check_branch
      %69 = sbr.rel (0) target = $region21
    $region20: #{tpu_custom_call.1} parent=1 // pred_region
      _
    $region21: #{tpu_custom_call.1} parent=1 // pred_fallthru
      _
    // Predicated region
    $region22: #{tpu_custom_call.1} parent=1 // pred_check
      _
    $region23: #{tpu_custom_call.1} parent=1 // pred_check_branch
      %71 = sbr.rel (0) target = $region25
    $region24: #{tpu_custom_call.1} parent=1 // pred_region
      _
    $region25: #{tpu_custom_call.1} parent=1 // pred_fallthru
      _
    // Predicated region
    $region26: #{tpu_custom_call.1} parent=1 // pred_check
      _
    $region27: #{tpu_custom_call.1} parent=1 // pred_check_branch
      %73 = sbr.rel (0) target = $region29
    $region28: #{tpu_custom_call.1} parent=1 // pred_region
      _
    $region29: #{tpu_custom_call.1} parent=1 // pred_fallthru
      _
    // Predicated region
    $region30: #{tpu_custom_call.1} parent=1 // pred_check
      _
    $region31: #{tpu_custom_call.1} parent=1 // pred_check_branch
      %75 = sbr.rel (0) target = $region33
    $region32: #{tpu_custom_call.1} parent=1 // pred_region
      %76 = dma.done [#allocation4], 1024
    $region33: #{tpu_custom_call.1} parent=1 // pred_fallthru
      _
    // Predicated region
    $region34: #{tpu_custom_call.1} parent=1 // pred_check
      _
    $region35: #{tpu_custom_call.1} parent=1 // pred_check_branch
      %78 = sbr.rel (0) target = $region37
    $region36: #{tpu_custom_call.1} parent=1 // pred_region
      %79 = dma.done [#allocation7], 12288
    $region37: #{tpu_custom_call.1} parent=1 // pred_fallthru
      _
    // Predicated region
    $region38: #{tpu_custom_call.1} parent=1 // pred_check
      _
    $region39: #{tpu_custom_call.1} parent=1 // pred_check_branch
      %81 = sbr.rel (0) target = $region41
    $region40: #{tpu_custom_call.1} parent=1 // pred_region
      %82 = dma.done [#allocation7], 6144
    $region41: #{tpu_custom_call.1} parent=1 // pred_fallthru
      _
    // Predicated region
    $region42: #{tpu_custom_call.1} parent=1 // pred_check
      _
    $region43: #{tpu_custom_call.1} parent=1 // pred_check_branch
      %84 = sbr.rel (0) target = $region45
    $region44: #{tpu_custom_call.1} parent=1 // pred_region
      %85 = dma.done [#allocation10], 6144
    $region45: #{tpu_custom_call.1} parent=1 // pred_fallthru
      _
    %v86 = vld [vmem:[#allocation3] sm:$0xff]
    %v87 = vld [vmem:[#allocation3 + $0x8] sm:$0xff]
    %v88 = vld [vmem:[#allocation3 + $0x10] sm:$0xff]
    %v89 = vld [vmem:[#allocation3 + $0x18] sm:$0xff]
    %v90 = vld [vmem:[#allocation3 + $0x20] sm:$0xff]
    %v91 = vld [vmem:[#allocation3 + $0x28] sm:$0xff]
    %v92 = vld [vmem:[#allocation3 + $0x30] sm:$0xff]
    %v93 = vld [vmem:[#allocation3 + $0x38] sm:$0xff]
    %v94 = vld [vmem:[#allocation6] sm:$0xff]
    %v95 = vld [vmem:[#allocation6 + $0x8] sm:$0xff]
    %v96 = vld [vmem:[#allocation6 + $0x10] sm:$0xff]
    %v97 = vld [vmem:[#allocation6 + $0x18] sm:$0xff]
    %v98 = vld [vmem:[#allocation6 + $0x20] sm:$0xff]
    %v99 = vld [vmem:[#allocation6 + $0x28] sm:$0xff]
    %v100 = vld [vmem:[#allocation6 + $0x30] sm:$0xff]
    %v101 = vld [vmem:[#allocation6 + $0x38] sm:$0xff]
    %v102 = vld [vmem:[#allocation6 + $0x40] sm:$0xff]
    %v103 = vld [vmem:[#allocation6 + $0x48] sm:$0xff]
    %v104 = vld [vmem:[#allocation6 + $0x50] sm:$0xff]
    %v105 = vld [vmem:[#allocation6 + $0x58] sm:$0xff]
    %v106 = vld [vmem:[#allocation6 + $0x60] sm:$0xff]
    %v107 = vld [vmem:[#allocation6 + $0x68] sm:$0xff]
    %v108 = vld [vmem:[#allocation6 + $0x70] sm:$0xff]
    %v109 = vld [vmem:[#allocation6 + $0x78] sm:$0xff]
    %v110 = vld [vmem:[#allocation6 + $0x80] sm:$0xff]
    %v111 = vld [vmem:[#allocation6 + $0x88] sm:$0xff]
    %v112 = vld [vmem:[#allocation6 + $0x90] sm:$0xff]
    %v113 = vld [vmem:[#allocation6 + $0x98] sm:$0xff]
    %v114 = vld [vmem:[#allocation6 + $0xa0] sm:$0xff]
    %v115 = vld [vmem:[#allocation6 + $0xa8] sm:$0xff]
    %v116 = vld [vmem:[#allocation6 + $0xb0] sm:$0xff]
    %v117 = vld [vmem:[#allocation6 + $0xb8] sm:$0xff]
    %v118 = vld [vmem:[#allocation6 + $0xc0] sm:$0xff]
    %v119 = vld [vmem:[#allocation6 + $0xc8] sm:$0xff]
    %v120 = vld [vmem:[#allocation6 + $0xd0] sm:$0xff]
    %v121 = vld [vmem:[#allocation6 + $0xd8] sm:$0xff]
    %v122 = vld [vmem:[#allocation6 + $0xe0] sm:$0xff]
    %v123 = vld [vmem:[#allocation6 + $0xe8] sm:$0xff]
    %v124 = vld [vmem:[#allocation6 + $0xf0] sm:$0xff]
    %v125 = vld [vmem:[#allocation6 + $0xf8] sm:$0xff]
    %v126 = vld [vmem:[#allocation6 + $0x100] sm:$0xff]
    %v127 = vld [vmem:[#allocation6 + $0x108] sm:$0xff]
    %v128 = vld [vmem:[#allocation6 + $0x110] sm:$0xff]
    %v129 = vld [vmem:[#allocation6 + $0x118] sm:$0xff]
    %v130 = vld [vmem:[#allocation6 + $0x120] sm:$0xff]
    %v131 = vld [vmem:[#allocation6 + $0x128] sm:$0xff]
    %v132 = vld [vmem:[#allocation6 + $0x130] sm:$0xff]
    %v133 = vld [vmem:[#allocation6 + $0x138] sm:$0xff]
    %v134 = vld [vmem:[#allocation6 + $0x140] sm:$0xff]
    %v135 = vld [vmem:[#allocation6 + $0x148] sm:$0xff]
    %v136 = vld [vmem:[#allocation6 + $0x150] sm:$0xff]
    %v137 = vld [vmem:[#allocation6 + $0x158] sm:$0xff]
    %v138 = vld [vmem:[#allocation6 + $0x160] sm:$0xff]
    %v139 = vld [vmem:[#allocation6 + $0x168] sm:$0xff]
    %v140 = vld [vmem:[#allocation6 + $0x170] sm:$0xff]
    %v141 = vld [vmem:[#allocation6 + $0x178] sm:$0xff]
    %v142 = vld [vmem:[#allocation6 + $0x180] sm:$0xff]
    %v143 = vld [vmem:[#allocation6 + $0x188] sm:$0xff]
    %v144 = vld [vmem:[#allocation6 + $0x190] sm:$0xff]
    %v145 = vld [vmem:[#allocation6 + $0x198] sm:$0xff]
    %v146 = vld [vmem:[#allocation6 + $0x1a0] sm:$0xff]
    %v147 = vld [vmem:[#allocation6 + $0x1a8] sm:$0xff]
    %v148 = vld [vmem:[#allocation6 + $0x1b0] sm:$0xff]
    %v149 = vld [vmem:[#allocation6 + $0x1b8] sm:$0xff]
    %v150 = vld [vmem:[#allocation6 + $0x1c0] sm:$0xff]
    %v151 = vld [vmem:[#allocation6 + $0x1c8] sm:$0xff]
    %v152 = vld [vmem:[#allocation6 + $0x1d0] sm:$0xff]
    %v153 = vld [vmem:[#allocation6 + $0x1d8] sm:$0xff]
    %v154 = vld [vmem:[#allocation6 + $0x1e0] sm:$0xff]
    %v155 = vld [vmem:[#allocation6 + $0x1e8] sm:$0xff]
    %v156 = vld [vmem:[#allocation6 + $0x1f0] sm:$0xff]
    %v157 = vld [vmem:[#allocation6 + $0x1f8] sm:$0xff]
    %v158 = vld [vmem:[#allocation6 + $0x200] sm:$0xff]
    %v159 = vld [vmem:[#allocation6 + $0x208] sm:$0xff]
    %v160 = vld [vmem:[#allocation6 + $0x210] sm:$0xff]
    %v161 = vld [vmem:[#allocation6 + $0x218] sm:$0xff]
    %v162 = vld [vmem:[#allocation6 + $0x220] sm:$0xff]
    %v163 = vld [vmem:[#allocation6 + $0x228] sm:$0xff]
    %v164 = vld [vmem:[#allocation6 + $0x230] sm:$0xff]
    %v165 = vld [vmem:[#allocation6 + $0x238] sm:$0xff]
    %v166 = vld [vmem:[#allocation6 + $0x240] sm:$0xff]
    %v167 = vld [vmem:[#allocation6 + $0x248] sm:$0xff]
    %v168 = vld [vmem:[#allocation6 + $0x250] sm:$0xff]
    %v169 = vld [vmem:[#allocation6 + $0x258] sm:$0xff]
    %v170 = vld [vmem:[#allocation6 + $0x260] sm:$0xff]
    %v171 = vld [vmem:[#allocation6 + $0x268] sm:$0xff]
    %v172 = vld [vmem:[#allocation6 + $0x270] sm:$0xff]
    %v173 = vld [vmem:[#allocation6 + $0x278] sm:$0xff]
    %v174 = vld [vmem:[#allocation6 + $0x280] sm:$0xff]
    %v175 = vld [vmem:[#allocation6 + $0x288] sm:$0xff]
    %v176 = vld [vmem:[#allocation6 + $0x290] sm:$0xff]
    %v177 = vld [vmem:[#allocation6 + $0x298] sm:$0xff]
    %v178 = vld [vmem:[#allocation6 + $0x2a0] sm:$0xff]
    %v179 = vld [vmem:[#allocation6 + $0x2a8] sm:$0xff]
    %v180 = vld [vmem:[#allocation6 + $0x2b0] sm:$0xff]
    %v181 = vld [vmem:[#allocation6 + $0x2b8] sm:$0xff]
    %v182 = vld [vmem:[#allocation6 + $0x2c0] sm:$0xff]
    %v183 = vld [vmem:[#allocation6 + $0x2c8] sm:$0xff]
    %v184 = vld [vmem:[#allocation6 + $0x2d0] sm:$0xff]
    %v185 = vld [vmem:[#allocation6 + $0x2d8] sm:$0xff]
    %v186 = vld [vmem:[#allocation6 + $0x2e0] sm:$0xff]
    %v187 = vld [vmem:[#allocation6 + $0x2e8] sm:$0xff]
    %v188 = vld [vmem:[#allocation6 + $0x2f0] sm:$0xff]
    %v189 = vld [vmem:[#allocation6 + $0x2f8] sm:$0xff]
    %v190 = vld [vmem:[%s4] sm:$0x3f]
    %v192 = vlaneseq
    %v193 = vshrl.u32 %v192, 7
    %v194 = vsub.s32 0, %v193
    %v195 = vrot.slane %v190, %v194
    %v196 = vlaneseq
    %v197 = vshrl.u32 %v196, 7
    %v198 = vsub.s32 1, %v197
    %v199 = vrot.slane %v190, %v198
    %v200 = vlaneseq
    %v201 = vshrl.u32 %v200, 7
    %v202 = vsub.s32 2, %v201
    %v203 = vrot.slane %v190, %v202
    %v204 = vlaneseq
    %v205 = vshrl.u32 %v204, 7
    %v206 = vsub.s32 3, %v205
    %v207 = vrot.slane %v190, %v206
    %v208 = vlaneseq
    %v209 = vshrl.u32 %v208, 7
    %v210 = vsub.s32 4, %v209
    %v211 = vrot.slane %v190, %v210
    %v212 = vlaneseq
    %v213 = vshrl.u32 %v212, 7
    %v214 = vsub.s32 5, %v213
    %v215 = vrot.slane %v190, %v214
    %222 = vmatprep.subr.mxu0 %v95
    %223 = vmatpush1.msra.mxu0 %v94
    %224 = vmatprep.subr.mxu0 %v101
    %225 = vmatpush1.msra.mxu0 %v100
    %226 = vmatprep.subr.mxu0 %v107
    %227 = vmatpush1.msra.mxu0 %v106
    %228 = vmatprep.subr.mxu0 %v113
    %229 = vmatpush1.msra.mxu0 %v112
    %230 = vmatprep.subr.mxu0 %v119
    %231 = vmatpush1.msra.mxu0 %v118
    %232 = vmatprep.subr.mxu0 %v125
    %233 = vmatpush1.msra.mxu0 %v124
    %234 = vmatprep.subr.mxu0 %v131
    %235 = vmatpush1.msra.mxu0 %v130
    %236 = vmatprep.subr.mxu0 %v137
    %237 = vmatpush1.msra.mxu0 %v136
    %238 = vmatprep.subr.mxu0 %v143
    %239 = vmatpush1.msra.mxu0 %v142
    %240 = vmatprep.subr.mxu0 %v149
    %241 = vmatpush1.msra.mxu0 %v148
    %242 = vmatprep.subr.mxu0 %v155
    %243 = vmatpush1.msra.mxu0 %v154
    %244 = vmatprep.subr.mxu0 %v161
    %245 = vmatpush1.msra.mxu0 %v160
    %246 = vmatprep.subr.mxu0 %v167
    %247 = vmatpush1.msra.mxu0 %v166
    %248 = vmatprep.subr.mxu0 %v173
    %249 = vmatpush1.msra.mxu0 %v172
    %250 = vmatprep.subr.mxu0 %v179
    %251 = vmatpush1.msra.mxu0 %v178
    %252 = vmatprep.subr.mxu0 %v185
    %253 = vmatpush1.msra.mxu0 %v184
    %254 = vmatprep.subr.mxu0 0.0
    %255 = vmatpush1.msra.mxu0 0.0
    %256 = vmatprep.subr.mxu0 0.0
    %257 = vmatpush1.msra.mxu0 0.0
    %258 = vmatprep.subr.mxu0 0.0
    %259 = vmatpush1.msra.mxu0 0.0
    %260 = vmatprep.subr.mxu0 0.0
    %261 = vmatpush1.msra.mxu0 0.0
    %262 = vmatprep.subr.mxu0 0.0
    %263 = vmatpush1.msra.mxu0 0.0
    %264 = vmatprep.subr.mxu0 0.0
    %265 = vmatpush1.msra.mxu0 0.0
    %266 = vmatprep.subr.mxu0 0.0
    %267 = vmatpush1.msra.mxu0 0.0
    %268 = vmatprep.subr.mxu0 0.0
    %269 = vmatpush1.msra.mxu0 0.0
    %270 = vmatprep.subr.mxu0 0.0
    %271 = vmatpush1.msra.mxu0 0.0
    %272 = vmatprep.subr.mxu0 0.0
    %273 = vmatpush1.msra.mxu0 0.0
    %274 = vmatprep.subr.mxu0 0.0
    %275 = vmatpush1.msra.mxu0 0.0
    %276 = vmatprep.subr.mxu0 0.0
    %277 = vmatpush1.msra.mxu0 0.0
    %278 = vmatprep.subr.mxu0 0.0
    %279 = vmatpush1.msra.mxu0 0.0
    %280 = vmatprep.subr.mxu0 0.0
    %281 = vmatpush1.msra.mxu0 0.0
    %282 = vmatprep.subr.mxu0 0.0
    %283 = vmatpush1.msra.mxu0 0.0
    %284 = vmatprep.subr.mxu0 0.0
    %285 = vmatpush1.msra.mxu0 0.0
    %286 = vmatprep.mubr.f32.mxu0 0.0
    %287 = vmatmul.mubr.f32.gmra.mrb[0].mxu0 %v86
    %v288 = vpop.f32.mrb[0].mxu0
    %v289 = vadd.f32 %v195, %v288
    %v290 = vpop.f32.mrb[0].mxu0
    %v291 = vadd.f32 %v199, %v290
    %292 = vmatprep.mubr.f32.mxu0 0.0
    %293 = vmatmul.mubr.f32.gmra.mrb[0].mxu0 %v87
    %v294 = vpop.f32.mrb[0].mxu0
    %v295 = vadd.f32 %v195, %v294
    %v296 = vpop.f32.mrb[0].mxu0
    %v297 = vadd.f32 %v199, %v296
    %298 = vmatprep.mubr.f32.mxu0 0.0
    %299 = vmatmul.mubr.f32.gmra.mrb[0].mxu0 %v88
    %v300 = vpop.f32.mrb[0].mxu0
    %v301 = vadd.f32 %v195, %v300
    %v302 = vpop.f32.mrb[0].mxu0
    %v303 = vadd.f32 %v199, %v302
    %304 = vmatprep.mubr.f32.mxu0 0.0
    %305 = vmatmul.mubr.f32.gmra.mrb[0].mxu0 %v89
    %v306 = vpop.f32.mrb[0].mxu0
    %v307 = vadd.f32 %v195, %v306
    %v308 = vpop.f32.mrb[0].mxu0
    %v309 = vadd.f32 %v199, %v308
    %310 = vmatprep.mubr.f32.mxu0 0.0
    %311 = vmatmul.mubr.f32.gmra.mrb[0].mxu0 %v90
    %v312 = vpop.f32.mrb[0].mxu0
    %v313 = vadd.f32 %v195, %v312
    %v314 = vpop.f32.mrb[0].mxu0
    %v315 = vadd.f32 %v199, %v314
    %316 = vmatprep.mubr.f32.mxu0 0.0
    %317 = vmatmul.mubr.f32.gmra.mrb[0].mxu0 %v91
    %v318 = vpop.f32.mrb[0].mxu0
    %v319 = vadd.f32 %v195, %v318
    %v320 = vpop.f32.mrb[0].mxu0
    %v321 = vadd.f32 %v199, %v320
    %322 = vmatprep.mubr.f32.mxu0 0.0
    %323 = vmatmul.mubr.f32.gmra.mrb[0].mxu0 %v92
    %v324 = vpop.f32.mrb[0].mxu0
    %v325 = vadd.f32 %v195, %v324
    %v326 = vpop.f32.mrb[0].mxu0
    %v327 = vadd.f32 %v199, %v326
    %328 = vmatprep.mubr.f32.mxu0 0.0
    %329 = vmatmul.mubr.f32.gmra.mrb[0].mxu0 %v93
    %v330 = vpop.f32.mrb[0].mxu0
    %v331 = vadd.f32 %v195, %v330
    %v332 = vpop.f32.mrb[0].mxu0
    %v333 = vadd.f32 %v199, %v332
    %334 = vdwg.mxu0
    %335 = vmatprep.subr.mxu0 %v97
    %336 = vmatpush1.msra.mxu0 %v96
    %337 = vmatprep.subr.mxu0 %v103
    %338 = vmatpush1.msra.mxu0 %v102
    %339 = vmatprep.subr.mxu0 %v109
    %340 = vmatpush1.msra.mxu0 %v108
    %341 = vmatprep.subr.mxu0 %v115
    %342 = vmatpush1.msra.mxu0 %v114
    %343 = vmatprep.subr.mxu0 %v121
    %344 = vmatpush1.msra.mxu0 %v120
    %345 = vmatprep.subr.mxu0 %v127
    %346 = vmatpush1.msra.mxu0 %v126
    %347 = vmatprep.subr.mxu0 %v133
    %348 = vmatpush1.msra.mxu0 %v132
    %349 = vmatprep.subr.mxu0 %v139
    %350 = vmatpush1.msra.mxu0 %v138
    %351 = vmatprep.subr.mxu0 %v145
    %352 = vmatpush1.msra.mxu0 %v144
    %353 = vmatprep.subr.mxu0 %v151
    %354 = vmatpush1.msra.mxu0 %v150
    %355 = vmatprep.subr.mxu0 %v157
    %356 = vmatpush1.msra.mxu0 %v156
    %357 = vmatprep.subr.mxu0 %v163
    %358 = vmatpush1.msra.mxu0 %v162
    %359 = vmatprep.subr.mxu0 %v169
    %360 = vmatpush1.msra.mxu0 %v168
    %361 = vmatprep.subr.mxu0 %v175
    %362 = vmatpush1.msra.mxu0 %v174
    %363 = vmatprep.subr.mxu0 %v181
    %364 = vmatpush1.msra.mxu0 %v180
    %365 = vmatprep.subr.mxu0 %v187
    %366 = vmatpush1.msra.mxu0 %v186
    %367 = vmatprep.subr.mxu0 0.0
    %368 = vmatpush1.msra.mxu0 0.0
    %369 = vmatprep.subr.mxu0 0.0
    %370 = vmatpush1.msra.mxu0 0.0
    %371 = vmatprep.subr.mxu0 0.0
    %372 = vmatpush1.msra.mxu0 0.0
    %373 = vmatprep.subr.mxu0 0.0
    %374 = vmatpush1.msra.mxu0 0.0
    %375 = vmatprep.subr.mxu0 0.0
    %376 = vmatpush1.msra.mxu0 0.0
    %377 = vmatprep.subr.mxu0 0.0
    %378 = vmatpush1.msra.mxu0 0.0
    %379 = vmatprep.subr.mxu0 0.0
    %380 = vmatpush1.msra.mxu0 0.0
    %381 = vmatprep.subr.mxu0 0.0
    %382 = vmatpush1.msra.mxu0 0.0
    %383 = vmatprep.subr.mxu0 0.0
    %384 = vmatpush1.msra.mxu0 0.0
    %385 = vmatprep.subr.mxu0 0.0
    %386 = vmatpush1.msra.mxu0 0.0
    %387 = vmatprep.subr.mxu0 0.0
    %388 = vmatpush1.msra.mxu0 0.0
    %389 = vmatprep.subr.mxu0 0.0
    %390 = vmatpush1.msra.mxu0 0.0
    %391 = vmatprep.subr.mxu0 0.0
    %392 = vmatpush1.msra.mxu0 0.0
    %393 = vmatprep.subr.mxu0 0.0
    %394 = vmatpush1.msra.mxu0 0.0
    %395 = vmatprep.subr.mxu0 0.0
    %396 = vmatpush1.msra.mxu0 0.0
    %397 = vmatprep.subr.mxu0 0.0
    %398 = vmatpush1.msra.mxu0 0.0
    %399 = vmatprep.mubr.f32.mxu0 0.0
    %400 = vmatmul.mubr.f32.gmra.mrb[0].mxu0 %v86
    %v401 = vpop.f32.mrb[0].mxu0
    %v402 = vadd.f32 %v203, %v401
    %v403 = vpop.f32.mrb[0].mxu0
    %v404 = vadd.f32 %v207, %v403
    %405 = vmatprep.mubr.f32.mxu0 0.0
    %406 = vmatmul.mubr.f32.gmra.mrb[0].mxu0 %v87
    %v407 = vpop.f32.mrb[0].mxu0
    %v408 = vadd.f32 %v203, %v407
    %v409 = vpop.f32.mrb[0].mxu0
    %v410 = vadd.f32 %v207, %v409
    %411 = vmatprep.mubr.f32.mxu0 0.0
    %412 = vmatmul.mubr.f32.gmra.mrb[0].mxu0 %v88
    %v413 = vpop.f32.mrb[0].mxu0
    %v414 = vadd.f32 %v203, %v413
    %v415 = vpop.f32.mrb[0].mxu0
    %v416 = vadd.f32 %v207, %v415
    %417 = vmatprep.mubr.f32.mxu0 0.0
    %418 = vmatmul.mubr.f32.gmra.mrb[0].mxu0 %v89
    %v419 = vpop.f32.mrb[0].mxu0
    %v420 = vadd.f32 %v203, %v419
    %v421 = vpop.f32.mrb[0].mxu0
    %v422 = vadd.f32 %v207, %v421
    %423 = vmatprep.mubr.f32.mxu0 0.0
    %424 = vmatmul.mubr.f32.gmra.mrb[0].mxu0 %v90
    %v425 = vpop.f32.mrb[0].mxu0
    %v426 = vadd.f32 %v203, %v425
    %v427 = vpop.f32.mrb[0].mxu0
    %v428 = vadd.f32 %v207, %v427
    %429 = vmatprep.mubr.f32.mxu0 0.0
    %430 = vmatmul.mubr.f32.gmra.mrb[0].mxu0 %v91
    %v431 = vpop.f32.mrb[0].mxu0
    %v432 = vadd.f32 %v203, %v431
    %v433 = vpop.f32.mrb[0].mxu0
    %v434 = vadd.f32 %v207, %v433
    %435 = vmatprep.mubr.f32.mxu0 0.0
    %436 = vmatmul.mubr.f32.gmra.mrb[0].mxu0 %v92
    %v437 = vpop.f32.mrb[0].mxu0
    %v438 = vadd.f32 %v203, %v437
    %v439 = vpop.f32.mrb[0].mxu0
    %v440 = vadd.f32 %v207, %v439
    %441 = vmatprep.mubr.f32.mxu0 0.0
    %442 = vmatmul.mubr.f32.gmra.mrb[0].mxu0 %v93
    %v443 = vpop.f32.mrb[0].mxu0
    %v444 = vadd.f32 %v203, %v443
    %v445 = vpop.f32.mrb[0].mxu0
    %v446 = vadd.f32 %v207, %v445
    %447 = vdwg.mxu0
    %448 = vmatprep.subr.mxu0 %v99
    %449 = vmatpush1.msra.mxu0 %v98
    %450 = vmatprep.subr.mxu0 %v105
    %451 = vmatpush1.msra.mxu0 %v104
    %452 = vmatprep.subr.mxu0 %v111
    %453 = vmatpush1.msra.mxu0 %v110
    %454 = vmatprep.subr.mxu0 %v117
    %455 = vmatpush1.msra.mxu0 %v116
    %456 = vmatprep.subr.mxu0 %v123
    %457 = vmatpush1.msra.mxu0 %v122
    %458 = vmatprep.subr.mxu0 %v129
    %459 = vmatpush1.msra.mxu0 %v128
    %460 = vmatprep.subr.mxu0 %v135
    %461 = vmatpush1.msra.mxu0 %v134
    %462 = vmatprep.subr.mxu0 %v141
    %463 = vmatpush1.msra.mxu0 %v140
    %464 = vmatprep.subr.mxu0 %v147
    %465 = vmatpush1.msra.mxu0 %v146
    %466 = vmatprep.subr.mxu0 %v153
    %467 = vmatpush1.msra.mxu0 %v152
    %468 = vmatprep.subr.mxu0 %v159
    %469 = vmatpush1.msra.mxu0 %v158
    %470 = vmatprep.subr.mxu0 %v165
    %471 = vmatpush1.msra.mxu0 %v164
    %472 = vmatprep.subr.mxu0 %v171
    %473 = vmatpush1.msra.mxu0 %v170
    %474 = vmatprep.subr.mxu0 %v177
    %475 = vmatpush1.msra.mxu0 %v176
    %476 = vmatprep.subr.mxu0 %v183
    %477 = vmatpush1.msra.mxu0 %v182
    %478 = vmatprep.subr.mxu0 %v189
    %479 = vmatpush1.msra.mxu0 %v188
    %480 = vmatprep.subr.mxu0 0.0
    %481 = vmatpush1.msra.mxu0 0.0
    %482 = vmatprep.subr.mxu0 0.0
    %483 = vmatpush1.msra.mxu0 0.0
    %484 = vmatprep.subr.mxu0 0.0
    %485 = vmatpush1.msra.mxu0 0.0
    %486 = vmatprep.subr.mxu0 0.0
    %487 = vmatpush1.msra.mxu0 0.0
    %488 = vmatprep.subr.mxu0 0.0
    %489 = vmatpush1.msra.mxu0 0.0
    %490 = vmatprep.subr.mxu0 0.0
    %491 = vmatpush1.msra.mxu0 0.0
    %492 = vmatprep.subr.mxu0 0.0
    %493 = vmatpush1.msra.mxu0 0.0
    %494 = vmatprep.subr.mxu0 0.0
    %495 = vmatpush1.msra.mxu0 0.0
    %496 = vmatprep.subr.mxu0 0.0
    %497 = vmatpush1.msra.mxu0 0.0
    %498 = vmatprep.subr.mxu0 0.0
    %499 = vmatpush1.msra.mxu0 0.0
    %500 = vmatprep.subr.mxu0 0.0
    %501 = vmatpush1.msra.mxu0 0.0
    %502 = vmatprep.subr.mxu0 0.0
    %503 = vmatpush1.msra.mxu0 0.0
    %504 = vmatprep.subr.mxu0 0.0
    %505 = vmatpush1.msra.mxu0 0.0
    %506 = vmatprep.subr.mxu0 0.0
    %507 = vmatpush1.msra.mxu0 0.0
    %508 = vmatprep.subr.mxu0 0.0
    %509 = vmatpush1.msra.mxu0 0.0
    %510 = vmatprep.subr.mxu0 0.0
    %511 = vmatpush1.msra.mxu0 0.0
    %512 = vmatprep.mubr.f32.mxu0 0.0
    %513 = vmatmul.mubr.f32.gmra.mrb[0].mxu0 %v86
    %v514 = vpop.f32.mrb[0].mxu0
    %v515 = vadd.f32 %v211, %v514
    %v516 = vpop.f32.mrb[0].mxu0
    %v517 = vadd.f32 %v215, %v516
    %518 = vmatprep.mubr.f32.mxu0 0.0
    %519 = vmatmul.mubr.f32.gmra.mrb[0].mxu0 %v87
    %v520 = vpop.f32.mrb[0].mxu0
    %v521 = vadd.f32 %v211, %v520
    %v522 = vpop.f32.mrb[0].mxu0
    %v523 = vadd.f32 %v215, %v522
    %524 = vmatprep.mubr.f32.mxu0 0.0
    %525 = vmatmul.mubr.f32.gmra.mrb[0].mxu0 %v88
    %v526 = vpop.f32.mrb[0].mxu0
    %v527 = vadd.f32 %v211, %v526
    %v528 = vpop.f32.mrb[0].mxu0
    %v529 = vadd.f32 %v215, %v528
    %530 = vmatprep.mubr.f32.mxu0 0.0
    %531 = vmatmul.mubr.f32.gmra.mrb[0].mxu0 %v89
    %v532 = vpop.f32.mrb[0].mxu0
    %v533 = vadd.f32 %v211, %v532
    %v534 = vpop.f32.mrb[0].mxu0
    %v535 = vadd.f32 %v215, %v534
    %536 = vmatprep.mubr.f32.mxu0 0.0
    %537 = vmatmul.mubr.f32.gmra.mrb[0].mxu0 %v90
    %v538 = vpop.f32.mrb[0].mxu0
    %v539 = vadd.f32 %v211, %v538
    %v540 = vpop.f32.mrb[0].mxu0
    %v541 = vadd.f32 %v215, %v540
    %542 = vmatprep.mubr.f32.mxu0 0.0
    %543 = vmatmul.mubr.f32.gmra.mrb[0].mxu0 %v91
    %v544 = vpop.f32.mrb[0].mxu0
    %v545 = vadd.f32 %v211, %v544
    %v546 = vpop.f32.mrb[0].mxu0
    %v547 = vadd.f32 %v215, %v546
    %548 = vmatprep.mubr.f32.mxu0 0.0
    %549 = vmatmul.mubr.f32.gmra.mrb[0].mxu0 %v92
    %v550 = vpop.f32.mrb[0].mxu0
    %v551 = vadd.f32 %v211, %v550
    %v552 = vpop.f32.mrb[0].mxu0
    %v553 = vadd.f32 %v215, %v552
    %554 = vmatprep.mubr.f32.mxu0 0.0
    %555 = vmatmul.mubr.f32.gmra.mrb[0].mxu0 %v93
    %v556 = vpop.f32.mrb[0].mxu0
    %v557 = vadd.f32 %v211, %v556
    %v558 = vpop.f32.mrb[0].mxu0
    %v559 = vadd.f32 %v215, %v558
    %560 = vdwg.mxu0
    %561 = vst [vmem:[#allocation2] sm:$0xff] %v289
    %562 = vst [vmem:[#allocation2 + $0x8] sm:$0xff] %v291
    %563 = vst [vmem:[#allocation2 + $0x10] sm:$0xff] %v402
    %564 = vst [vmem:[#allocation2 + $0x18] sm:$0xff] %v404
    %565 = vst [vmem:[#allocation2 + $0x20] sm:$0xff] %v515
    %566 = vst [vmem:[#allocation2 + $0x28] sm:$0xff] %v517
    %567 = vst [vmem:[#allocation2 + $0x30] sm:$0xff] %v295
    %568 = vst [vmem:[#allocation2 + $0x38] sm:$0xff] %v297
    %569 = vst [vmem:[#allocation2 + $0x40] sm:$0xff] %v408
    %570 = vst [vmem:[#allocation2 + $0x48] sm:$0xff] %v410
    %571 = vst [vmem:[#allocation2 + $0x50] sm:$0xff] %v521
    %572 = vst [vmem:[#allocation2 + $0x58] sm:$0xff] %v523
    %573 = vst [vmem:[#allocation2 + $0x60] sm:$0xff] %v301
    %574 = vst [vmem:[#allocation2 + $0x68] sm:$0xff] %v303
    %575 = vst [vmem:[#allocation2 + $0x70] sm:$0xff] %v414
    %576 = vst [vmem:[#allocation2 + $0x78] sm:$0xff] %v416
    %577 = vst [vmem:[#allocation2 + $0x80] sm:$0xff] %v527
    %578 = vst [vmem:[#allocation2 + $0x88] sm:$0xff] %v529
    %579 = vst [vmem:[#allocation2 + $0x90] sm:$0xff] %v307
    %580 = vst [vmem:[#allocation2 + $0x98] sm:$0xff] %v309
    %581 = vst [vmem:[#allocation2 + $0xa0] sm:$0xff] %v420
    %582 = vst [vmem:[#allocation2 + $0xa8] sm:$0xff] %v422
    %583 = vst [vmem:[#allocation2 + $0xb0] sm:$0xff] %v533
    %584 = vst [vmem:[#allocation2 + $0xb8] sm:$0xff] %v535
    %585 = vst [vmem:[#allocation2 + $0xc0] sm:$0xff] %v313
    %586 = vst [vmem:[#allocation2 + $0xc8] sm:$0xff] %v315
    %587 = vst [vmem:[#allocation2 + $0xd0] sm:$0xff] %v426
    %588 = vst [vmem:[#allocation2 + $0xd8] sm:$0xff] %v428
    %589 = vst [vmem:[#allocation2 + $0xe0] sm:$0xff] %v539
    %590 = vst [vmem:[#allocation2 + $0xe8] sm:$0xff] %v541
    %591 = vst [vmem:[#allocation2 + $0xf0] sm:$0xff] %v319
    %592 = vst [vmem:[#allocation2 + $0xf8] sm:$0xff] %v321
    %593 = vst [vmem:[#allocation2 + $0x100] sm:$0xff] %v432
    %594 = vst [vmem:[#allocation2 + $0x108] sm:$0xff] %v434
    %595 = vst [vmem:[#allocation2 + $0x110] sm:$0xff] %v545
    %596 = vst [vmem:[#allocation2 + $0x118] sm:$0xff] %v547
    %597 = vst [vmem:[#allocation2 + $0x120] sm:$0xff] %v325
    %598 = vst [vmem:[#allocation2 + $0x128] sm:$0xff] %v327
    %599 = vst [vmem:[#allocation2 + $0x130] sm:$0xff] %v438
    %600 = vst [vmem:[#allocation2 + $0x138] sm:$0xff] %v440
    %601 = vst [vmem:[#allocation2 + $0x140] sm:$0xff] %v551
    %602 = vst [vmem:[#allocation2 + $0x148] sm:$0xff] %v553
    %603 = vst [vmem:[#allocation2 + $0x150] sm:$0xff] %v331
    %604 = vst [vmem:[#allocation2 + $0x158] sm:$0xff] %v333
    %605 = vst [vmem:[#allocation2 + $0x160] sm:$0xff] %v444
    %606 = vst [vmem:[#allocation2 + $0x168] sm:$0xff] %v446
    %607 = vst [vmem:[#allocation2 + $0x170] sm:$0xff] %v557
    %608 = vst [vmem:[#allocation2 + $0x178] sm:$0xff] %v559
    %v609 = vld [vmem:[%s5] sm:$0x1]
    %v611 = vlaneseq
    %v612 = vshrl.u32 %v611, 7
    %v613 = vsub.s32 0, %v612
    %v614 = vrot.slane %v609, %v613
    %v616 = vld [vmem:[%s6] sm:$0x1]
    %v618 = vlaneseq
    %v619 = vshrl.u32 %v618, 7
    %v620 = vsub.s32 0, %v619
    %v621 = vrot.slane %v616, %v620
    %v623 = vld [vmem:[#allocation8] sm:$0xff]
    %v624 = vld [vmem:[#allocation8 + $0x8] sm:$0xff]
    %v625 = vld [vmem:[#allocation8 + $0x10] sm:$0xff]
    %v626 = vld [vmem:[#allocation8 + $0x18] sm:$0xff]
    %v627 = vld [vmem:[#allocation8 + $0x20] sm:$0xff]
    %v628 = vld [vmem:[#allocation8 + $0x28] sm:$0xff]
    %v629 = vld [vmem:[#allocation8 + $0x30] sm:$0xff]
    %v630 = vld [vmem:[#allocation8 + $0x38] sm:$0xff]
    %v631 = vld [vmem:[#allocation8 + $0x40] sm:$0xff]
    %v632 = vld [vmem:[#allocation8 + $0x48] sm:$0xff]
    %v633 = vld [vmem:[#allocation8 + $0x50] sm:$0xff]
    %v634 = vld [vmem:[#allocation8 + $0x58] sm:$0xff]
    %v635 = vld [vmem:[#allocation8 + $0x60] sm:$0xff]
    %v636 = vld [vmem:[#allocation8 + $0x68] sm:$0xff]
    %v637 = vld [vmem:[#allocation8 + $0x70] sm:$0xff]
    %v638 = vld [vmem:[#allocation8 + $0x78] sm:$0xff]
    %v639 = vld [vmem:[#allocation8 + $0x80] sm:$0xff]
    %v640 = vld [vmem:[#allocation8 + $0x88] sm:$0xff]
    %v641 = vld [vmem:[#allocation8 + $0x90] sm:$0xff]
    %v642 = vld [vmem:[#allocation8 + $0x98] sm:$0xff]
    %v643 = vld [vmem:[#allocation8 + $0xa0] sm:$0xff]
    %v644 = vld [vmem:[#allocation8 + $0xa8] sm:$0xff]
    %v645 = vld [vmem:[#allocation8 + $0xb0] sm:$0xff]
    %v646 = vld [vmem:[#allocation8 + $0xb8] sm:$0xff]
    %v647 = vld [vmem:[#allocation8 + $0xc0] sm:$0xff]
    %v648 = vld [vmem:[#allocation8 + $0xc8] sm:$0xff]
    %v649 = vld [vmem:[#allocation8 + $0xd0] sm:$0xff]
    %v650 = vld [vmem:[#allocation8 + $0xd8] sm:$0xff]
    %v651 = vld [vmem:[#allocation8 + $0xe0] sm:$0xff]
    %v652 = vld [vmem:[#allocation8 + $0xe8] sm:$0xff]
    %v653 = vld [vmem:[#allocation8 + $0xf0] sm:$0xff]
    %v654 = vld [vmem:[#allocation8 + $0xf8] sm:$0xff]
    %v655 = vld [vmem:[#allocation8 + $0x100] sm:$0xff]
    %v656 = vld [vmem:[#allocation8 + $0x108] sm:$0xff]
    %v657 = vld [vmem:[#allocation8 + $0x110] sm:$0xff]
    %v658 = vld [vmem:[#allocation8 + $0x118] sm:$0xff]
    %v659 = vld [vmem:[#allocation8 + $0x120] sm:$0xff]
    %v660 = vld [vmem:[#allocation8 + $0x128] sm:$0xff]
    %v661 = vld [vmem:[#allocation8 + $0x130] sm:$0xff]
    %v662 = vld [vmem:[#allocation8 + $0x138] sm:$0xff]
    %v663 = vld [vmem:[#allocation8 + $0x140] sm:$0xff]
    %v664 = vld [vmem:[#allocation8 + $0x148] sm:$0xff]
    %v665 = vld [vmem:[#allocation8 + $0x150] sm:$0xff]
    %v666 = vld [vmem:[#allocation8 + $0x158] sm:$0xff]
    %v667 = vld [vmem:[#allocation8 + $0x160] sm:$0xff]
    %v668 = vld [vmem:[#allocation8 + $0x168] sm:$0xff]
    %v669 = vld [vmem:[#allocation8 + $0x170] sm:$0xff]
    %v670 = vld [vmem:[#allocation8 + $0x178] sm:$0xff]
    %671 = vmatprep.subr.mxu0 %v624
    %672 = vmatpush1.msra.mxu0 %v623
    %673 = vmatprep.subr.mxu0 %v627
    %674 = vmatpush1.msra.mxu0 %v626
    %675 = vmatprep.subr.mxu0 %v630
    %676 = vmatpush1.msra.mxu0 %v629
    %677 = vmatprep.subr.mxu0 %v633
    %678 = vmatpush1.msra.mxu0 %v632
    %679 = vmatprep.subr.mxu0 %v636
    %680 = vmatpush1.msra.mxu0 %v635
    %681 = vmatprep.subr.mxu0 %v639
    %682 = vmatpush1.msra.mxu0 %v638
    %683 = vmatprep.subr.mxu0 %v642
    %684 = vmatpush1.msra.mxu0 %v641
    %685 = vmatprep.subr.mxu0 %v645
    %686 = vmatpush1.msra.mxu0 %v644
    %687 = vmatprep.subr.mxu0 %v648
    %688 = vmatpush1.msra.mxu0 %v647
    %689 = vmatprep.subr.mxu0 %v651
    %690 = vmatpush1.msra.mxu0 %v650
    %691 = vmatprep.subr.mxu0 %v654
    %692 = vmatpush1.msra.mxu0 %v653
    %693 = vmatprep.subr.mxu0 %v657
    %694 = vmatpush1.msra.mxu0 %v656
    %695 = vmatprep.subr.mxu0 %v660
    %696 = vmatpush1.msra.mxu0 %v659
    %697 = vmatprep.subr.mxu0 %v663
    %698 = vmatpush1.msra.mxu0 %v662
    %699 = vmatprep.subr.mxu0 %v666
    %700 = vmatpush1.msra.mxu0 %v665
    %701 = vmatprep.subr.mxu0 %v669
    %702 = vmatpush1.msra.mxu0 %v668
    %703 = vmatprep.subr.mxu0 0.0
    %704 = vmatpush1.msra.mxu0 0.0
    %705 = vmatprep.subr.mxu0 0.0
    %706 = vmatpush1.msra.mxu0 0.0
    %707 = vmatprep.subr.mxu0 0.0
    %708 = vmatpush1.msra.mxu0 0.0
    %709 = vmatprep.subr.mxu0 0.0
    %710 = vmatpush1.msra.mxu0 0.0
    %711 = vmatprep.subr.mxu0 0.0
    %712 = vmatpush1.msra.mxu0 0.0
    %713 = vmatprep.subr.mxu0 0.0
    %714 = vmatpush1.msra.mxu0 0.0
    %715 = vmatprep.subr.mxu0 0.0
    %716 = vmatpush1.msra.mxu0 0.0
    %717 = vmatprep.subr.mxu0 0.0
    %718 = vmatpush1.msra.mxu0 0.0
    %719 = vmatprep.subr.mxu0 0.0
    %720 = vmatpush1.msra.mxu0 0.0
    %721 = vmatprep.subr.mxu0 0.0
    %722 = vmatpush1.msra.mxu0 0.0
    %723 = vmatprep.subr.mxu0 0.0
    %724 = vmatpush1.msra.mxu0 0.0
    %725 = vmatprep.subr.mxu0 0.0
    %726 = vmatpush1.msra.mxu0 0.0
    %727 = vmatprep.subr.mxu0 0.0
    %728 = vmatpush1.msra.mxu0 0.0
    %729 = vmatprep.subr.mxu0 0.0
    %730 = vmatpush1.msra.mxu0 0.0
    %731 = vmatprep.subr.mxu0 0.0
    %732 = vmatpush1.msra.mxu0 0.0
    %733 = vmatprep.subr.mxu0 0.0
    %734 = vmatpush1.msra.mxu0 0.0
    %735 = vmatprep.mubr.f32.mxu0 0.0
    %736 = vmatmul.mubr.f32.gmra.mrb[0].mxu0 0.0
    %v737 = vpop.f32.mrb[0].mxu0
    %v738 = vadd.f32 0.0, %v737
    %v739 = vpop.f32.mrb[0].mxu0
    %v740 = vadd.f32 0.0, %v739
    %741 = vdwg.mxu0
    %742 = vmatprep.subr.mxu0 0.0
    %743 = vmatpush1.msra.mxu0 %v625
    %744 = vmatprep.subr.mxu0 0.0
    %745 = vmatpush1.msra.mxu0 %v628
    %746 = vmatprep.subr.mxu0 0.0
    %747 = vmatpush1.msra.mxu0 %v631
    %748 = vmatprep.subr.mxu0 0.0
    %749 = vmatpush1.msra.mxu0 %v634
    %750 = vmatprep.subr.mxu0 0.0
    %751 = vmatpush1.msra.mxu0 %v637
    %752 = vmatprep.subr.mxu0 0.0
    %753 = vmatpush1.msra.mxu0 %v640
    %754 = vmatprep.subr.mxu0 0.0
    %755 = vmatpush1.msra.mxu0 %v643
    %756 = vmatprep.subr.mxu0 0.0
    %757 = vmatpush1.msra.mxu0 %v646
    %758 = vmatprep.subr.mxu0 0.0
    %759 = vmatpush1.msra.mxu0 %v649
    %760 = vmatprep.subr.mxu0 0.0
    %761 = vmatpush1.msra.mxu0 %v652
    %762 = vmatprep.subr.mxu0 0.0
    %763 = vmatpush1.msra.mxu0 %v655
    %764 = vmatprep.subr.mxu0 0.0
    %765 = vmatpush1.msra.mxu0 %v658
    %766 = vmatprep.subr.mxu0 0.0
    %767 = vmatpush1.msra.mxu0 %v661
    %768 = vmatprep.subr.mxu0 0.0
    %769 = vmatpush1.msra.mxu0 %v664
    %770 = vmatprep.subr.mxu0 0.0
    %771 = vmatpush1.msra.mxu0 %v667
    %772 = vmatprep.subr.mxu0 0.0
    %773 = vmatpush1.msra.mxu0 %v670
    %774 = vmatprep.subr.mxu0 0.0
    %775 = vmatpush1.msra.mxu0 0.0
    %776 = vmatprep.subr.mxu0 0.0
    %777 = vmatpush1.msra.mxu0 0.0
    %778 = vmatprep.subr.mxu0 0.0
    %779 = vmatpush1.msra.mxu0 0.0
    %780 = vmatprep.subr.mxu0 0.0
    %781 = vmatpush1.msra.mxu0 0.0
    %782 = vmatprep.subr.mxu0 0.0
    %783 = vmatpush1.msra.mxu0 0.0
    %784 = vmatprep.subr.mxu0 0.0
    %785 = vmatpush1.msra.mxu0 0.0
    %786 = vmatprep.subr.mxu0 0.0
    %787 = vmatpush1.msra.mxu0 0.0
    %788 = vmatprep.subr.mxu0 0.0
    %789 = vmatpush1.msra.mxu0 0.0
    %790 = vmatprep.subr.mxu0 0.0
    %791 = vmatpush1.msra.mxu0 0.0
    %792 = vmatprep.subr.mxu0 0.0
    %793 = vmatpush1.msra.mxu0 0.0
    %794 = vmatprep.subr.mxu0 0.0
    %795 = vmatpush1.msra.mxu0 0.0
    %796 = vmatprep.subr.mxu0 0.0
    %797 = vmatpush1.msra.mxu0 0.0
    %798 = vmatprep.subr.mxu0 0.0
    %799 = vmatpush1.msra.mxu0 0.0
    %800 = vmatprep.subr.mxu0 0.0
    %801 = vmatpush1.msra.mxu0 0.0
    %802 = vmatprep.subr.mxu0 0.0
    %803 = vmatpush1.msra.mxu0 0.0
    %804 = vmatprep.subr.mxu0 0.0
    %805 = vmatpush1.msra.mxu0 0.0
    %806 = vmatprep.mubr.f32.mxu0 0.0
    %807 = vmatmul.mubr.f32.gmra.mrb[0].mxu0 0.0
    %v808 = vpop.f32.mrb[0].mxu0
    %v809 = vadd.f32 0.0, %v808
    %v810 = vpop.f32.mrb[0].mxu0
    %811 = vdwg.mxu0
    %v812 = vld [vmem:[#allocation9] sm:$0xff]
    %v813 = vld [vmem:[#allocation9 + $0x8] sm:$0xff]
    %v814 = vld [vmem:[#allocation9 + $0x10] sm:$0xff]
    %v815 = vld [vmem:[#allocation9 + $0x18] sm:$0xff]
    %v816 = vld [vmem:[#allocation9 + $0x20] sm:$0xff]
    %v817 = vld [vmem:[#allocation9 + $0x28] sm:$0xff]
    %v818 = vld [vmem:[#allocation9 + $0x30] sm:$0xff]
    %v819 = vld [vmem:[#allocation9 + $0x38] sm:$0xff]
    %v820 = vld [vmem:[#allocation9 + $0x40] sm:$0xff]
    %v821 = vld [vmem:[#allocation9 + $0x48] sm:$0xff]
    %v822 = vld [vmem:[#allocation9 + $0x50] sm:$0xff]
    %v823 = vld [vmem:[#allocation9 + $0x58] sm:$0xff]
    %v824 = vld [vmem:[#allocation9 + $0x60] sm:$0xff]
    %v825 = vld [vmem:[#allocation9 + $0x68] sm:$0xff]
    %v826 = vld [vmem:[#allocation9 + $0x70] sm:$0xff]
    %v827 = vld [vmem:[#allocation9 + $0x78] sm:$0xff]
    %v828 = vld [vmem:[#allocation9 + $0x80] sm:$0xff]
    %v829 = vld [vmem:[#allocation9 + $0x88] sm:$0xff]
    %v830 = vld [vmem:[#allocation9 + $0x90] sm:$0xff]
    %v831 = vld [vmem:[#allocation9 + $0x98] sm:$0xff]
    %v832 = vld [vmem:[#allocation9 + $0xa0] sm:$0xff]
    %v833 = vld [vmem:[#allocation9 + $0xa8] sm:$0xff]
    %v834 = vld [vmem:[#allocation9 + $0xb0] sm:$0xff]
    %v835 = vld [vmem:[#allocation9 + $0xb8] sm:$0xff]
    %v836 = vld [vmem:[#allocation9 + $0xc0] sm:$0xff]
    %v837 = vld [vmem:[#allocation9 + $0xc8] sm:$0xff]
    %v838 = vld [vmem:[#allocation9 + $0xd0] sm:$0xff]
    %v839 = vld [vmem:[#allocation9 + $0xd8] sm:$0xff]
    %v840 = vld [vmem:[#allocation9 + $0xe0] sm:$0xff]
    %v841 = vld [vmem:[#allocation9 + $0xe8] sm:$0xff]
    %v842 = vld [vmem:[#allocation9 + $0xf0] sm:$0xff]
    %v843 = vld [vmem:[#allocation9 + $0xf8] sm:$0xff]
    %v844 = vld [vmem:[#allocation9 + $0x100] sm:$0xff]
    %v845 = vld [vmem:[#allocation9 + $0x108] sm:$0xff]
    %v846 = vld [vmem:[#allocation9 + $0x110] sm:$0xff]
    %v847 = vld [vmem:[#allocation9 + $0x118] sm:$0xff]
    %v848 = vld [vmem:[#allocation9 + $0x120] sm:$0xff]
    %v849 = vld [vmem:[#allocation9 + $0x128] sm:$0xff]
    %v850 = vld [vmem:[#allocation9 + $0x130] sm:$0xff]
    %v851 = vld [vmem:[#allocation9 + $0x138] sm:$0xff]
    %v852 = vld [vmem:[#allocation9 + $0x140] sm:$0xff]
    %v853 = vld [vmem:[#allocation9 + $0x148] sm:$0xff]
    %v854 = vld [vmem:[#allocation9 + $0x150] sm:$0xff]
    %v855 = vld [vmem:[#allocation9 + $0x158] sm:$0xff]
    %v856 = vld [vmem:[#allocation9 + $0x160] sm:$0xff]
    %v857 = vld [vmem:[#allocation9 + $0x168] sm:$0xff]
    %v858 = vld [vmem:[#allocation9 + $0x170] sm:$0xff]
    %v859 = vld [vmem:[#allocation9 + $0x178] sm:$0xff]
    %860 = vmatprep.subr.mxu0 %v813
    %861 = vmatpush1.msra.mxu0 %v812
    %862 = vmatprep.subr.mxu0 %v816
    %863 = vmatpush1.msra.mxu0 %v815
    %864 = vmatprep.subr.mxu0 %v819
    %865 = vmatpush1.msra.mxu0 %v818
    %866 = vmatprep.subr.mxu0 %v822
    %867 = vmatpush1.msra.mxu0 %v821
    %868 = vmatprep.subr.mxu0 %v825
    %869 = vmatpush1.msra.mxu0 %v824
    %870 = vmatprep.subr.mxu0 %v828
    %871 = vmatpush1.msra.mxu0 %v827
    %872 = vmatprep.subr.mxu0 %v831
    %873 = vmatpush1.msra.mxu0 %v830
    %874 = vmatprep.subr.mxu0 %v834
    %875 = vmatpush1.msra.mxu0 %v833
    %876 = vmatprep.subr.mxu0 %v837
    %877 = vmatpush1.msra.mxu0 %v836
    %878 = vmatprep.subr.mxu0 %v840
    %879 = vmatpush1.msra.mxu0 %v839
    %880 = vmatprep.subr.mxu0 %v843
    %881 = vmatpush1.msra.mxu0 %v842
    %882 = vmatprep.subr.mxu0 %v846
    %883 = vmatpush1.msra.mxu0 %v845
    %884 = vmatprep.subr.mxu0 %v849
    %885 = vmatpush1.msra.mxu0 %v848
    %886 = vmatprep.subr.mxu0 %v852
    %887 = vmatpush1.msra.mxu0 %v851
    %888 = vmatprep.subr.mxu0 %v855
    %889 = vmatpush1.msra.mxu0 %v854
    %890 = vmatprep.subr.mxu0 %v858
    %891 = vmatpush1.msra.mxu0 %v857
    %892 = vmatprep.subr.mxu0 0.0
    %893 = vmatpush1.msra.mxu0 0.0
    %894 = vmatprep.subr.mxu0 0.0
    %895 = vmatpush1.msra.mxu0 0.0
    %896 = vmatprep.subr.mxu0 0.0
    %897 = vmatpush1.msra.mxu0 0.0
    %898 = vmatprep.subr.mxu0 0.0
    %899 = vmatpush1.msra.mxu0 0.0
    %900 = vmatprep.subr.mxu0 0.0
    %901 = vmatpush1.msra.mxu0 0.0
    %902 = vmatprep.subr.mxu0 0.0
    %903 = vmatpush1.msra.mxu0 0.0
    %904 = vmatprep.subr.mxu0 0.0
    %905 = vmatpush1.msra.mxu0 0.0
    %906 = vmatprep.subr.mxu0 0.0
    %907 = vmatpush1.msra.mxu0 0.0
    %908 = vmatprep.subr.mxu0 0.0
    %909 = vmatpush1.msra.mxu0 0.0
    %910 = vmatprep.subr.mxu0 0.0
    %911 = vmatpush1.msra.mxu0 0.0
    %912 = vmatprep.subr.mxu0 0.0
    %913 = vmatpush1.msra.mxu0 0.0
    %914 = vmatprep.subr.mxu0 0.0
    %915 = vmatpush1.msra.mxu0 0.0
    %916 = vmatprep.subr.mxu0 0.0
    %917 = vmatpush1.msra.mxu0 0.0
    %918 = vmatprep.subr.mxu0 0.0
    %919 = vmatpush1.msra.mxu0 0.0
    %920 = vmatprep.subr.mxu0 0.0
    %921 = vmatpush1.msra.mxu0 0.0
    %922 = vmatprep.subr.mxu0 0.0
    %923 = vmatpush1.msra.mxu0 0.0
    %924 = vmatprep.mubr.f32.mxu0 0.0
    %925 = vmatmul.mubr.f32.gmra.mrb[0].mxu0 0.0
    %v926 = vpop.f32.mrb[0].mxu0
    %v927 = vadd.f32 0.0, %v926
    %v928 = vpop.f32.mrb[0].mxu0
    %v929 = vadd.f32 0.0, %v928
    %930 = vdwg.mxu0
    %931 = vmatprep.subr.mxu0 0.0
    %932 = vmatpush1.msra.mxu0 %v814
    %933 = vmatprep.subr.mxu0 0.0
    %934 = vmatpush1.msra.mxu0 %v817
    %935 = vmatprep.subr.mxu0 0.0
    %936 = vmatpush1.msra.mxu0 %v820
    %937 = vmatprep.subr.mxu0 0.0
    %938 = vmatpush1.msra.mxu0 %v823
    %939 = vmatprep.subr.mxu0 0.0
    %940 = vmatpush1.msra.mxu0 %v826
    %941 = vmatprep.subr.mxu0 0.0
    %942 = vmatpush1.msra.mxu0 %v829
    %943 = vmatprep.subr.mxu0 0.0
    %944 = vmatpush1.msra.mxu0 %v832
    %945 = vmatprep.subr.mxu0 0.0
    %946 = vmatpush1.msra.mxu0 %v835
    %947 = vmatprep.subr.mxu0 0.0
    %948 = vmatpush1.msra.mxu0 %v838
    %949 = vmatprep.subr.mxu0 0.0
    %950 = vmatpush1.msra.mxu0 %v841
    %951 = vmatprep.subr.mxu0 0.0
    %952 = vmatpush1.msra.mxu0 %v844
    %953 = vmatprep.subr.mxu0 0.0
    %954 = vmatpush1.msra.mxu0 %v847
    %955 = vmatprep.subr.mxu0 0.0
    %956 = vmatpush1.msra.mxu0 %v850
    %957 = vmatprep.subr.mxu0 0.0
    %958 = vmatpush1.msra.mxu0 %v853
    %959 = vmatprep.subr.mxu0 0.0
    %960 = vmatpush1.msra.mxu0 %v856
    %961 = vmatprep.subr.mxu0 0.0
    %962 = vmatpush1.msra.mxu0 %v859
    %963 = vmatprep.subr.mxu0 0.0
    %964 = vmatpush1.msra.mxu0 0.0
    %965 = vmatprep.subr.mxu0 0.0
    %966 = vmatpush1.msra.mxu0 0.0
    %967 = vmatprep.subr.mxu0 0.0
    %968 = vmatpush1.msra.mxu0 0.0
    %969 = vmatprep.subr.mxu0 0.0
    %970 = vmatpush1.msra.mxu0 0.0
    %971 = vmatprep.subr.mxu0 0.0
    %972 = vmatpush1.msra.mxu0 0.0
    %973 = vmatprep.subr.mxu0 0.0
    %974 = vmatpush1.msra.mxu0 0.0
    %975 = vmatprep.subr.mxu0 0.0
    %976 = vmatpush1.msra.mxu0 0.0
    %977 = vmatprep.subr.mxu0 0.0
    %978 = vmatpush1.msra.mxu0 0.0
    %979 = vmatprep.subr.mxu0 0.0
    %980 = vmatpush1.msra.mxu0 0.0
    %981 = vmatprep.subr.mxu0 0.0
    %982 = vmatpush1.msra.mxu0 0.0
    %983 = vmatprep.subr.mxu0 0.0
    %984 = vmatpush1.msra.mxu0 0.0
    %985 = vmatprep.subr.mxu0 0.0
    %986 = vmatpush1.msra.mxu0 0.0
    %987 = vmatprep.subr.mxu0 0.0
    %988 = vmatpush1.msra.mxu0 0.0
    %989 = vmatprep.subr.mxu0 0.0
    %990 = vmatpush1.msra.mxu0 0.0
    %991 = vmatprep.subr.mxu0 0.0
    %992 = vmatpush1.msra.mxu0 0.0
    %993 = vmatprep.subr.mxu0 0.0
    %994 = vmatpush1.msra.mxu0 0.0
    %995 = vmatprep.mubr.f32.mxu0 0.0
    %996 = vmatmul.mubr.f32.gmra.mrb[0].mxu0 0.0
    %v997 = vpop.f32.mrb[0].mxu0
    %v998 = vadd.f32 0.0, %v997
    %v999 = vpop.f32.mrb[0].mxu0
    %1000 = vdwg.mxu0
    %v1001 = vld [vmem:[#allocation2] sm:$0xff]
    %v1002 = vld [vmem:[#allocation2 + $0x8] sm:$0xff]
    %v1003 = vld [vmem:[#allocation2 + $0x10] sm:$0xff]
    %s1004 = scalar_lea.vmem [#allocation2], 336
    %v1005 = vld [vmem:[%s1004 + $0x18] sm:$0xff]
    %v1006 = vld [vmem:[%s1004 + $0x20] sm:$0xff]
    %v1007 = vld [vmem:[%s1004 + $0x28] sm:$0xff]
    %v1008 = vadd.f32 %v1001, %v738
    %v1009 = vxor.u32 %v1008, 2147483648
    %v1010 = vmul.f32 %v1009, 1.442695
    %v1011 = vpow.pop %v1010
    %v1012 = vadd.f32 %v1011, 1.0
    %v1013 = vrcp.pop %v1012
    %v1014 = vmul.f32 1.0, %v1013
    %v1015 = vadd.f32 %v1002, %v740
    %v1016 = vxor.u32 %v1015, 2147483648
    %v1017 = vmul.f32 %v1016, 1.442695
    %v1018 = vpow.pop %v1017
    %v1019 = vadd.f32 %v1018, 1.0
    %v1020 = vrcp.pop %v1019
    %v1021 = vmul.f32 1.0, %v1020
    %v1022 = vadd.f32 %v809, %v614
    %v1023 = vmul.f32 %v1014, %v1022
    %v1024 = vadd.f32 %v1003, %v1023
    %v1025 = vtanh.pop %v1024
    %v1026 = vsub.f32 1.0, %v1021
    %v1027 = vmul.f32 %v1026, %v1025
    %v1028 = vmul.f32 %v1021, 0.0
    %v1029 = vadd.f32 %v1027, %v1028
    %v1030 = vadd.f32 %v1005, %v927
    %v1031 = vxor.u32 %v1030, 2147483648
    %v1032 = vmul.f32 %v1031, 1.442695
    %v1033 = vpow.pop %v1032
    %v1034 = vadd.f32 %v1033, 1.0
    %v1035 = vrcp.pop %v1034
    %v1036 = vmul.f32 1.0, %v1035
    %v1037 = vadd.f32 %v1006, %v929
    %v1038 = vxor.u32 %v1037, 2147483648
    %v1039 = vmul.f32 %v1038, 1.442695
    %v1040 = vpow.pop %v1039
    %v1041 = vadd.f32 %v1040, 1.0
    %v1042 = vrcp.pop %v1041
    %v1043 = vmul.f32 1.0, %v1042
    %v1044 = vadd.f32 %v998, %v621
    %v1045 = vmul.f32 %v1036, %v1044
    %v1046 = vadd.f32 %v1007, %v1045
    %v1047 = vtanh.pop %v1046
    %v1048 = vsub.f32 1.0, %v1043
    %v1049 = vmul.f32 %v1048, %v1047
    %v1050 = vmul.f32 %v1043, 0.0
    %v1051 = vadd.f32 %v1049, %v1050
    %1052 = vst [vmem:[#allocation11] sm:$0xff] %v1029
    %s1053 = scalar_lea.vmem [#allocation11], 112
    %1054 = vst [vmem:[%s1053 + $0x8] sm:$0xff] %v1051
    %v1055 = vld [vmem:[#allocation8] sm:$0xff]
    %v1056 = vld [vmem:[#allocation8 + $0x8] sm:$0xff]
    %v1057 = vld [vmem:[#allocation8 + $0x10] sm:$0xff]
    %v1058 = vld [vmem:[#allocation8 + $0x18] sm:$0xff]
    %v1059 = vld [vmem:[#allocation8 + $0x20] sm:$0xff]
    %v1060 = vld [vmem:[#allocation8 + $0x28] sm:$0xff]
    %v1061 = vld [vmem:[#allocation8 + $0x30] sm:$0xff]
    %v1062 = vld [vmem:[#allocation8 + $0x38] sm:$0xff]
    %v1063 = vld [vmem:[#allocation8 + $0x40] sm:$0xff]
    %v1064 = vld [vmem:[#allocation8 + $0x48] sm:$0xff]
    %v1065 = vld [vmem:[#allocation8 + $0x50] sm:$0xff]
    %v1066 = vld [vmem:[#allocation8 + $0x58] sm:$0xff]
    %v1067 = vld [vmem:[#allocation8 + $0x60] sm:$0xff]
    %v1068 = vld [vmem:[#allocation8 + $0x68] sm:$0xff]
    %v1069 = vld [vmem:[#allocation8 + $0x70] sm:$0xff]
    %v1070 = vld [vmem:[#allocation8 + $0x78] sm:$0xff]
    %v1071 = vld [vmem:[#allocation8 + $0x80] sm:$0xff]
    %v1072 = vld [vmem:[#allocation8 + $0x88] sm:$0xff]
    %v1073 = vld [vmem:[#allocation8 + $0x90] sm:$0xff]
    %v1074 = vld [vmem:[#allocation8 + $0x98] sm:$0xff]
    %v1075 = vld [vmem:[#allocation8 + $0xa0] sm:$0xff]
    %v1076 = vld [vmem:[#allocation8 + $0xa8] sm:$0xff]
    %v1077 = vld [vmem:[#allocation8 + $0xb0] sm:$0xff]
    %v1078 = vld [vmem:[#allocation8 + $0xb8] sm:$0xff]
    %v1079 = vld [vmem:[#allocation8 + $0xc0] sm:$0xff]
    %v1080 = vld [vmem:[#allocation8 + $0xc8] sm:$0xff]
    %v1081 = vld [vmem:[#allocation8 + $0xd0] sm:$0xff]
    %v1082 = vld [vmem:[#allocation8 + $0xd8] sm:$0xff]
    %v1083 = vld [vmem:[#allocation8 + $0xe0] sm:$0xff]
    %v1084 = vld [vmem:[#allocation8 + $0xe8] sm:$0xff]
    %v1085 = vld [vmem:[#allocation8 + $0xf0] sm:$0xff]
    %v1086 = vld [vmem:[#allocation8 + $0xf8] sm:$0xff]
    %v1087 = vld [vmem:[#allocation8 + $0x100] sm:$0xff]
    %v1088 = vld [vmem:[#allocation8 + $0x108] sm:$0xff]
    %v1089 = vld [vmem:[#allocation8 + $0x110] sm:$0xff]
    %v1090 = vld [vmem:[#allocation8 + $0x118] sm:$0xff]
    %v1091 = vld [vmem:[#allocation8 + $0x120] sm:$0xff]
    %v1092 = vld [vmem:[#allocation8 + $0x128] sm:$0xff]
    %v1093 = vld [vmem:[#allocation8 + $0x130] sm:$0xff]
    %v1094 = vld [vmem:[#allocation8 + $0x138] sm:$0xff]
    %v1095 = vld [vmem:[#allocation8 + $0x140] sm:$0xff]
    %v1096 = vld [vmem:[#allocation8 + $0x148] sm:$0xff]
    %v1097 = vld [vmem:[#allocation8 + $0x150] sm:$0xff]
    %v1098 = vld [vmem:[#allocation8 + $0x158] sm:$0xff]
    %v1099 = vld [vmem:[#allocation8 + $0x160] sm:$0xff]
    %v1100 = vld [vmem:[#allocation8 + $0x168] sm:$0xff]
    %v1101 = vld [vmem:[#allocation8 + $0x170] sm:$0xff]
    %v1102 = vld [vmem:[#allocation8 + $0x178] sm:$0xff]
    %1103 = vmatprep.subr.mxu0 %v1056
    %1104 = vmatpush1.msra.mxu0 %v1055
    %1105 = vmatprep.subr.mxu0 %v1059
    %1106 = vmatpush1.msra.mxu0 %v1058
    %1107 = vmatprep.subr.mxu0 %v1062
    %1108 = vmatpush1.msra.mxu0 %v1061
    %1109 = vmatprep.subr.mxu0 %v1065
    %1110 = vmatpush1.msra.mxu0 %v1064
    %1111 = vmatprep.subr.mxu0 %v1068
    %1112 = vmatpush1.msra.mxu0 %v1067
    %1113 = vmatprep.subr.mxu0 %v1071
    %1114 = vmatpush1.msra.mxu0 %v1070
    %1115 = vmatprep.subr.mxu0 %v1074
    %1116 = vmatpush1.msra.mxu0 %v1073
    %1117 = vmatprep.subr.mxu0 %v1077
    %1118 = vmatpush1.msra.mxu0 %v1076
    %1119 = vmatprep.subr.mxu0 %v1080
    %1120 = vmatpush1.msra.mxu0 %v1079
    %1121 = vmatprep.subr.mxu0 %v1083
    %1122 = vmatpush1.msra.mxu0 %v1082
    %1123 = vmatprep.subr.mxu0 %v1086
    %1124 = vmatpush1.msra.mxu0 %v1085
    %1125 = vmatprep.subr.mxu0 %v1089
    %1126 = vmatpush1.msra.mxu0 %v1088
    %1127 = vmatprep.subr.mxu0 %v1092
    %1128 = vmatpush1.msra.mxu0 %v1091
    %1129 = vmatprep.subr.mxu0 %v1095
    %1130 = vmatpush1.msra.mxu0 %v1094
    %1131 = vmatprep.subr.mxu0 %v1098
    %1132 = vmatpush1.msra.mxu0 %v1097
    %1133 = vmatprep.subr.mxu0 %v1101
    %1134 = vmatpush1.msra.mxu0 %v1100
    %1135 = vmatprep.subr.mxu0 0.0
    %1136 = vmatpush1.msra.mxu0 0.0
    %1137 = vmatprep.subr.mxu0 0.0
    %1138 = vmatpush1.msra.mxu0 0.0
    %1139 = vmatprep.subr.mxu0 0.0
    %1140 = vmatpush1.msra.mxu0 0.0
    %1141 = vmatprep.subr.mxu0 0.0
    %1142 = vmatpush1.msra.mxu0 0.0
    %1143 = vmatprep.subr.mxu0 0.0
    %1144 = vmatpush1.msra.mxu0 0.0
    %1145 = vmatprep.subr.mxu0 0.0
    %1146 = vmatpush1.msra.mxu0 0.0
    %1147 = vmatprep.subr.mxu0 0.0
    %1148 = vmatpush1.msra.mxu0 0.0
    %1149 = vmatprep.subr.mxu0 0.0
    %1150 = vmatpush1.msra.mxu0 0.0
    %1151 = vmatprep.subr.mxu0 0.0
    %1152 = vmatpush1.msra.mxu0 0.0
    %1153 = vmatprep.subr.mxu0 0.0
    %1154 = vmatpush1.msra.mxu0 0.0
    %1155 = vmatprep.subr.mxu0 0.0
    %1156 = vmatpush1.msra.mxu0 0.0
    %1157 = vmatprep.subr.mxu0 0.0
    %1158 = vmatpush1.msra.mxu0 0.0
    %1159 = vmatprep.subr.mxu0 0.0
    %1160 = vmatpush1.msra.mxu0 0.0
    %1161 = vmatprep.subr.mxu0 0.0
    %1162 = vmatpush1.msra.mxu0 0.0
    %1163 = vmatprep.subr.mxu0 0.0
    %1164 = vmatpush1.msra.mxu0 0.0
    %1165 = vmatprep.subr.mxu0 0.0
    %1166 = vmatpush1.msra.mxu0 0.0
    %1167 = vmatprep.mubr.f32.mxu0 0.0
    %1168 = vmatmul.mubr.f32.gmra.mrb[0].mxu0 %v1029
    %v1169 = vpop.f32.mrb[0].mxu0
    %v1170 = vadd.f32 0.0, %v1169
    %v1171 = vpop.f32.mrb[0].mxu0
    %v1172 = vadd.f32 0.0, %v1171
    %1173 = vdwg.mxu0
    %1174 = vmatprep.subr.mxu0 0.0
    %1175 = vmatpush1.msra.mxu0 %v1057
    %1176 = vmatprep.subr.mxu0 0.0
    %1177 = vmatpush1.msra.mxu0 %v1060
    %1178 = vmatprep.subr.mxu0 0.0
    %1179 = vmatpush1.msra.mxu0 %v1063
    %1180 = vmatprep.subr.mxu0 0.0
    %1181 = vmatpush1.msra.mxu0 %v1066
    %1182 = vmatprep.subr.mxu0 0.0
    %1183 = vmatpush1.msra.mxu0 %v1069
    %1184 = vmatprep.subr.mxu0 0.0
    %1185 = vmatpush1.msra.mxu0 %v1072
    %1186 = vmatprep.subr.mxu0 0.0
    %1187 = vmatpush1.msra.mxu0 %v1075
    %1188 = vmatprep.subr.mxu0 0.0
    %1189 = vmatpush1.msra.mxu0 %v1078
    %1190 = vmatprep.subr.mxu0 0.0
    %1191 = vmatpush1.msra.mxu0 %v1081
    %1192 = vmatprep.subr.mxu0 0.0
    %1193 = vmatpush1.msra.mxu0 %v1084
    %1194 = vmatprep.subr.mxu0 0.0
    %1195 = vmatpush1.msra.mxu0 %v1087
    %1196 = vmatprep.subr.mxu0 0.0
    %1197 = vmatpush1.msra.mxu0 %v1090
    %1198 = vmatprep.subr.mxu0 0.0
    %1199 = vmatpush1.msra.mxu0 %v1093
    %1200 = vmatprep.subr.mxu0 0.0
    %1201 = vmatpush1.msra.mxu0 %v1096
    %1202 = vmatprep.subr.mxu0 0.0
    %1203 = vmatpush1.msra.mxu0 %v1099
    %1204 = vmatprep.subr.mxu0 0.0
    %1205 = vmatpush1.msra.mxu0 %v1102
    %1206 = vmatprep.subr.mxu0 0.0
    %1207 = vmatpush1.msra.mxu0 0.0
    %1208 = vmatprep.subr.mxu0 0.0
    %1209 = vmatpush1.msra.mxu0 0.0
    %1210 = vmatprep.subr.mxu0 0.0
    %1211 = vmatpush1.msra.mxu0 0.0
    %1212 = vmatprep.subr.mxu0 0.0
    %1213 = vmatpush1.msra.mxu0 0.0
    %1214 = vmatprep.subr.mxu0 0.0
    %1215 = vmatpush1.msra.mxu0 0.0
    %1216 = vmatprep.subr.mxu0 0.0
    %1217 = vmatpush1.msra.mxu0 0.0
    %1218 = vmatprep.subr.mxu0 0.0
    %1219 = vmatpush1.msra.mxu0 0.0
    %1220 = vmatprep.subr.mxu0 0.0
    %1221 = vmatpush1.msra.mxu0 0.0
    %1222 = vmatprep.subr.mxu0 0.0
    %1223 = vmatpush1.msra.mxu0 0.0
    %1224 = vmatprep.subr.mxu0 0.0
    %1225 = vmatpush1.msra.mxu0 0.0
    %1226 = vmatprep.subr.mxu0 0.0
    %1227 = vmatpush1.msra.mxu0 0.0
    %1228 = vmatprep.subr.mxu0 0.0
    %1229 = vmatpush1.msra.mxu0 0.0
    %1230 = vmatprep.subr.mxu0 0.0
    %1231 = vmatpush1.msra.mxu0 0.0
    %1232 = vmatprep.subr.mxu0 0.0
    %1233 = vmatpush1.msra.mxu0 0.0
    %1234 = vmatprep.subr.mxu0 0.0
    %1235 = vmatpush1.msra.mxu0 0.0
    %1236 = vmatprep.subr.mxu0 0.0
    %1237 = vmatpush1.msra.mxu0 0.0
    %1238 = vmatprep.mubr.f32.mxu0 0.0
    %1239 = vmatmul.mubr.f32.gmra.mrb[0].mxu0 %v1029
    %v1240 = vpop.f32.mrb[0].mxu0
    %v1241 = vadd.f32 0.0, %v1240
    %v1242 = vpop.f32.mrb[0].mxu0
    %1243 = vdwg.mxu0
    %v1244 = vld [vmem:[#allocation9] sm:$0xff]
    %v1245 = vld [vmem:[#allocation9 + $0x8] sm:$0xff]
    %v1246 = vld [vmem:[#allocation9 + $0x10] sm:$0xff]
    %v1247 = vld [vmem:[#allocation9 + $0x18] sm:$0xff]
    %v1248 = vld [vmem:[#allocation9 + $0x20] sm:$0xff]
    %v1249 = vld [vmem:[#allocation9 + $0x28] sm:$0xff]
    %v1250 = vld [vmem:[#allocation9 + $0x30] sm:$0xff]
    %v1251 = vld [vmem:[#allocation9 + $0x38] sm:$0xff]
    %v1252 = vld [vmem:[#allocation9 + $0x40] sm:$0xff]
    %v1253 = vld [vmem:[#allocation9 + $0x48] sm:$0xff]
    %v1254 = vld [vmem:[#allocation9 + $0x50] sm:$0xff]
    %v1255 = vld [vmem:[#allocation9 + $0x58] sm:$0xff]
    %v1256 = vld [vmem:[#allocation9 + $0x60] sm:$0xff]
    %v1257 = vld [vmem:[#allocation9 + $0x68] sm:$0xff]
    %v1258 = vld [vmem:[#allocation9 + $0x70] sm:$0xff]
    %v1259 = vld [vmem:[#allocation9 + $0x78] sm:$0xff]
    %v1260 = vld [vmem:[#allocation9 + $0x80] sm:$0xff]
    %v1261 = vld [vmem:[#allocation9 + $0x88] sm:$0xff]
    %v1262 = vld [vmem:[#allocation9 + $0x90] sm:$0xff]
    %v1263 = vld [vmem:[#allocation9 + $0x98] sm:$0xff]
    %v1264 = vld [vmem:[#allocation9 + $0xa0] sm:$0xff]
    %v1265 = vld [vmem:[#allocation9 + $0xa8] sm:$0xff]
    %v1266 = vld [vmem:[#allocation9 + $0xb0] sm:$0xff]
    %v1267 = vld [vmem:[#allocation9 + $0xb8] sm:$0xff]
    %v1268 = vld [vmem:[#allocation9 + $0xc0] sm:$0xff]
    %v1269 = vld [vmem:[#allocation9 + $0xc8] sm:$0xff]
    %v1270 = vld [vmem:[#allocation9 + $0xd0] sm:$0xff]
    %v1271 = vld [vmem:[#allocation9 + $0xd8] sm:$0xff]
    %v1272 = vld [vmem:[#allocation9 + $0xe0] sm:$0xff]
    %v1273 = vld [vmem:[#allocation9 + $0xe8] sm:$0xff]
    %v1274 = vld [vmem:[#allocation9 + $0xf0] sm:$0xff]
    %v1275 = vld [vmem:[#allocation9 + $0xf8] sm:$0xff]
    %v1276 = vld [vmem:[#allocation9 + $0x100] sm:$0xff]
    %v1277 = vld [vmem:[#allocation9 + $0x108] sm:$0xff]
    %v1278 = vld [vmem:[#allocation9 + $0x110] sm:$0xff]
    %v1279 = vld [vmem:[#allocation9 + $0x118] sm:$0xff]
    %v1280 = vld [vmem:[#allocation9 + $0x120] sm:$0xff]
    %v1281 = vld [vmem:[#allocation9 + $0x128] sm:$0xff]
    %v1282 = vld [vmem:[#allocation9 + $0x130] sm:$0xff]
    %v1283 = vld [vmem:[#allocation9 + $0x138] sm:$0xff]
    %v1284 = vld [vmem:[#allocation9 + $0x140] sm:$0xff]
    %v1285 = vld [vmem:[#allocation9 + $0x148] sm:$0xff]
    %v1286 = vld [vmem:[#allocation9 + $0x150] sm:$0xff]
    %v1287 = vld [vmem:[#allocation9 + $0x158] sm:$0xff]
    %v1288 = vld [vmem:[#allocation9 + $0x160] sm:$0xff]
    %v1289 = vld [vmem:[#allocation9 + $0x168] sm:$0xff]
    %v1290 = vld [vmem:[#allocation9 + $0x170] sm:$0xff]
    %v1291 = vld [vmem:[#allocation9 + $0x178] sm:$0xff]
    %1292 = vmatprep.subr.mxu0 %v1245
    %1293 = vmatpush1.msra.mxu0 %v1244
    %1294 = vmatprep.subr.mxu0 %v1248
    %1295 = vmatpush1.msra.mxu0 %v1247
    %1296 = vmatprep.subr.mxu0 %v1251
    %1297 = vmatpush1.msra.mxu0 %v1250
    %1298 = vmatprep.subr.mxu0 %v1254
    %1299 = vmatpush1.msra.mxu0 %v1253
    %1300 = vmatprep.subr.mxu0 %v1257
    %1301 = vmatpush1.msra.mxu0 %v1256
    %1302 = vmatprep.subr.mxu0 %v1260
    %1303 = vmatpush1.msra.mxu0 %v1259
    %1304 = vmatprep.subr.mxu0 %v1263
    %1305 = vmatpush1.msra.mxu0 %v1262
    %1306 = vmatprep.subr.mxu0 %v1266
    %1307 = vmatpush1.msra.mxu0 %v1265
    %1308 = vmatprep.subr.mxu0 %v1269
    %1309 = vmatpush1.msra.mxu0 %v1268
    %1310 = vmatprep.subr.mxu0 %v1272
    %1311 = vmatpush1.msra.mxu0 %v1271
    %1312 = vmatprep.subr.mxu0 %v1275
    %1313 = vmatpush1.msra.mxu0 %v1274
    %1314 = vmatprep.subr.mxu0 %v1278
    %1315 = vmatpush1.msra.mxu0 %v1277
    %1316 = vmatprep.subr.mxu0 %v1281
    %1317 = vmatpush1.msra.mxu0 %v1280
    %1318 = vmatprep.subr.mxu0 %v1284
    %1319 = vmatpush1.msra.mxu0 %v1283
    %1320 = vmatprep.subr.mxu0 %v1287
    %1321 = vmatpush1.msra.mxu0 %v1286
    %1322 = vmatprep.subr.mxu0 %v1290
    %1323 = vmatpush1.msra.mxu0 %v1289
    %1324 = vmatprep.subr.mxu0 0.0
    %1325 = vmatpush1.msra.mxu0 0.0
    %1326 = vmatprep.subr.mxu0 0.0
    %1327 = vmatpush1.msra.mxu0 0.0
    %1328 = vmatprep.subr.mxu0 0.0
    %1329 = vmatpush1.msra.mxu0 0.0
    %1330 = vmatprep.subr.mxu0 0.0
    %1331 = vmatpush1.msra.mxu0 0.0
    %1332 = vmatprep.subr.mxu0 0.0
    %1333 = vmatpush1.msra.mxu0 0.0
    %1334 = vmatprep.subr.mxu0 0.0
    %1335 = vmatpush1.msra.mxu0 0.0
    %1336 = vmatprep.subr.mxu0 0.0
    %1337 = vmatpush1.msra.mxu0 0.0
    %1338 = vmatprep.subr.mxu0 0.0
    %1339 = vmatpush1.msra.mxu0 0.0
    %1340 = vmatprep.subr.mxu0 0.0
    %1341 = vmatpush1.msra.mxu0 0.0
    %1342 = vmatprep.subr.mxu0 0.0
    %1343 = vmatpush1.msra.mxu0 0.0
    %1344 = vmatprep.subr.mxu0 0.0
    %1345 = vmatpush1.msra.mxu0 0.0
    %1346 = vmatprep.subr.mxu0 0.0
    %1347 = vmatpush1.msra.mxu0 0.0
    %1348 = vmatprep.subr.mxu0 0.0
    %1349 = vmatpush1.msra.mxu0 0.0
    %1350 = vmatprep.subr.mxu0 0.0
    %1351 = vmatpush1.msra.mxu0 0.0
    %1352 = vmatprep.subr.mxu0 0.0
    %1353 = vmatpush1.msra.mxu0 0.0
    %1354 = vmatprep.subr.mxu0 0.0
    %1355 = vmatpush1.msra.mxu0 0.0
    %1356 = vmatprep.mubr.f32.mxu0 0.0
    %1357 = vmatmul.mubr.f32.gmra.mrb[0].mxu0 %v1051
    %v1358 = vpop.f32.mrb[0].mxu0
    %v1359 = vadd.f32 0.0, %v1358
    %v1360 = vpop.f32.mrb[0].mxu0
    %v1361 = vadd.f32 0.0, %v1360
    %1362 = vdwg.mxu0
    %1363 = vmatprep.subr.mxu0 0.0
    %1364 = vmatpush1.msra.mxu0 %v1246
    %1365 = vmatprep.subr.mxu0 0.0
    %1366 = vmatpush1.msra.mxu0 %v1249
    %1367 = vmatprep.subr.mxu0 0.0
    %1368 = vmatpush1.msra.mxu0 %v1252
    %1369 = vmatprep.subr.mxu0 0.0
    %1370 = vmatpush1.msra.mxu0 %v1255
    %1371 = vmatprep.subr.mxu0 0.0
    %1372 = vmatpush1.msra.mxu0 %v1258
    %1373 = vmatprep.subr.mxu0 0.0
    %1374 = vmatpush1.msra.mxu0 %v1261
    %1375 = vmatprep.subr.mxu0 0.0
    %1376 = vmatpush1.msra.mxu0 %v1264
    %1377 = vmatprep.subr.mxu0 0.0
    %1378 = vmatpush1.msra.mxu0 %v1267
    %1379 = vmatprep.subr.mxu0 0.0
    %1380 = vmatpush1.msra.mxu0 %v1270
    %1381 = vmatprep.subr.mxu0 0.0
    %1382 = vmatpush1.msra.mxu0 %v1273
    %1383 = vmatprep.subr.mxu0 0.0
    %1384 = vmatpush1.msra.mxu0 %v1276
    %1385 = vmatprep.subr.mxu0 0.0
    %1386 = vmatpush1.msra.mxu0 %v1279
    %1387 = vmatprep.subr.mxu0 0.0
    %1388 = vmatpush1.msra.mxu0 %v1282
    %1389 = vmatprep.subr.mxu0 0.0
    %1390 = vmatpush1.msra.mxu0 %v1285
    %1391 = vmatprep.subr.mxu0 0.0
    %1392 = vmatpush1.msra.mxu0 %v1288
    %1393 = vmatprep.subr.mxu0 0.0
    %1394 = vmatpush1.msra.mxu0 %v1291
    %1395 = vmatprep.subr.mxu0 0.0
    %1396 = vmatpush1.msra.mxu0 0.0
    %1397 = vmatprep.subr.mxu0 0.0
    %1398 = vmatpush1.msra.mxu0 0.0
    %1399 = vmatprep.subr.mxu0 0.0
    %1400 = vmatpush1.msra.mxu0 0.0
    %1401 = vmatprep.subr.mxu0 0.0
    %1402 = vmatpush1.msra.mxu0 0.0
    %1403 = vmatprep.subr.mxu0 0.0
    %1404 = vmatpush1.msra.mxu0 0.0
    %1405 = vmatprep.subr.mxu0 0.0
    %1406 = vmatpush1.msra.mxu0 0.0
    %1407 = vmatprep.subr.mxu0 0.0
    %1408 = vmatpush1.msra.mxu0 0.0
    %1409 = vmatprep.subr.mxu0 0.0
    %1410 = vmatpush1.msra.mxu0 0.0
    %1411 = vmatprep.subr.mxu0 0.0
    %1412 = vmatpush1.msra.mxu0 0.0
    %1413 = vmatprep.subr.mxu0 0.0
    %1414 = vmatpush1.msra.mxu0 0.0
    %1415 = vmatprep.subr.mxu0 0.0
    %1416 = vmatpush1.msra.mxu0 0.0
    %1417 = vmatprep.subr.mxu0 0.0
    %1418 = vmatpush1.msra.mxu0 0.0
    %1419 = vmatprep.subr.mxu0 0.0
    %1420 = vmatpush1.msra.mxu0 0.0
    %1421 = vmatprep.subr.mxu0 0.0
    %1422 = vmatpush1.msra.mxu0 0.0
    %1423 = vmatprep.subr.mxu0 0.0
    %1424 = vmatpush1.msra.mxu0 0.0
    %1425 = vmatprep.subr.mxu0 0.0
    %1426 = vmatpush1.msra.mxu0 0.0
    %1427 = vmatprep.mubr.f32.mxu0 0.0
    %1428 = vmatmul.mubr.f32.gmra.mrb[0].mxu0 %v1051
    %v1429 = vpop.f32.mrb[0].mxu0
    %v1430 = vadd.f32 0.0, %v1429
    %v1431 = vpop.f32.mrb[0].mxu0
    %1432 = vdwg.mxu0
    %s1433 = scalar_lea.vmem [#allocation2], 48
    %v1434 = vld [vmem:[%s1433] sm:$0xff]
    %v1435 = vld [vmem:[%s1433 + $0x8] sm:$0xff]
    %v1436 = vld [vmem:[%s1433 + $0x10] sm:$0xff]
    %s1437 = scalar_lea.vmem [#allocation2], 288
    %v1438 = vld [vmem:[%s1437 + $0x18] sm:$0xff]
    %v1439 = vld [vmem:[%s1437 + $0x20] sm:$0xff]
    %v1440 = vld [vmem:[%s1437 + $0x28] sm:$0xff]
    %v1441 = vadd.f32 %v1434, %v1170
    %v1442 = vxor.u32 %v1441, 2147483648
    %v1443 = vmul.f32 %v1442, 1.442695
    %v1444 = vpow.pop %v1443
    %v1445 = vadd.f32 %v1444, 1.0
    %v1446 = vrcp.pop %v1445
    %v1447 = vmul.f32 1.0, %v1446
    %v1448 = vadd.f32 %v1435, %v1172
    %v1449 = vxor.u32 %v1448, 2147483648
    %v1450 = vmul.f32 %v1449, 1.442695
    %v1451 = vpow.pop %v1450
    %v1452 = vadd.f32 %v1451, 1.0
    %v1453 = vrcp.pop %v1452
    %v1454 = vmul.f32 1.0, %v1453
    %v1455 = vadd.f32 %v1241, %v614
    %v1456 = vmul.f32 %v1447, %v1455
    %v1457 = vadd.f32 %v1436, %v1456
    %v1458 = vtanh.pop %v1457
    %v1459 = vsub.f32 1.0, %v1454
    %v1460 = vmul.f32 %v1459, %v1458
    %v1461 = vmul.f32 %v1454, %v1029
    %v1462 = vadd.f32 %v1460, %v1461
    %v1463 = vadd.f32 %v1438, %v1359
    %v1464 = vxor.u32 %v1463, 2147483648
    %v1465 = vmul.f32 %v1464, 1.442695
    %v1466 = vpow.pop %v1465
    %v1467 = vadd.f32 %v1466, 1.0
    %v1468 = vrcp.pop %v1467
    %v1469 = vmul.f32 1.0, %v1468
    %v1470 = vadd.f32 %v1439, %v1361
    %v1471 = vxor.u32 %v1470, 2147483648
    %v1472 = vmul.f32 %v1471, 1.442695
    %v1473 = vpow.pop %v1472
    %v1474 = vadd.f32 %v1473, 1.0
    %v1475 = vrcp.pop %v1474
    %v1476 = vmul.f32 1.0, %v1475
    %v1477 = vadd.f32 %v1430, %v621
    %v1478 = vmul.f32 %v1469, %v1477
    %v1479 = vadd.f32 %v1440, %v1478
    %v1480 = vtanh.pop %v1479
    %v1481 = vsub.f32 1.0, %v1476
    %v1482 = vmul.f32 %v1481, %v1480
    %v1483 = vmul.f32 %v1476, %v1051
    %v1484 = vadd.f32 %v1482, %v1483
    %s1485 = scalar_lea.vmem [#allocation11], 16
    %1486 = vst [vmem:[%s1485] sm:$0xff] %v1462
    %s1487 = scalar_lea.vmem [#allocation11], 96
    %1488 = vst [vmem:[%s1487 + $0x8] sm:$0xff] %v1484
    %v1489 = vld [vmem:[#allocation8] sm:$0xff]
    %v1490 = vld [vmem:[#allocation8 + $0x8] sm:$0xff]
    %v1491 = vld [vmem:[#allocation8 + $0x10] sm:$0xff]
    %v1492 = vld [vmem:[#allocation8 + $0x18] sm:$0xff]
    %v1493 = vld [vmem:[#allocation8 + $0x20] sm:$0xff]
    %v1494 = vld [vmem:[#allocation8 + $0x28] sm:$0xff]
    %v1495 = vld [vmem:[#allocation8 + $0x30] sm:$0xff]
    %v1496 = vld [vmem:[#allocation8 + $0x38] sm:$0xff]
    %v1497 = vld [vmem:[#allocation8 + $0x40] sm:$0xff]
    %v1498 = vld [vmem:[#allocation8 + $0x48] sm:$0xff]
    %v1499 = vld [vmem:[#allocation8 + $0x50] sm:$0xff]
    %v1500 = vld [vmem:[#allocation8 + $0x58] sm:$0xff]
    %v1501 = vld [vmem:[#allocation8 + $0x60] sm:$0xff]
    %v1502 = vld [vmem:[#allocation8 + $0x68] sm:$0xff]
    %v1503 = vld [vmem:[#allocation8 + $0x70] sm:$0xff]
    %v1504 = vld [vmem:[#allocation8 + $0x78] sm:$0xff]
    %v1505 = vld [vmem:[#allocation8 + $0x80] sm:$0xff]
    %v1506 = vld [vmem:[#allocation8 + $0x88] sm:$0xff]
    %v1507 = vld [vmem:[#allocation8 + $0x90] sm:$0xff]
    %v1508 = vld [vmem:[#allocation8 + $0x98] sm:$0xff]
    %v1509 = vld [vmem:[#allocation8 + $0xa0] sm:$0xff]
    %v1510 = vld [vmem:[#allocation8 + $0xa8] sm:$0xff]
    %v1511 = vld [vmem:[#allocation8 + $0xb0] sm:$0xff]
    %v1512 = vld [vmem:[#allocation8 + $0xb8] sm:$0xff]
    %v1513 = vld [vmem:[#allocation8 + $0xc0] sm:$0xff]
    %v1514 = vld [vmem:[#allocation8 + $0xc8] sm:$0xff]
    %v1515 = vld [vmem:[#allocation8 + $0xd0] sm:$0xff]
    %v1516 = vld [vmem:[#allocation8 + $0xd8] sm:$0xff]
    %v1517 = vld [vmem:[#allocation8 + $0xe0] sm:$0xff]
    %v1518 = vld [vmem:[#allocation8 + $0xe8] sm:$0xff]
    %v1519 = vld [vmem:[#allocation8 + $0xf0] sm:$0xff]
    %v1520 = vld [vmem:[#allocation8 + $0xf8] sm:$0xff]
    %v1521 = vld [vmem:[#allocation8 + $0x100] sm:$0xff]
    %v1522 = vld [vmem:[#allocation8 + $0x108] sm:$0xff]
    %v1523 = vld [vmem:[#allocation8 + $0x110] sm:$0xff]
    %v1524 = vld [vmem:[#allocation8 + $0x118] sm:$0xff]
    %v1525 = vld [vmem:[#allocation8 + $0x120] sm:$0xff]
    %v1526 = vld [vmem:[#allocation8 + $0x128] sm:$0xff]
    %v1527 = vld [vmem:[#allocation8 + $0x130] sm:$0xff]
    %v1528 = vld [vmem:[#allocation8 + $0x138] sm:$0xff]
    %v1529 = vld [vmem:[#allocation8 + $0x140] sm:$0xff]
    %v1530 = vld [vmem:[#allocation8 + $0x148] sm:$0xff]
    %v1531 = vld [vmem:[#allocation8 + $0x150] sm:$0xff]
    %v1532 = vld [vmem:[#allocation8 + $0x158] sm:$0xff]
    %v1533 = vld [vmem:[#allocation8 + $0x160] sm:$0xff]
    %v1534 = vld [vmem:[#allocation8 + $0x168] sm:$0xff]
    %v1535 = vld [vmem:[#allocation8 + $0x170] sm:$0xff]
    %v1536 = vld [vmem:[#allocation8 + $0x178] sm:$0xff]
    %1537 = vmatprep.subr.mxu0 %v1490
    %1538 = vmatpush1.msra.mxu0 %v1489
    %1539 = vmatprep.subr.mxu0 %v1493
    %1540 = vmatpush1.msra.mxu0 %v1492
    %1541 = vmatprep.subr.mxu0 %v1496
    %1542 = vmatpush1.msra.mxu0 %v1495
    %1543 = vmatprep.subr.mxu0 %v1499
    %1544 = vmatpush1.msra.mxu0 %v1498
    %1545 = vmatprep.subr.mxu0 %v1502
    %1546 = vmatpush1.msra.mxu0 %v1501
    %1547 = vmatprep.subr.mxu0 %v1505
    %1548 = vmatpush1.msra.mxu0 %v1504
    %1549 = vmatprep.subr.mxu0 %v1508
    %1550 = vmatpush1.msra.mxu0 %v1507
    %1551 = vmatprep.subr.mxu0 %v1511
    %1552 = vmatpush1.msra.mxu0 %v1510
    %1553 = vmatprep.subr.mxu0 %v1514
    %1554 = vmatpush1.msra.mxu0 %v1513
    %1555 = vmatprep.subr.mxu0 %v1517
    %1556 = vmatpush1.msra.mxu0 %v1516
    %1557 = vmatprep.subr.mxu0 %v1520
    %1558 = vmatpush1.msra.mxu0 %v1519
    %1559 = vmatprep.subr.mxu0 %v1523
    %1560 = vmatpush1.msra.mxu0 %v1522
    %1561 = vmatprep.subr.mxu0 %v1526
    %1562 = vmatpush1.msra.mxu0 %v1525
    %1563 = vmatprep.subr.mxu0 %v1529
    %1564 = vmatpush1.msra.mxu0 %v1528
    %1565 = vmatprep.subr.mxu0 %v1532
    %1566 = vmatpush1.msra.mxu0 %v1531
    %1567 = vmatprep.subr.mxu0 %v1535
    %1568 = vmatpush1.msra.mxu0 %v1534
    %1569 = vmatprep.subr.mxu0 0.0
    %1570 = vmatpush1.msra.mxu0 0.0
    %1571 = vmatprep.subr.mxu0 0.0
    %1572 = vmatpush1.msra.mxu0 0.0
    %1573 = vmatprep.subr.mxu0 0.0
    %1574 = vmatpush1.msra.mxu0 0.0
    %1575 = vmatprep.subr.mxu0 0.0
    %1576 = vmatpush1.msra.mxu0 0.0
    %1577 = vmatprep.subr.mxu0 0.0
    %1578 = vmatpush1.msra.mxu0 0.0
    %1579 = vmatprep.subr.mxu0 0.0
    %1580 = vmatpush1.msra.mxu0 0.0
    %1581 = vmatprep.subr.mxu0 0.0
    %1582 = vmatpush1.msra.mxu0 0.0
    %1583 = vmatprep.subr.mxu0 0.0
    %1584 = vmatpush1.msra.mxu0 0.0
    %1585 = vmatprep.subr.mxu0 0.0
    %1586 = vmatpush1.msra.mxu0 0.0
    %1587 = vmatprep.subr.mxu0 0.0
    %1588 = vmatpush1.msra.mxu0 0.0
    %1589 = vmatprep.subr.mxu0 0.0
    %1590 = vmatpush1.msra.mxu0 0.0
    %1591 = vmatprep.subr.mxu0 0.0
    %1592 = vmatpush1.msra.mxu0 0.0
    %1593 = vmatprep.subr.mxu0 0.0
    %1594 = vmatpush1.msra.mxu0 0.0
    %1595 = vmatprep.subr.mxu0 0.0
    %1596 = vmatpush1.msra.mxu0 0.0
    %1597 = vmatprep.subr.mxu0 0.0
    %1598 = vmatpush1.msra.mxu0 0.0
    %1599 = vmatprep.subr.mxu0 0.0
    %1600 = vmatpush1.msra.mxu0 0.0
    %1601 = vmatprep.mubr.f32.mxu0 0.0
    %1602 = vmatmul.mubr.f32.gmra.mrb[0].mxu0 %v1462
    %v1603 = vpop.f32.mrb[0].mxu0
    %v1604 = vadd.f32 0.0, %v1603
    %v1605 = vpop.f32.mrb[0].mxu0
    %v1606 = vadd.f32 0.0, %v1605
    %1607 = vdwg.mxu0
    %1608 = vmatprep.subr.mxu0 0.0
    %1609 = vmatpush1.msra.mxu0 %v1491
    %1610 = vmatprep.subr.mxu0 0.0
    %1611 = vmatpush1.msra.mxu0 %v1494
    %1612 = vmatprep.subr.mxu0 0.0
    %1613 = vmatpush1.msra.mxu0 %v1497
    %1614 = vmatprep.subr.mxu0 0.0
    %1615 = vmatpush1.msra.mxu0 %v1500
    %1616 = vmatprep.subr.mxu0 0.0
    %1617 = vmatpush1.msra.mxu0 %v1503
    %1618 = vmatprep.subr.mxu0 0.0
    %1619 = vmatpush1.msra.mxu0 %v1506
    %1620 = vmatprep.subr.mxu0 0.0
    %1621 = vmatpush1.msra.mxu0 %v1509
    %1622 = vmatprep.subr.mxu0 0.0
    %1623 = vmatpush1.msra.mxu0 %v1512
    %1624 = vmatprep.subr.mxu0 0.0
    %1625 = vmatpush1.msra.mxu0 %v1515
    %1626 = vmatprep.subr.mxu0 0.0
    %1627 = vmatpush1.msra.mxu0 %v1518
    %1628 = vmatprep.subr.mxu0 0.0
    %1629 = vmatpush1.msra.mxu0 %v1521
    %1630 = vmatprep.subr.mxu0 0.0
    %1631 = vmatpush1.msra.mxu0 %v1524
    %1632 = vmatprep.subr.mxu0 0.0
    %1633 = vmatpush1.msra.mxu0 %v1527
    %1634 = vmatprep.subr.mxu0 0.0
    %1635 = vmatpush1.msra.mxu0 %v1530
    %1636 = vmatprep.subr.mxu0 0.0
    %1637 = vmatpush1.msra.mxu0 %v1533
    %1638 = vmatprep.subr.mxu0 0.0
    %1639 = vmatpush1.msra.mxu0 %v1536
    %1640 = vmatprep.subr.mxu0 0.0
    %1641 = vmatpush1.msra.mxu0 0.0
    %1642 = vmatprep.subr.mxu0 0.0
    %1643 = vmatpush1.msra.mxu0 0.0
    %1644 = vmatprep.subr.mxu0 0.0
    %1645 = vmatpush1.msra.mxu0 0.0
    %1646 = vmatprep.subr.mxu0 0.0
    %1647 = vmatpush1.msra.mxu0 0.0
    %1648 = vmatprep.subr.mxu0 0.0
    %1649 = vmatpush1.msra.mxu0 0.0
    %1650 = vmatprep.subr.mxu0 0.0
    %1651 = vmatpush1.msra.mxu0 0.0
    %1652 = vmatprep.subr.mxu0 0.0
    %1653 = vmatpush1.msra.mxu0 0.0
    %1654 = vmatprep.subr.mxu0 0.0
    %1655 = vmatpush1.msra.mxu0 0.0
    %1656 = vmatprep.subr.mxu0 0.0
    %1657 = vmatpush1.msra.mxu0 0.0
    %1658 = vmatprep.subr.mxu0 0.0
    %1659 = vmatpush1.msra.mxu0 0.0
    %1660 = vmatprep.subr.mxu0 0.0
    %1661 = vmatpush1.msra.mxu0 0.0
    %1662 = vmatprep.subr.mxu0 0.0
    %1663 = vmatpush1.msra.mxu0 0.0
    %1664 = vmatprep.subr.mxu0 0.0
    %1665 = vmatpush1.msra.mxu0 0.0
    %1666 = vmatprep.subr.mxu0 0.0
    %1667 = vmatpush1.msra.mxu0 0.0
    %1668 = vmatprep.subr.mxu0 0.0
    %1669 = vmatpush1.msra.mxu0 0.0
    %1670 = vmatprep.subr.mxu0 0.0
    %1671 = vmatpush1.msra.mxu0 0.0
    %1672 = vmatprep.mubr.f32.mxu0 0.0
    %1673 = vmatmul.mubr.f32.gmra.mrb[0].mxu0 %v1462
    %v1674 = vpop.f32.mrb[0].mxu0
    %v1675 = vadd.f32 0.0, %v1674
    %v1676 = vpop.f32.mrb[0].mxu0
    %1677 = vdwg.mxu0
    %v1678 = vld [vmem:[#allocation9] sm:$0xff]
    %v1679 = vld [vmem:[#allocation9 + $0x8] sm:$0xff]
    %v1680 = vld [vmem:[#allocation9 + $0x10] sm:$0xff]
    %v1681 = vld [vmem:[#allocation9 + $0x18] sm:$0xff]
    %v1682 = vld [vmem:[#allocation9 + $0x20] sm:$0xff]
    %v1683 = vld [vmem:[#allocation9 + $0x28] sm:$0xff]
    %v1684 = vld [vmem:[#allocation9 + $0x30] sm:$0xff]
    %v1685 = vld [vmem:[#allocation9 + $0x38] sm:$0xff]
    %v1686 = vld [vmem:[#allocation9 + $0x40] sm:$0xff]
    %v1687 = vld [vmem:[#allocation9 + $0x48] sm:$0xff]
    %v1688 = vld [vmem:[#allocation9 + $0x50] sm:$0xff]
    %v1689 = vld [vmem:[#allocation9 + $0x58] sm:$0xff]
    %v1690 = vld [vmem:[#allocation9 + $0x60] sm:$0xff]
    %v1691 = vld [vmem:[#allocation9 + $0x68] sm:$0xff]
    %v1692 = vld [vmem:[#allocation9 + $0x70] sm:$0xff]
    %v1693 = vld [vmem:[#allocation9 + $0x78] sm:$0xff]
    %v1694 = vld [vmem:[#allocation9 + $0x80] sm:$0xff]
    %v1695 = vld [vmem:[#allocation9 + $0x88] sm:$0xff]
    %v1696 = vld [vmem:[#allocation9 + $0x90] sm:$0xff]
    %v1697 = vld [vmem:[#allocation9 + $0x98] sm:$0xff]
    %v1698 = vld [vmem:[#allocation9 + $0xa0] sm:$0xff]
    %v1699 = vld [vmem:[#allocation9 + $0xa8] sm:$0xff]
    %v1700 = vld [vmem:[#allocation9 + $0xb0] sm:$0xff]
    %v1701 = vld [vmem:[#allocation9 + $0xb8] sm:$0xff]
    %v1702 = vld [vmem:[#allocation9 + $0xc0] sm:$0xff]
    %v1703 = vld [vmem:[#allocation9 + $0xc8] sm:$0xff]
    %v1704 = vld [vmem:[#allocation9 + $0xd0] sm:$0xff]
    %v1705 = vld [vmem:[#allocation9 + $0xd8] sm:$0xff]
    %v1706 = vld [vmem:[#allocation9 + $0xe0] sm:$0xff]
    %v1707 = vld [vmem:[#allocation9 + $0xe8] sm:$0xff]
    %v1708 = vld [vmem:[#allocation9 + $0xf0] sm:$0xff]
    %v1709 = vld [vmem:[#allocation9 + $0xf8] sm:$0xff]
    %v1710 = vld [vmem:[#allocation9 + $0x100] sm:$0xff]
    %v1711 = vld [vmem:[#allocation9 + $0x108] sm:$0xff]
    %v1712 = vld [vmem:[#allocation9 + $0x110] sm:$0xff]
    %v1713 = vld [vmem:[#allocation9 + $0x118] sm:$0xff]
    %v1714 = vld [vmem:[#allocation9 + $0x120] sm:$0xff]
    %v1715 = vld [vmem:[#allocation9 + $0x128] sm:$0xff]
    %v1716 = vld [vmem:[#allocation9 + $0x130] sm:$0xff]
    %v1717 = vld [vmem:[#allocation9 + $0x138] sm:$0xff]
    %v1718 = vld [vmem:[#allocation9 + $0x140] sm:$0xff]
    %v1719 = vld [vmem:[#allocation9 + $0x148] sm:$0xff]
    %v1720 = vld [vmem:[#allocation9 + $0x150] sm:$0xff]
    %v1721 = vld [vmem:[#allocation9 + $0x158] sm:$0xff]
    %v1722 = vld [vmem:[#allocation9 + $0x160] sm:$0xff]
    %v1723 = vld [vmem:[#allocation9 + $0x168] sm:$0xff]
    %v1724 = vld [vmem:[#allocation9 + $0x170] sm:$0xff]
    %v1725 = vld [vmem:[#allocation9 + $0x178] sm:$0xff]
    %1726 = vmatprep.subr.mxu0 %v1679
    %1727 = vmatpush1.msra.mxu0 %v1678
    %1728 = vmatprep.subr.mxu0 %v1682
    %1729 = vmatpush1.msra.mxu0 %v1681
    %1730 = vmatprep.subr.mxu0 %v1685
    %1731 = vmatpush1.msra.mxu0 %v1684
    %1732 = vmatprep.subr.mxu0 %v1688
    %1733 = vmatpush1.msra.mxu0 %v1687
    %1734 = vmatprep.subr.mxu0 %v1691
    %1735 = vmatpush1.msra.mxu0 %v1690
    %1736 = vmatprep.subr.mxu0 %v1694
    %1737 = vmatpush1.msra.mxu0 %v1693
    %1738 = vmatprep.subr.mxu0 %v1697
    %1739 = vmatpush1.msra.mxu0 %v1696
    %1740 = vmatprep.subr.mxu0 %v1700
    %1741 = vmatpush1.msra.mxu0 %v1699
    %1742 = vmatprep.subr.mxu0 %v1703
    %1743 = vmatpush1.msra.mxu0 %v1702
    %1744 = vmatprep.subr.mxu0 %v1706
    %1745 = vmatpush1.msra.mxu0 %v1705
    %1746 = vmatprep.subr.mxu0 %v1709
    %1747 = vmatpush1.msra.mxu0 %v1708
    %1748 = vmatprep.subr.mxu0 %v1712
    %1749 = vmatpush1.msra.mxu0 %v1711
    %1750 = vmatprep.subr.mxu0 %v1715
    %1751 = vmatpush1.msra.mxu0 %v1714
    %1752 = vmatprep.subr.mxu0 %v1718
    %1753 = vmatpush1.msra.mxu0 %v1717
    %1754 = vmatprep.subr.mxu0 %v1721
    %1755 = vmatpush1.msra.mxu0 %v1720
    %1756 = vmatprep.subr.mxu0 %v1724
    %1757 = vmatpush1.msra.mxu0 %v1723
    %1758 = vmatprep.subr.mxu0 0.0
    %1759 = vmatpush1.msra.mxu0 0.0
    %1760 = vmatprep.subr.mxu0 0.0
    %1761 = vmatpush1.msra.mxu0 0.0
    %1762 = vmatprep.subr.mxu0 0.0
    %1763 = vmatpush1.msra.mxu0 0.0
    %1764 = vmatprep.subr.mxu0 0.0
    %1765 = vmatpush1.msra.mxu0 0.0
    %1766 = vmatprep.subr.mxu0 0.0
    %1767 = vmatpush1.msra.mxu0 0.0
    %1768 = vmatprep.subr.mxu0 0.0
    %1769 = vmatpush1.msra.mxu0 0.0
    %1770 = vmatprep.subr.mxu0 0.0
    %1771 = vmatpush1.msra.mxu0 0.0
    %1772 = vmatprep.subr.mxu0 0.0
    %1773 = vmatpush1.msra.mxu0 0.0
    %1774 = vmatprep.subr.mxu0 0.0
    %1775 = vmatpush1.msra.mxu0 0.0
    %1776 = vmatprep.subr.mxu0 0.0
    %1777 = vmatpush1.msra.mxu0 0.0
    %1778 = vmatprep.subr.mxu0 0.0
    %1779 = vmatpush1.msra.mxu0 0.0
    %1780 = vmatprep.subr.mxu0 0.0
    %1781 = vmatpush1.msra.mxu0 0.0
    %1782 = vmatprep.subr.mxu0 0.0
    %1783 = vmatpush1.msra.mxu0 0.0
    %1784 = vmatprep.subr.mxu0 0.0
    %1785 = vmatpush1.msra.mxu0 0.0
    %1786 = vmatprep.subr.mxu0 0.0
    %1787 = vmatpush1.msra.mxu0 0.0
    %1788 = vmatprep.subr.mxu0 0.0
    %1789 = vmatpush1.msra.mxu0 0.0
    %1790 = vmatprep.mubr.f32.mxu0 0.0
    %1791 = vmatmul.mubr.f32.gmra.mrb[0].mxu0 %v1484
    %v1792 = vpop.f32.mrb[0].mxu0
    %v1793 = vadd.f32 0.0, %v1792
    %v1794 = vpop.f32.mrb[0].mxu0
    %v1795 = vadd.f32 0.0, %v1794
    %1796 = vdwg.mxu0
    %1797 = vmatprep.subr.mxu0 0.0
    %1798 = vmatpush1.msra.mxu0 %v1680
    %1799 = vmatprep.subr.mxu0 0.0
    %1800 = vmatpush1.msra.mxu0 %v1683
    %1801 = vmatprep.subr.mxu0 0.0
    %1802 = vmatpush1.msra.mxu0 %v1686
    %1803 = vmatprep.subr.mxu0 0.0
    %1804 = vmatpush1.msra.mxu0 %v1689
    %1805 = vmatprep.subr.mxu0 0.0
    %1806 = vmatpush1.msra.mxu0 %v1692
    %1807 = vmatprep.subr.mxu0 0.0
    %1808 = vmatpush1.msra.mxu0 %v1695
    %1809 = vmatprep.subr.mxu0 0.0
    %1810 = vmatpush1.msra.mxu0 %v1698
    %1811 = vmatprep.subr.mxu0 0.0
    %1812 = vmatpush1.msra.mxu0 %v1701
    %1813 = vmatprep.subr.mxu0 0.0
    %1814 = vmatpush1.msra.mxu0 %v1704
    %1815 = vmatprep.subr.mxu0 0.0
    %1816 = vmatpush1.msra.mxu0 %v1707
    %1817 = vmatprep.subr.mxu0 0.0
    %1818 = vmatpush1.msra.mxu0 %v1710
    %1819 = vmatprep.subr.mxu0 0.0
    %1820 = vmatpush1.msra.mxu0 %v1713
    %1821 = vmatprep.subr.mxu0 0.0
    %1822 = vmatpush1.msra.mxu0 %v1716
    %1823 = vmatprep.subr.mxu0 0.0
    %1824 = vmatpush1.msra.mxu0 %v1719
    %1825 = vmatprep.subr.mxu0 0.0
    %1826 = vmatpush1.msra.mxu0 %v1722
    %1827 = vmatprep.subr.mxu0 0.0
    %1828 = vmatpush1.msra.mxu0 %v1725
    %1829 = vmatprep.subr.mxu0 0.0
    %1830 = vmatpush1.msra.mxu0 0.0
    %1831 = vmatprep.subr.mxu0 0.0
    %1832 = vmatpush1.msra.mxu0 0.0
    %1833 = vmatprep.subr.mxu0 0.0
    %1834 = vmatpush1.msra.mxu0 0.0
    %1835 = vmatprep.subr.mxu0 0.0
    %1836 = vmatpush1.msra.mxu0 0.0
    %1837 = vmatprep.subr.mxu0 0.0
    %1838 = vmatpush1.msra.mxu0 0.0
    %1839 = vmatprep.subr.mxu0 0.0
    %1840 = vmatpush1.msra.mxu0 0.0
    %1841 = vmatprep.subr.mxu0 0.0
    %1842 = vmatpush1.msra.mxu0 0.0
    %1843 = vmatprep.subr.mxu0 0.0
    %1844 = vmatpush1.msra.mxu0 0.0
    %1845 = vmatprep.subr.mxu0 0.0
    %1846 = vmatpush1.msra.mxu0 0.0
    %1847 = vmatprep.subr.mxu0 0.0
    %1848 = vmatpush1.msra.mxu0 0.0
    %1849 = vmatprep.subr.mxu0 0.0
    %1850 = vmatpush1.msra.mxu0 0.0
    %1851 = vmatprep.subr.mxu0 0.0
    %1852 = vmatpush1.msra.mxu0 0.0
    %1853 = vmatprep.subr.mxu0 0.0
    %1854 = vmatpush1.msra.mxu0 0.0
    %1855 = vmatprep.subr.mxu0 0.0
    %1856 = vmatpush1.msra.mxu0 0.0
    %1857 = vmatprep.subr.mxu0 0.0
    %1858 = vmatpush1.msra.mxu0 0.0
    %1859 = vmatprep.subr.mxu0 0.0
    %1860 = vmatpush1.msra.mxu0 0.0
    %1861 = vmatprep.mubr.f32.mxu0 0.0
    %1862 = vmatmul.mubr.f32.gmra.mrb[0].mxu0 %v1484
    %v1863 = vpop.f32.mrb[0].mxu0
    %v1864 = vadd.f32 0.0, %v1863
    %v1865 = vpop.f32.mrb[0].mxu0
    %1866 = vdwg.mxu0
    %s1867 = scalar_lea.vmem [#allocation2], 96
    %v1868 = vld [vmem:[%s1867] sm:$0xff]
    %v1869 = vld [vmem:[%s1867 + $0x8] sm:$0xff]
    %v1870 = vld [vmem:[%s1867 + $0x10] sm:$0xff]
    %s1871 = scalar_lea.vmem [#allocation2], 240
    %v1872 = vld [vmem:[%s1871 + $0x18] sm:$0xff]
    %v1873 = vld [vmem:[%s1871 + $0x20] sm:$0xff]
    %v1874 = vld [vmem:[%s1871 + $0x28] sm:$0xff]
    %v1875 = vadd.f32 %v1868, %v1604
    %v1876 = vxor.u32 %v1875, 2147483648
    %v1877 = vmul.f32 %v1876, 1.442695
    %v1878 = vpow.pop %v1877
    %v1879 = vadd.f32 %v1878, 1.0
    %v1880 = vrcp.pop %v1879
    %v1881 = vmul.f32 1.0, %v1880
    %v1882 = vadd.f32 %v1869, %v1606
    %v1883 = vxor.u32 %v1882, 2147483648
    %v1884 = vmul.f32 %v1883, 1.442695
    %v1885 = vpow.pop %v1884
    %v1886 = vadd.f32 %v1885, 1.0
    %v1887 = vrcp.pop %v1886
    %v1888 = vmul.f32 1.0, %v1887
    %v1889 = vadd.f32 %v1675, %v614
    %v1890 = vmul.f32 %v1881, %v1889
    %v1891 = vadd.f32 %v1870, %v1890
    %v1892 = vtanh.pop %v1891
    %v1893 = vsub.f32 1.0, %v1888
    %v1894 = vmul.f32 %v1893, %v1892
    %v1895 = vmul.f32 %v1888, %v1462
    %v1896 = vadd.f32 %v1894, %v1895
    %v1897 = vadd.f32 %v1872, %v1793
    %v1898 = vxor.u32 %v1897, 2147483648
    %v1899 = vmul.f32 %v1898, 1.442695
    %v1900 = vpow.pop %v1899
    %v1901 = vadd.f32 %v1900, 1.0
    %v1902 = vrcp.pop %v1901
    %v1903 = vmul.f32 1.0, %v1902
    %v1904 = vadd.f32 %v1873, %v1795
    %v1905 = vxor.u32 %v1904, 2147483648
    %v1906 = vmul.f32 %v1905, 1.442695
    %v1907 = vpow.pop %v1906
    %v1908 = vadd.f32 %v1907, 1.0
    %v1909 = vrcp.pop %v1908
    %v1910 = vmul.f32 1.0, %v1909
    %v1911 = vadd.f32 %v1864, %v621
    %v1912 = vmul.f32 %v1903, %v1911
    %v1913 = vadd.f32 %v1874, %v1912
    %v1914 = vtanh.pop %v1913
    %v1915 = vsub.f32 1.0, %v1910
    %v1916 = vmul.f32 %v1915, %v1914
    %v1917 = vmul.f32 %v1910, %v1484
    %v1918 = vadd.f32 %v1916, %v1917
    %s1919 = scalar_lea.vmem [#allocation11], 32
    %1920 = vst [vmem:[%s1919] sm:$0xff] %v1896
    %s1921 = scalar_lea.vmem [#allocation11], 80
    %1922 = vst [vmem:[%s1921 + $0x8] sm:$0xff] %v1918
    %v1923 = vld [vmem:[#allocation8] sm:$0xff]
    %v1924 = vld [vmem:[#allocation8 + $0x8] sm:$0xff]
    %v1925 = vld [vmem:[#allocation8 + $0x10] sm:$0xff]
    %v1926 = vld [vmem:[#allocation8 + $0x18] sm:$0xff]
    %v1927 = vld [vmem:[#allocation8 + $0x20] sm:$0xff]
    %v1928 = vld [vmem:[#allocation8 + $0x28] sm:$0xff]
    %v1929 = vld [vmem:[#allocation8 + $0x30] sm:$0xff]
    %v1930 = vld [vmem:[#allocation8 + $0x38] sm:$0xff]
    %v1931 = vld [vmem:[#allocation8 + $0x40] sm:$0xff]
    %v1932 = vld [vmem:[#allocation8 + $0x48] sm:$0xff]
    %v1933 = vld [vmem:[#allocation8 + $0x50] sm:$0xff]
    %v1934 = vld [vmem:[#allocation8 + $0x58] sm:$0xff]
    %v1935 = vld [vmem:[#allocation8 + $0x60] sm:$0xff]
    %v1936 = vld [vmem:[#allocation8 + $0x68] sm:$0xff]
    %v1937 = vld [vmem:[#allocation8 + $0x70] sm:$0xff]
    %v1938 = vld [vmem:[#allocation8 + $0x78] sm:$0xff]
    %v1939 = vld [vmem:[#allocation8 + $0x80] sm:$0xff]
    %v1940 = vld [vmem:[#allocation8 + $0x88] sm:$0xff]
    %v1941 = vld [vmem:[#allocation8 + $0x90] sm:$0xff]
    %v1942 = vld [vmem:[#allocation8 + $0x98] sm:$0xff]
    %v1943 = vld [vmem:[#allocation8 + $0xa0] sm:$0xff]
    %v1944 = vld [vmem:[#allocation8 + $0xa8] sm:$0xff]
    %v1945 = vld [vmem:[#allocation8 + $0xb0] sm:$0xff]
    %v1946 = vld [vmem:[#allocation8 + $0xb8] sm:$0xff]
    %v1947 = vld [vmem:[#allocation8 + $0xc0] sm:$0xff]
    %v1948 = vld [vmem:[#allocation8 + $0xc8] sm:$0xff]
    %v1949 = vld [vmem:[#allocation8 + $0xd0] sm:$0xff]
    %v1950 = vld [vmem:[#allocation8 + $0xd8] sm:$0xff]
    %v1951 = vld [vmem:[#allocation8 + $0xe0] sm:$0xff]
    %v1952 = vld [vmem:[#allocation8 + $0xe8] sm:$0xff]
    %v1953 = vld [vmem:[#allocation8 + $0xf0] sm:$0xff]
    %v1954 = vld [vmem:[#allocation8 + $0xf8] sm:$0xff]
    %v1955 = vld [vmem:[#allocation8 + $0x100] sm:$0xff]
    %v1956 = vld [vmem:[#allocation8 + $0x108] sm:$0xff]
    %v1957 = vld [vmem:[#allocation8 + $0x110] sm:$0xff]
    %v1958 = vld [vmem:[#allocation8 + $0x118] sm:$0xff]
    %v1959 = vld [vmem:[#allocation8 + $0x120] sm:$0xff]
    %v1960 = vld [vmem:[#allocation8 + $0x128] sm:$0xff]
    %v1961 = vld [vmem:[#allocation8 + $0x130] sm:$0xff]
    %v1962 = vld [vmem:[#allocation8 + $0x138] sm:$0xff]
    %v1963 = vld [vmem:[#allocation8 + $0x140] sm:$0xff]
    %v1964 = vld [vmem:[#allocation8 + $0x148] sm:$0xff]
    %v1965 = vld [vmem:[#allocation8 + $0x150] sm:$0xff]
    %v1966 = vld [vmem:[#allocation8 + $0x158] sm:$0xff]
    %v1967 = vld [vmem:[#allocation8 + $0x160] sm:$0xff]
    %v1968 = vld [vmem:[#allocation8 + $0x168] sm:$0xff]
    %v1969 = vld [vmem:[#allocation8 + $0x170] sm:$0xff]
    %v1970 = vld [vmem:[#allocation8 + $0x178] sm:$0xff]
    %1971 = vmatprep.subr.mxu0 %v1924
    %1972 = vmatpush1.msra.mxu0 %v1923
    %1973 = vmatprep.subr.mxu0 %v1927
    %1974 = vmatpush1.msra.mxu0 %v1926
    %1975 = vmatprep.subr.mxu0 %v1930
    %1976 = vmatpush1.msra.mxu0 %v1929
    %1977 = vmatprep.subr.mxu0 %v1933
    %1978 = vmatpush1.msra.mxu0 %v1932
    %1979 = vmatprep.subr.mxu0 %v1936
    %1980 = vmatpush1.msra.mxu0 %v1935
    %1981 = vmatprep.subr.mxu0 %v1939
    %1982 = vmatpush1.msra.mxu0 %v1938
    %1983 = vmatprep.subr.mxu0 %v1942
    %1984 = vmatpush1.msra.mxu0 %v1941
    %1985 = vmatprep.subr.mxu0 %v1945
    %1986 = vmatpush1.msra.mxu0 %v1944
    %1987 = vmatprep.subr.mxu0 %v1948
    %1988 = vmatpush1.msra.mxu0 %v1947
    %1989 = vmatprep.subr.mxu0 %v1951
    %1990 = vmatpush1.msra.mxu0 %v1950
    %1991 = vmatprep.subr.mxu0 %v1954
    %1992 = vmatpush1.msra.mxu0 %v1953
    %1993 = vmatprep.subr.mxu0 %v1957
    %1994 = vmatpush1.msra.mxu0 %v1956
    %1995 = vmatprep.subr.mxu0 %v1960
    %1996 = vmatpush1.msra.mxu0 %v1959
    %1997 = vmatprep.subr.mxu0 %v1963
    %1998 = vmatpush1.msra.mxu0 %v1962
    %1999 = vmatprep.subr.mxu0 %v1966
    %2000 = vmatpush1.msra.mxu0 %v1965
    %2001 = vmatprep.subr.mxu0 %v1969
    %2002 = vmatpush1.msra.mxu0 %v1968
    %2003 = vmatprep.subr.mxu0 0.0
    %2004 = vmatpush1.msra.mxu0 0.0
    %2005 = vmatprep.subr.mxu0 0.0
    %2006 = vmatpush1.msra.mxu0 0.0
    %2007 = vmatprep.subr.mxu0 0.0
    %2008 = vmatpush1.msra.mxu0 0.0
    %2009 = vmatprep.subr.mxu0 0.0
    %2010 = vmatpush1.msra.mxu0 0.0
    %2011 = vmatprep.subr.mxu0 0.0
    %2012 = vmatpush1.msra.mxu0 0.0
    %2013 = vmatprep.subr.mxu0 0.0
    %2014 = vmatpush1.msra.mxu0 0.0
    %2015 = vmatprep.subr.mxu0 0.0
    %2016 = vmatpush1.msra.mxu0 0.0
    %2017 = vmatprep.subr.mxu0 0.0
    %2018 = vmatpush1.msra.mxu0 0.0
    %2019 = vmatprep.subr.mxu0 0.0
    %2020 = vmatpush1.msra.mxu0 0.0
    %2021 = vmatprep.subr.mxu0 0.0
    %2022 = vmatpush1.msra.mxu0 0.0
    %2023 = vmatprep.subr.mxu0 0.0
    %2024 = vmatpush1.msra.mxu0 0.0
    %2025 = vmatprep.subr.mxu0 0.0
    %2026 = vmatpush1.msra.mxu0 0.0
    %2027 = vmatprep.subr.mxu0 0.0
    %2028 = vmatpush1.msra.mxu0 0.0
    %2029 = vmatprep.subr.mxu0 0.0
    %2030 = vmatpush1.msra.mxu0 0.0
    %2031 = vmatprep.subr.mxu0 0.0
    %2032 = vmatpush1.msra.mxu0 0.0
    %2033 = vmatprep.subr.mxu0 0.0
    %2034 = vmatpush1.msra.mxu0 0.0
    %2035 = vmatprep.mubr.f32.mxu0 0.0
    %2036 = vmatmul.mubr.f32.gmra.mrb[0].mxu0 %v1896
    %v2037 = vpop.f32.mrb[0].mxu0
    %v2038 = vadd.f32 0.0, %v2037
    %v2039 = vpop.f32.mrb[0].mxu0
    %v2040 = vadd.f32 0.0, %v2039
    %2041 = vdwg.mxu0
    %2042 = vmatprep.subr.mxu0 0.0
    %2043 = vmatpush1.msra.mxu0 %v1925
    %2044 = vmatprep.subr.mxu0 0.0
    %2045 = vmatpush1.msra.mxu0 %v1928
    %2046 = vmatprep.subr.mxu0 0.0
    %2047 = vmatpush1.msra.mxu0 %v1931
    %2048 = vmatprep.subr.mxu0 0.0
    %2049 = vmatpush1.msra.mxu0 %v1934
    %2050 = vmatprep.subr.mxu0 0.0
    %2051 = vmatpush1.msra.mxu0 %v1937
    %2052 = vmatprep.subr.mxu0 0.0
    %2053 = vmatpush1.msra.mxu0 %v1940
    %2054 = vmatprep.subr.mxu0 0.0
    %2055 = vmatpush1.msra.mxu0 %v1943
    %2056 = vmatprep.subr.mxu0 0.0
    %2057 = vmatpush1.msra.mxu0 %v1946
    %2058 = vmatprep.subr.mxu0 0.0
    %2059 = vmatpush1.msra.mxu0 %v1949
    %2060 = vmatprep.subr.mxu0 0.0
    %2061 = vmatpush1.msra.mxu0 %v1952
    %2062 = vmatprep.subr.mxu0 0.0
    %2063 = vmatpush1.msra.mxu0 %v1955
    %2064 = vmatprep.subr.mxu0 0.0
    %2065 = vmatpush1.msra.mxu0 %v1958
    %2066 = vmatprep.subr.mxu0 0.0
    %2067 = vmatpush1.msra.mxu0 %v1961
    %2068 = vmatprep.subr.mxu0 0.0
    %2069 = vmatpush1.msra.mxu0 %v1964
    %2070 = vmatprep.subr.mxu0 0.0
    %2071 = vmatpush1.msra.mxu0 %v1967
    %2072 = vmatprep.subr.mxu0 0.0
    %2073 = vmatpush1.msra.mxu0 %v1970
    %2074 = vmatprep.subr.mxu0 0.0
    %2075 = vmatpush1.msra.mxu0 0.0
    %2076 = vmatprep.subr.mxu0 0.0
    %2077 = vmatpush1.msra.mxu0 0.0
    %2078 = vmatprep.subr.mxu0 0.0
    %2079 = vmatpush1.msra.mxu0 0.0
    %2080 = vmatprep.subr.mxu0 0.0
    %2081 = vmatpush1.msra.mxu0 0.0
    %2082 = vmatprep.subr.mxu0 0.0
    %2083 = vmatpush1.msra.mxu0 0.0
    %2084 = vmatprep.subr.mxu0 0.0
    %2085 = vmatpush1.msra.mxu0 0.0
    %2086 = vmatprep.subr.mxu0 0.0
    %2087 = vmatpush1.msra.mxu0 0.0
    %2088 = vmatprep.subr.mxu0 0.0
    %2089 = vmatpush1.msra.mxu0 0.0
    %2090 = vmatprep.subr.mxu0 0.0
    %2091 = vmatpush1.msra.mxu0 0.0
    %2092 = vmatprep.subr.mxu0 0.0
    %2093 = vmatpush1.msra.mxu0 0.0
    %2094 = vmatprep.subr.mxu0 0.0
    %2095 = vmatpush1.msra.mxu0 0.0
    %2096 = vmatprep.subr.mxu0 0.0
    %2097 = vmatpush1.msra.mxu0 0.0
    %2098 = vmatprep.subr.mxu0 0.0
    %2099 = vmatpush1.msra.mxu0 0.0
    %2100 = vmatprep.subr.mxu0 0.0
    %2101 = vmatpush1.msra.mxu0 0.0
    %2102 = vmatprep.subr.mxu0 0.0
    %2103 = vmatpush1.msra.mxu0 0.0
    %2104 = vmatprep.subr.mxu0 0.0
    %2105 = vmatpush1.msra.mxu0 0.0
    %2106 = vmatprep.mubr.f32.mxu0 0.0
    %2107 = vmatmul.mubr.f32.gmra.mrb[0].mxu0 %v1896
    %v2108 = vpop.f32.mrb[0].mxu0
    %v2109 = vadd.f32 0.0, %v2108
    %v2110 = vpop.f32.mrb[0].mxu0
    %2111 = vdwg.mxu0
    %v2112 = vld [vmem:[#allocation9] sm:$0xff]
    %v2113 = vld [vmem:[#allocation9 + $0x8] sm:$0xff]
    %v2114 = vld [vmem:[#allocation9 + $0x10] sm:$0xff]
    %v2115 = vld [vmem:[#allocation9 + $0x18] sm:$0xff]
    %v2116 = vld [vmem:[#allocation9 + $0x20] sm:$0xff]
    %v2117 = vld [vmem:[#allocation9 + $0x28] sm:$0xff]
    %v2118 = vld [vmem:[#allocation9 + $0x30] sm:$0xff]
    %v2119 = vld [vmem:[#allocation9 + $0x38] sm:$0xff]
    %v2120 = vld [vmem:[#allocation9 + $0x40] sm:$0xff]
    %v2121 = vld [vmem:[#allocation9 + $0x48] sm:$0xff]
    %v2122 = vld [vmem:[#allocation9 + $0x50] sm:$0xff]
    %v2123 = vld [vmem:[#allocation9 + $0x58] sm:$0xff]
    %v2124 = vld [vmem:[#allocation9 + $0x60] sm:$0xff]
    %v2125 = vld [vmem:[#allocation9 + $0x68] sm:$0xff]
    %v2126 = vld [vmem:[#allocation9 + $0x70] sm:$0xff]
    %v2127 = vld [vmem:[#allocation9 + $0x78] sm:$0xff]
    %v2128 = vld [vmem:[#allocation9 + $0x80] sm:$0xff]
    %v2129 = vld [vmem:[#allocation9 + $0x88] sm:$0xff]
    %v2130 = vld [vmem:[#allocation9 + $0x90] sm:$0xff]
    %v2131 = vld [vmem:[#allocation9 + $0x98] sm:$0xff]
    %v2132 = vld [vmem:[#allocation9 + $0xa0] sm:$0xff]
    %v2133 = vld [vmem:[#allocation9 + $0xa8] sm:$0xff]
    %v2134 = vld [vmem:[#allocation9 + $0xb0] sm:$0xff]
    %v2135 = vld [vmem:[#allocation9 + $0xb8] sm:$0xff]
    %v2136 = vld [vmem:[#allocation9 + $0xc0] sm:$0xff]
    %v2137 = vld [vmem:[#allocation9 + $0xc8] sm:$0xff]
    %v2138 = vld [vmem:[#allocation9 + $0xd0] sm:$0xff]
    %v2139 = vld [vmem:[#allocation9 + $0xd8] sm:$0xff]
    %v2140 = vld [vmem:[#allocation9 + $0xe0] sm:$0xff]
    %v2141 = vld [vmem:[#allocation9 + $0xe8] sm:$0xff]
    %v2142 = vld [vmem:[#allocation9 + $0xf0] sm:$0xff]
    %v2143 = vld [vmem:[#allocation9 + $0xf8] sm:$0xff]
    %v2144 = vld [vmem:[#allocation9 + $0x100] sm:$0xff]
    %v2145 = vld [vmem:[#allocation9 + $0x108] sm:$0xff]
    %v2146 = vld [vmem:[#allocation9 + $0x110] sm:$0xff]
    %v2147 = vld [vmem:[#allocation9 + $0x118] sm:$0xff]
    %v2148 = vld [vmem:[#allocation9 + $0x120] sm:$0xff]
    %v2149 = vld [vmem:[#allocation9 + $0x128] sm:$0xff]
    %v2150 = vld [vmem:[#allocation9 + $0x130] sm:$0xff]
    %v2151 = vld [vmem:[#allocation9 + $0x138] sm:$0xff]
    %v2152 = vld [vmem:[#allocation9 + $0x140] sm:$0xff]
    %v2153 = vld [vmem:[#allocation9 + $0x148] sm:$0xff]
    %v2154 = vld [vmem:[#allocation9 + $0x150] sm:$0xff]
    %v2155 = vld [vmem:[#allocation9 + $0x158] sm:$0xff]
    %v2156 = vld [vmem:[#allocation9 + $0x160] sm:$0xff]
    %v2157 = vld [vmem:[#allocation9 + $0x168] sm:$0xff]
    %v2158 = vld [vmem:[#allocation9 + $0x170] sm:$0xff]
    %v2159 = vld [vmem:[#allocation9 + $0x178] sm:$0xff]
    %2160 = vmatprep.subr.mxu0 %v2113
    %2161 = vmatpush1.msra.mxu0 %v2112
    %2162 = vmatprep.subr.mxu0 %v2116
    %2163 = vmatpush1.msra.mxu0 %v2115
    %2164 = vmatprep.subr.mxu0 %v2119
    %2165 = vmatpush1.msra.mxu0 %v2118
    %2166 = vmatprep.subr.mxu0 %v2122
    %2167 = vmatpush1.msra.mxu0 %v2121
    %2168 = vmatprep.subr.mxu0 %v2125
    %2169 = vmatpush1.msra.mxu0 %v2124
    %2170 = vmatprep.subr.mxu0 %v2128
    %2171 = vmatpush1.msra.mxu0 %v2127
    %2172 = vmatprep.subr.mxu0 %v2131
    %2173 = vmatpush1.msra.mxu0 %v2130
    %2174 = vmatprep.subr.mxu0 %v2134
    %2175 = vmatpush1.msra.mxu0 %v2133
    %2176 = vmatprep.subr.mxu0 %v2137
    %2177 = vmatpush1.msra.mxu0 %v2136
    %2178 = vmatprep.subr.mxu0 %v2140
    %2179 = vmatpush1.msra.mxu0 %v2139
    %2180 = vmatprep.subr.mxu0 %v2143
    %2181 = vmatpush1.msra.mxu0 %v2142
    %2182 = vmatprep.subr.mxu0 %v2146
    %2183 = vmatpush1.msra.mxu0 %v2145
    %2184 = vmatprep.subr.mxu0 %v2149
    %2185 = vmatpush1.msra.mxu0 %v2148
    %2186 = vmatprep.subr.mxu0 %v2152
    %2187 = vmatpush1.msra.mxu0 %v2151
    %2188 = vmatprep.subr.mxu0 %v2155
    %2189 = vmatpush1.msra.mxu0 %v2154
    %2190 = vmatprep.subr.mxu0 %v2158
    %2191 = vmatpush1.msra.mxu0 %v2157
    %2192 = vmatprep.subr.mxu0 0.0
    %2193 = vmatpush1.msra.mxu0 0.0
    %2194 = vmatprep.subr.mxu0 0.0
    %2195 = vmatpush1.msra.mxu0 0.0
    %2196 = vmatprep.subr.mxu0 0.0
    %2197 = vmatpush1.msra.mxu0 0.0
    %2198 = vmatprep.subr.mxu0 0.0
    %2199 = vmatpush1.msra.mxu0 0.0
    %2200 = vmatprep.subr.mxu0 0.0
    %2201 = vmatpush1.msra.mxu0 0.0
    %2202 = vmatprep.subr.mxu0 0.0
    %2203 = vmatpush1.msra.mxu0 0.0
    %2204 = vmatprep.subr.mxu0 0.0
    %2205 = vmatpush1.msra.mxu0 0.0
    %2206 = vmatprep.subr.mxu0 0.0
    %2207 = vmatpush1.msra.mxu0 0.0
    %2208 = vmatprep.subr.mxu0 0.0
    %2209 = vmatpush1.msra.mxu0 0.0
    %2210 = vmatprep.subr.mxu0 0.0
    %2211 = vmatpush1.msra.mxu0 0.0
    %2212 = vmatprep.subr.mxu0 0.0
    %2213 = vmatpush1.msra.mxu0 0.0
    %2214 = vmatprep.subr.mxu0 0.0
    %2215 = vmatpush1.msra.mxu0 0.0
    %2216 = vmatprep.subr.mxu0 0.0
    %2217 = vmatpush1.msra.mxu0 0.0
    %2218 = vmatprep.subr.mxu0 0.0
    %2219 = vmatpush1.msra.mxu0 0.0
    %2220 = vmatprep.subr.mxu0 0.0
    %2221 = vmatpush1.msra.mxu0 0.0
    %2222 = vmatprep.subr.mxu0 0.0
    %2223 = vmatpush1.msra.mxu0 0.0
    %2224 = vmatprep.mubr.f32.mxu0 0.0
    %2225 = vmatmul.mubr.f32.gmra.mrb[0].mxu0 %v1918
    %v2226 = vpop.f32.mrb[0].mxu0
    %v2227 = vadd.f32 0.0, %v2226
    %v2228 = vpop.f32.mrb[0].mxu0
    %v2229 = vadd.f32 0.0, %v2228
    %2230 = vdwg.mxu0
    %2231 = vmatprep.subr.mxu0 0.0
    %2232 = vmatpush1.msra.mxu0 %v2114
    %2233 = vmatprep.subr.mxu0 0.0
    %2234 = vmatpush1.msra.mxu0 %v2117
    %2235 = vmatprep.subr.mxu0 0.0
    %2236 = vmatpush1.msra.mxu0 %v2120
    %2237 = vmatprep.subr.mxu0 0.0
    %2238 = vmatpush1.msra.mxu0 %v2123
    %2239 = vmatprep.subr.mxu0 0.0
    %2240 = vmatpush1.msra.mxu0 %v2126
    %2241 = vmatprep.subr.mxu0 0.0
    %2242 = vmatpush1.msra.mxu0 %v2129
    %2243 = vmatprep.subr.mxu0 0.0
    %2244 = vmatpush1.msra.mxu0 %v2132
    %2245 = vmatprep.subr.mxu0 0.0
    %2246 = vmatpush1.msra.mxu0 %v2135
    %2247 = vmatprep.subr.mxu0 0.0
    %2248 = vmatpush1.msra.mxu0 %v2138
    %2249 = vmatprep.subr.mxu0 0.0
    %2250 = vmatpush1.msra.mxu0 %v2141
    %2251 = vmatprep.subr.mxu0 0.0
    %2252 = vmatpush1.msra.mxu0 %v2144
    %2253 = vmatprep.subr.mxu0 0.0
    %2254 = vmatpush1.msra.mxu0 %v2147
    %2255 = vmatprep.subr.mxu0 0.0
    %2256 = vmatpush1.msra.mxu0 %v2150
    %2257 = vmatprep.subr.mxu0 0.0
    %2258 = vmatpush1.msra.mxu0 %v2153
    %2259 = vmatprep.subr.mxu0 0.0
    %2260 = vmatpush1.msra.mxu0 %v2156
    %2261 = vmatprep.subr.mxu0 0.0
    %2262 = vmatpush1.msra.mxu0 %v2159
    %2263 = vmatprep.subr.mxu0 0.0
    %2264 = vmatpush1.msra.mxu0 0.0
    %2265 = vmatprep.subr.mxu0 0.0
    %2266 = vmatpush1.msra.mxu0 0.0
    %2267 = vmatprep.subr.mxu0 0.0
    %2268 = vmatpush1.msra.mxu0 0.0
    %2269 = vmatprep.subr.mxu0 0.0
    %2270 = vmatpush1.msra.mxu0 0.0
    %2271 = vmatprep.subr.mxu0 0.0
    %2272 = vmatpush1.msra.mxu0 0.0
    %2273 = vmatprep.subr.mxu0 0.0
    %2274 = vmatpush1.msra.mxu0 0.0
    %2275 = vmatprep.subr.mxu0 0.0
    %2276 = vmatpush1.msra.mxu0 0.0
    %2277 = vmatprep.subr.mxu0 0.0
    %2278 = vmatpush1.msra.mxu0 0.0
    %2279 = vmatprep.subr.mxu0 0.0
    %2280 = vmatpush1.msra.mxu0 0.0
    %2281 = vmatprep.subr.mxu0 0.0
    %2282 = vmatpush1.msra.mxu0 0.0
    %2283 = vmatprep.subr.mxu0 0.0
    %2284 = vmatpush1.msra.mxu0 0.0
    %2285 = vmatprep.subr.mxu0 0.0
    %2286 = vmatpush1.msra.mxu0 0.0
    %2287 = vmatprep.subr.mxu0 0.0
    %2288 = vmatpush1.msra.mxu0 0.0
    %2289 = vmatprep.subr.mxu0 0.0
    %2290 = vmatpush1.msra.mxu0 0.0
    %2291 = vmatprep.subr.mxu0 0.0
    %2292 = vmatpush1.msra.mxu0 0.0
    %2293 = vmatprep.subr.mxu0 0.0
    %2294 = vmatpush1.msra.mxu0 0.0
    %2295 = vmatprep.mubr.f32.mxu0 0.0
    %2296 = vmatmul.mubr.f32.gmra.mrb[0].mxu0 %v1918
    %v2297 = vpop.f32.mrb[0].mxu0
    %v2298 = vadd.f32 0.0, %v2297
    %v2299 = vpop.f32.mrb[0].mxu0
    %2300 = vdwg.mxu0
    %s2301 = scalar_lea.vmem [#allocation2], 144
    %v2302 = vld [vmem:[%s2301] sm:$0xff]
    %v2303 = vld [vmem:[%s2301 + $0x8] sm:$0xff]
    %v2304 = vld [vmem:[%s2301 + $0x10] sm:$0xff]
    %s2305 = scalar_lea.vmem [#allocation2], 192
    %v2306 = vld [vmem:[%s2305 + $0x18] sm:$0xff]
    %v2307 = vld [vmem:[%s2305 + $0x20] sm:$0xff]
    %v2308 = vld [vmem:[%s2305 + $0x28] sm:$0xff]
    %v2309 = vadd.f32 %v2302, %v2038
    %v2310 = vxor.u32 %v2309, 2147483648
    %v2311 = vmul.f32 %v2310, 1.442695
    %v2312 = vpow.pop %v2311
    %v2313 = vadd.f32 %v2312, 1.0
    %v2314 = vrcp.pop %v2313
    %v2315 = vmul.f32 1.0, %v2314
    %v2316 = vadd.f32 %v2303, %v2040
    %v2317 = vxor.u32 %v2316, 2147483648
    %v2318 = vmul.f32 %v2317, 1.442695
    %v2319 = vpow.pop %v2318
    %v2320 = vadd.f32 %v2319, 1.0
    %v2321 = vrcp.pop %v2320
    %v2322 = vmul.f32 1.0, %v2321
    %v2323 = vadd.f32 %v2109, %v614
    %v2324 = vmul.f32 %v2315, %v2323
    %v2325 = vadd.f32 %v2304, %v2324
    %v2326 = vtanh.pop %v2325
    %v2327 = vsub.f32 1.0, %v2322
    %v2328 = vmul.f32 %v2327, %v2326
    %v2329 = vmul.f32 %v2322, %v1896
    %v2330 = vadd.f32 %v2328, %v2329
    %v2331 = vadd.f32 %v2306, %v2227
    %v2332 = vxor.u32 %v2331, 2147483648
    %v2333 = vmul.f32 %v2332, 1.442695
    %v2334 = vpow.pop %v2333
    %v2335 = vadd.f32 %v2334, 1.0
    %v2336 = vrcp.pop %v2335
    %v2337 = vmul.f32 1.0, %v2336
    %v2338 = vadd.f32 %v2307, %v2229
    %v2339 = vxor.u32 %v2338, 2147483648
    %v2340 = vmul.f32 %v2339, 1.442695
    %v2341 = vpow.pop %v2340
    %v2342 = vadd.f32 %v2341, 1.0
    %v2343 = vrcp.pop %v2342
    %v2344 = vmul.f32 1.0, %v2343
    %v2345 = vadd.f32 %v2298, %v621
    %v2346 = vmul.f32 %v2337, %v2345
    %v2347 = vadd.f32 %v2308, %v2346
    %v2348 = vtanh.pop %v2347
    %v2349 = vsub.f32 1.0, %v2344
    %v2350 = vmul.f32 %v2349, %v2348
    %v2351 = vmul.f32 %v2344, %v1918
    %v2352 = vadd.f32 %v2350, %v2351
    %s2353 = scalar_lea.vmem [#allocation11], 48
    %2354 = vst [vmem:[%s2353] sm:$0xff] %v2330
    %s2355 = scalar_lea.vmem [#allocation11], 64
    %2356 = vst [vmem:[%s2355 + $0x8] sm:$0xff] %v2352
    %v2357 = vld [vmem:[#allocation8] sm:$0xff]
    %v2358 = vld [vmem:[#allocation8 + $0x8] sm:$0xff]
    %v2359 = vld [vmem:[#allocation8 + $0x10] sm:$0xff]
    %v2360 = vld [vmem:[#allocation8 + $0x18] sm:$0xff]
    %v2361 = vld [vmem:[#allocation8 + $0x20] sm:$0xff]
    %v2362 = vld [vmem:[#allocation8 + $0x28] sm:$0xff]
    %v2363 = vld [vmem:[#allocation8 + $0x30] sm:$0xff]
    %v2364 = vld [vmem:[#allocation8 + $0x38] sm:$0xff]
    %v2365 = vld [vmem:[#allocation8 + $0x40] sm:$0xff]
    %v2366 = vld [vmem:[#allocation8 + $0x48] sm:$0xff]
    %v2367 = vld [vmem:[#allocation8 + $0x50] sm:$0xff]
    %v2368 = vld [vmem:[#allocation8 + $0x58] sm:$0xff]
    %v2369 = vld [vmem:[#allocation8 + $0x60] sm:$0xff]
    %v2370 = vld [vmem:[#allocation8 + $0x68] sm:$0xff]
    %v2371 = vld [vmem:[#allocation8 + $0x70] sm:$0xff]
    %v2372 = vld [vmem:[#allocation8 + $0x78] sm:$0xff]
    %v2373 = vld [vmem:[#allocation8 + $0x80] sm:$0xff]
    %v2374 = vld [vmem:[#allocation8 + $0x88] sm:$0xff]
    %v2375 = vld [vmem:[#allocation8 + $0x90] sm:$0xff]
    %v2376 = vld [vmem:[#allocation8 + $0x98] sm:$0xff]
    %v2377 = vld [vmem:[#allocation8 + $0xa0] sm:$0xff]
    %v2378 = vld [vmem:[#allocation8 + $0xa8] sm:$0xff]
    %v2379 = vld [vmem:[#allocation8 + $0xb0] sm:$0xff]
    %v2380 = vld [vmem:[#allocation8 + $0xb8] sm:$0xff]
    %v2381 = vld [vmem:[#allocation8 + $0xc0] sm:$0xff]
    %v2382 = vld [vmem:[#allocation8 + $0xc8] sm:$0xff]
    %v2383 = vld [vmem:[#allocation8 + $0xd0] sm:$0xff]
    %v2384 = vld [vmem:[#allocation8 + $0xd8] sm:$0xff]
    %v2385 = vld [vmem:[#allocation8 + $0xe0] sm:$0xff]
    %v2386 = vld [vmem:[#allocation8 + $0xe8] sm:$0xff]
    %v2387 = vld [vmem:[#allocation8 + $0xf0] sm:$0xff]
    %v2388 = vld [vmem:[#allocation8 + $0xf8] sm:$0xff]
    %v2389 = vld [vmem:[#allocation8 + $0x100] sm:$0xff]
    %v2390 = vld [vmem:[#allocation8 + $0x108] sm:$0xff]
    %v2391 = vld [vmem:[#allocation8 + $0x110] sm:$0xff]
    %v2392 = vld [vmem:[#allocation8 + $0x118] sm:$0xff]
    %v2393 = vld [vmem:[#allocation8 + $0x120] sm:$0xff]
    %v2394 = vld [vmem:[#allocation8 + $0x128] sm:$0xff]
    %v2395 = vld [vmem:[#allocation8 + $0x130] sm:$0xff]
    %v2396 = vld [vmem:[#allocation8 + $0x138] sm:$0xff]
    %v2397 = vld [vmem:[#allocation8 + $0x140] sm:$0xff]
    %v2398 = vld [vmem:[#allocation8 + $0x148] sm:$0xff]
    %v2399 = vld [vmem:[#allocation8 + $0x150] sm:$0xff]
    %v2400 = vld [vmem:[#allocation8 + $0x158] sm:$0xff]
    %v2401 = vld [vmem:[#allocation8 + $0x160] sm:$0xff]
    %v2402 = vld [vmem:[#allocation8 + $0x168] sm:$0xff]
    %v2403 = vld [vmem:[#allocation8 + $0x170] sm:$0xff]
    %v2404 = vld [vmem:[#allocation8 + $0x178] sm:$0xff]
    %2405 = vmatprep.subr.mxu0 %v2358
    %2406 = vmatpush1.msra.mxu0 %v2357
    %2407 = vmatprep.subr.mxu0 %v2361
    %2408 = vmatpush1.msra.mxu0 %v2360
    %2409 = vmatprep.subr.mxu0 %v2364
    %2410 = vmatpush1.msra.mxu0 %v2363
    %2411 = vmatprep.subr.mxu0 %v2367
    %2412 = vmatpush1.msra.mxu0 %v2366
    %2413 = vmatprep.subr.mxu0 %v2370
    %2414 = vmatpush1.msra.mxu0 %v2369
    %2415 = vmatprep.subr.mxu0 %v2373
    %2416 = vmatpush1.msra.mxu0 %v2372
    %2417 = vmatprep.subr.mxu0 %v2376
    %2418 = vmatpush1.msra.mxu0 %v2375
    %2419 = vmatprep.subr.mxu0 %v2379
    %2420 = vmatpush1.msra.mxu0 %v2378
    %2421 = vmatprep.subr.mxu0 %v2382
    %2422 = vmatpush1.msra.mxu0 %v2381
    %2423 = vmatprep.subr.mxu0 %v2385
    %2424 = vmatpush1.msra.mxu0 %v2384
    %2425 = vmatprep.subr.mxu0 %v2388
    %2426 = vmatpush1.msra.mxu0 %v2387
    %2427 = vmatprep.subr.mxu0 %v2391
    %2428 = vmatpush1.msra.mxu0 %v2390
    %2429 = vmatprep.subr.mxu0 %v2394
    %2430 = vmatpush1.msra.mxu0 %v2393
    %2431 = vmatprep.subr.mxu0 %v2397
    %2432 = vmatpush1.msra.mxu0 %v2396
    %2433 = vmatprep.subr.mxu0 %v2400
    %2434 = vmatpush1.msra.mxu0 %v2399
    %2435 = vmatprep.subr.mxu0 %v2403
    %2436 = vmatpush1.msra.mxu0 %v2402
    %2437 = vmatprep.subr.mxu0 0.0
    %2438 = vmatpush1.msra.mxu0 0.0
    %2439 = vmatprep.subr.mxu0 0.0
    %2440 = vmatpush1.msra.mxu0 0.0
    %2441 = vmatprep.subr.mxu0 0.0
    %2442 = vmatpush1.msra.mxu0 0.0
    %2443 = vmatprep.subr.mxu0 0.0
    %2444 = vmatpush1.msra.mxu0 0.0
    %2445 = vmatprep.subr.mxu0 0.0
    %2446 = vmatpush1.msra.mxu0 0.0
    %2447 = vmatprep.subr.mxu0 0.0
    %2448 = vmatpush1.msra.mxu0 0.0
    %2449 = vmatprep.subr.mxu0 0.0
    %2450 = vmatpush1.msra.mxu0 0.0
    %2451 = vmatprep.subr.mxu0 0.0
    %2452 = vmatpush1.msra.mxu0 0.0
    %2453 = vmatprep.subr.mxu0 0.0
    %2454 = vmatpush1.msra.mxu0 0.0
    %2455 = vmatprep.subr.mxu0 0.0
    %2456 = vmatpush1.msra.mxu0 0.0
    %2457 = vmatprep.subr.mxu0 0.0
    %2458 = vmatpush1.msra.mxu0 0.0
    %2459 = vmatprep.subr.mxu0 0.0
    %2460 = vmatpush1.msra.mxu0 0.0
    %2461 = vmatprep.subr.mxu0 0.0
    %2462 = vmatpush1.msra.mxu0 0.0
    %2463 = vmatprep.subr.mxu0 0.0
    %2464 = vmatpush1.msra.mxu0 0.0
    %2465 = vmatprep.subr.mxu0 0.0
    %2466 = vmatpush1.msra.mxu0 0.0
    %2467 = vmatprep.subr.mxu0 0.0
    %2468 = vmatpush1.msra.mxu0 0.0
    %2469 = vmatprep.mubr.f32.mxu0 0.0
    %2470 = vmatmul.mubr.f32.gmra.mrb[0].mxu0 %v2330
    %v2471 = vpop.f32.mrb[0].mxu0
    %v2472 = vadd.f32 0.0, %v2471
    %v2473 = vpop.f32.mrb[0].mxu0
    %v2474 = vadd.f32 0.0, %v2473
    %2475 = vdwg.mxu0
    %2476 = vmatprep.subr.mxu0 0.0
    %2477 = vmatpush1.msra.mxu0 %v2359
    %2478 = vmatprep.subr.mxu0 0.0
    %2479 = vmatpush1.msra.mxu0 %v2362
    %2480 = vmatprep.subr.mxu0 0.0
    %2481 = vmatpush1.msra.mxu0 %v2365
    %2482 = vmatprep.subr.mxu0 0.0
    %2483 = vmatpush1.msra.mxu0 %v2368
    %2484 = vmatprep.subr.mxu0 0.0
    %2485 = vmatpush1.msra.mxu0 %v2371
    %2486 = vmatprep.subr.mxu0 0.0
    %2487 = vmatpush1.msra.mxu0 %v2374
    %2488 = vmatprep.subr.mxu0 0.0
    %2489 = vmatpush1.msra.mxu0 %v2377
    %2490 = vmatprep.subr.mxu0 0.0
    %2491 = vmatpush1.msra.mxu0 %v2380
    %2492 = vmatprep.subr.mxu0 0.0
    %2493 = vmatpush1.msra.mxu0 %v2383
    %2494 = vmatprep.subr.mxu0 0.0
    %2495 = vmatpush1.msra.mxu0 %v2386
    %2496 = vmatprep.subr.mxu0 0.0
    %2497 = vmatpush1.msra.mxu0 %v2389
    %2498 = vmatprep.subr.mxu0 0.0
    %2499 = vmatpush1.msra.mxu0 %v2392
    %2500 = vmatprep.subr.mxu0 0.0
    %2501 = vmatpush1.msra.mxu0 %v2395
    %2502 = vmatprep.subr.mxu0 0.0
    %2503 = vmatpush1.msra.mxu0 %v2398
    %2504 = vmatprep.subr.mxu0 0.0
    %2505 = vmatpush1.msra.mxu0 %v2401
    %2506 = vmatprep.subr.mxu0 0.0
    %2507 = vmatpush1.msra.mxu0 %v2404
    %2508 = vmatprep.subr.mxu0 0.0
    %2509 = vmatpush1.msra.mxu0 0.0
    %2510 = vmatprep.subr.mxu0 0.0
    %2511 = vmatpush1.msra.mxu0 0.0
    %2512 = vmatprep.subr.mxu0 0.0
    %2513 = vmatpush1.msra.mxu0 0.0
    %2514 = vmatprep.subr.mxu0 0.0
    %2515 = vmatpush1.msra.mxu0 0.0
    %2516 = vmatprep.subr.mxu0 0.0
    %2517 = vmatpush1.msra.mxu0 0.0
    %2518 = vmatprep.subr.mxu0 0.0
    %2519 = vmatpush1.msra.mxu0 0.0
    %2520 = vmatprep.subr.mxu0 0.0
    %2521 = vmatpush1.msra.mxu0 0.0
    %2522 = vmatprep.subr.mxu0 0.0
    %2523 = vmatpush1.msra.mxu0 0.0
    %2524 = vmatprep.subr.mxu0 0.0
    %2525 = vmatpush1.msra.mxu0 0.0
    %2526 = vmatprep.subr.mxu0 0.0
    %2527 = vmatpush1.msra.mxu0 0.0
    %2528 = vmatprep.subr.mxu0 0.0
    %2529 = vmatpush1.msra.mxu0 0.0
    %2530 = vmatprep.subr.mxu0 0.0
    %2531 = vmatpush1.msra.mxu0 0.0
    %2532 = vmatprep.subr.mxu0 0.0
    %2533 = vmatpush1.msra.mxu0 0.0
    %2534 = vmatprep.subr.mxu0 0.0
    %2535 = vmatpush1.msra.mxu0 0.0
    %2536 = vmatprep.subr.mxu0 0.0
    %2537 = vmatpush1.msra.mxu0 0.0
    %2538 = vmatprep.subr.mxu0 0.0
    %2539 = vmatpush1.msra.mxu0 0.0
    %2540 = vmatprep.mubr.f32.mxu0 0.0
    %2541 = vmatmul.mubr.f32.gmra.mrb[0].mxu0 %v2330
    %v2542 = vpop.f32.mrb[0].mxu0
    %v2543 = vadd.f32 0.0, %v2542
    %v2544 = vpop.f32.mrb[0].mxu0
    %2545 = vdwg.mxu0
    %v2546 = vld [vmem:[#allocation9] sm:$0xff]
    %v2547 = vld [vmem:[#allocation9 + $0x8] sm:$0xff]
    %v2548 = vld [vmem:[#allocation9 + $0x10] sm:$0xff]
    %v2549 = vld [vmem:[#allocation9 + $0x18] sm:$0xff]
    %v2550 = vld [vmem:[#allocation9 + $0x20] sm:$0xff]
    %v2551 = vld [vmem:[#allocation9 + $0x28] sm:$0xff]
    %v2552 = vld [vmem:[#allocation9 + $0x30] sm:$0xff]
    %v2553 = vld [vmem:[#allocation9 + $0x38] sm:$0xff]
    %v2554 = vld [vmem:[#allocation9 + $0x40] sm:$0xff]
    %v2555 = vld [vmem:[#allocation9 + $0x48] sm:$0xff]
    %v2556 = vld [vmem:[#allocation9 + $0x50] sm:$0xff]
    %v2557 = vld [vmem:[#allocation9 + $0x58] sm:$0xff]
    %v2558 = vld [vmem:[#allocation9 + $0x60] sm:$0xff]
    %v2559 = vld [vmem:[#allocation9 + $0x68] sm:$0xff]
    %v2560 = vld [vmem:[#allocation9 + $0x70] sm:$0xff]
    %v2561 = vld [vmem:[#allocation9 + $0x78] sm:$0xff]
    %v2562 = vld [vmem:[#allocation9 + $0x80] sm:$0xff]
    %v2563 = vld [vmem:[#allocation9 + $0x88] sm:$0xff]
    %v2564 = vld [vmem:[#allocation9 + $0x90] sm:$0xff]
    %v2565 = vld [vmem:[#allocation9 + $0x98] sm:$0xff]
    %v2566 = vld [vmem:[#allocation9 + $0xa0] sm:$0xff]
    %v2567 = vld [vmem:[#allocation9 + $0xa8] sm:$0xff]
    %v2568 = vld [vmem:[#allocation9 + $0xb0] sm:$0xff]
    %v2569 = vld [vmem:[#allocation9 + $0xb8] sm:$0xff]
    %v2570 = vld [vmem:[#allocation9 + $0xc0] sm:$0xff]
    %v2571 = vld [vmem:[#allocation9 + $0xc8] sm:$0xff]
    %v2572 = vld [vmem:[#allocation9 + $0xd0] sm:$0xff]
    %v2573 = vld [vmem:[#allocation9 + $0xd8] sm:$0xff]
    %v2574 = vld [vmem:[#allocation9 + $0xe0] sm:$0xff]
    %v2575 = vld [vmem:[#allocation9 + $0xe8] sm:$0xff]
    %v2576 = vld [vmem:[#allocation9 + $0xf0] sm:$0xff]
    %v2577 = vld [vmem:[#allocation9 + $0xf8] sm:$0xff]
    %v2578 = vld [vmem:[#allocation9 + $0x100] sm:$0xff]
    %v2579 = vld [vmem:[#allocation9 + $0x108] sm:$0xff]
    %v2580 = vld [vmem:[#allocation9 + $0x110] sm:$0xff]
    %v2581 = vld [vmem:[#allocation9 + $0x118] sm:$0xff]
    %v2582 = vld [vmem:[#allocation9 + $0x120] sm:$0xff]
    %v2583 = vld [vmem:[#allocation9 + $0x128] sm:$0xff]
    %v2584 = vld [vmem:[#allocation9 + $0x130] sm:$0xff]
    %v2585 = vld [vmem:[#allocation9 + $0x138] sm:$0xff]
    %v2586 = vld [vmem:[#allocation9 + $0x140] sm:$0xff]
    %v2587 = vld [vmem:[#allocation9 + $0x148] sm:$0xff]
    %v2588 = vld [vmem:[#allocation9 + $0x150] sm:$0xff]
    %v2589 = vld [vmem:[#allocation9 + $0x158] sm:$0xff]
    %v2590 = vld [vmem:[#allocation9 + $0x160] sm:$0xff]
    %v2591 = vld [vmem:[#allocation9 + $0x168] sm:$0xff]
    %v2592 = vld [vmem:[#allocation9 + $0x170] sm:$0xff]
    %v2593 = vld [vmem:[#allocation9 + $0x178] sm:$0xff]
    %2594 = vmatprep.subr.mxu0 %v2547
    %2595 = vmatpush1.msra.mxu0 %v2546
    %2596 = vmatprep.subr.mxu0 %v2550
    %2597 = vmatpush1.msra.mxu0 %v2549
    %2598 = vmatprep.subr.mxu0 %v2553
    %2599 = vmatpush1.msra.mxu0 %v2552
    %2600 = vmatprep.subr.mxu0 %v2556
    %2601 = vmatpush1.msra.mxu0 %v2555
    %2602 = vmatprep.subr.mxu0 %v2559
    %2603 = vmatpush1.msra.mxu0 %v2558
    %2604 = vmatprep.subr.mxu0 %v2562
    %2605 = vmatpush1.msra.mxu0 %v2561
    %2606 = vmatprep.subr.mxu0 %v2565
    %2607 = vmatpush1.msra.mxu0 %v2564
    %2608 = vmatprep.subr.mxu0 %v2568
    %2609 = vmatpush1.msra.mxu0 %v2567
    %2610 = vmatprep.subr.mxu0 %v2571
    %2611 = vmatpush1.msra.mxu0 %v2570
    %2612 = vmatprep.subr.mxu0 %v2574
    %2613 = vmatpush1.msra.mxu0 %v2573
    %2614 = vmatprep.subr.mxu0 %v2577
    %2615 = vmatpush1.msra.mxu0 %v2576
    %2616 = vmatprep.subr.mxu0 %v2580
    %2617 = vmatpush1.msra.mxu0 %v2579
    %2618 = vmatprep.subr.mxu0 %v2583
    %2619 = vmatpush1.msra.mxu0 %v2582
    %2620 = vmatprep.subr.mxu0 %v2586
    %2621 = vmatpush1.msra.mxu0 %v2585
    %2622 = vmatprep.subr.mxu0 %v2589
    %2623 = vmatpush1.msra.mxu0 %v2588
    %2624 = vmatprep.subr.mxu0 %v2592
    %2625 = vmatpush1.msra.mxu0 %v2591
    %2626 = vmatprep.subr.mxu0 0.0
    %2627 = vmatpush1.msra.mxu0 0.0
    %2628 = vmatprep.subr.mxu0 0.0
    %2629 = vmatpush1.msra.mxu0 0.0
    %2630 = vmatprep.subr.mxu0 0.0
    %2631 = vmatpush1.msra.mxu0 0.0
    %2632 = vmatprep.subr.mxu0 0.0
    %2633 = vmatpush1.msra.mxu0 0.0
    %2634 = vmatprep.subr.mxu0 0.0
    %2635 = vmatpush1.msra.mxu0 0.0
    %2636 = vmatprep.subr.mxu0 0.0
    %2637 = vmatpush1.msra.mxu0 0.0
    %2638 = vmatprep.subr.mxu0 0.0
    %2639 = vmatpush1.msra.mxu0 0.0
    %2640 = vmatprep.subr.mxu0 0.0
    %2641 = vmatpush1.msra.mxu0 0.0
    %2642 = vmatprep.subr.mxu0 0.0
    %2643 = vmatpush1.msra.mxu0 0.0
    %2644 = vmatprep.subr.mxu0 0.0
    %2645 = vmatpush1.msra.mxu0 0.0
    %2646 = vmatprep.subr.mxu0 0.0
    %2647 = vmatpush1.msra.mxu0 0.0
    %2648 = vmatprep.subr.mxu0 0.0
    %2649 = vmatpush1.msra.mxu0 0.0
    %2650 = vmatprep.subr.mxu0 0.0
    %2651 = vmatpush1.msra.mxu0 0.0
    %2652 = vmatprep.subr.mxu0 0.0
    %2653 = vmatpush1.msra.mxu0 0.0
    %2654 = vmatprep.subr.mxu0 0.0
    %2655 = vmatpush1.msra.mxu0 0.0
    %2656 = vmatprep.subr.mxu0 0.0
    %2657 = vmatpush1.msra.mxu0 0.0
    %2658 = vmatprep.mubr.f32.mxu0 0.0
    %2659 = vmatmul.mubr.f32.gmra.mrb[0].mxu0 %v2352
    %v2660 = vpop.f32.mrb[0].mxu0
    %v2661 = vadd.f32 0.0, %v2660
    %v2662 = vpop.f32.mrb[0].mxu0
    %v2663 = vadd.f32 0.0, %v2662
    %2664 = vdwg.mxu0
    %2665 = vmatprep.subr.mxu0 0.0
    %2666 = vmatpush1.msra.mxu0 %v2548
    %2667 = vmatprep.subr.mxu0 0.0
    %2668 = vmatpush1.msra.mxu0 %v2551
    %2669 = vmatprep.subr.mxu0 0.0
    %2670 = vmatpush1.msra.mxu0 %v2554
    %2671 = vmatprep.subr.mxu0 0.0
    %2672 = vmatpush1.msra.mxu0 %v2557
    %2673 = vmatprep.subr.mxu0 0.0
    %2674 = vmatpush1.msra.mxu0 %v2560
    %2675 = vmatprep.subr.mxu0 0.0
    %2676 = vmatpush1.msra.mxu0 %v2563
    %2677 = vmatprep.subr.mxu0 0.0
    %2678 = vmatpush1.msra.mxu0 %v2566
    %2679 = vmatprep.subr.mxu0 0.0
    %2680 = vmatpush1.msra.mxu0 %v2569
    %2681 = vmatprep.subr.mxu0 0.0
    %2682 = vmatpush1.msra.mxu0 %v2572
    %2683 = vmatprep.subr.mxu0 0.0
    %2684 = vmatpush1.msra.mxu0 %v2575
    %2685 = vmatprep.subr.mxu0 0.0
    %2686 = vmatpush1.msra.mxu0 %v2578
    %2687 = vmatprep.subr.mxu0 0.0
    %2688 = vmatpush1.msra.mxu0 %v2581
    %2689 = vmatprep.subr.mxu0 0.0
    %2690 = vmatpush1.msra.mxu0 %v2584
    %2691 = vmatprep.subr.mxu0 0.0
    %2692 = vmatpush1.msra.mxu0 %v2587
    %2693 = vmatprep.subr.mxu0 0.0
    %2694 = vmatpush1.msra.mxu0 %v2590
    %2695 = vmatprep.subr.mxu0 0.0
    %2696 = vmatpush1.msra.mxu0 %v2593
    %2697 = vmatprep.subr.mxu0 0.0
    %2698 = vmatpush1.msra.mxu0 0.0
    %2699 = vmatprep.subr.mxu0 0.0
    %2700 = vmatpush1.msra.mxu0 0.0
    %2701 = vmatprep.subr.mxu0 0.0
    %2702 = vmatpush1.msra.mxu0 0.0
    %2703 = vmatprep.subr.mxu0 0.0
    %2704 = vmatpush1.msra.mxu0 0.0
    %2705 = vmatprep.subr.mxu0 0.0
    %2706 = vmatpush1.msra.mxu0 0.0
    %2707 = vmatprep.subr.mxu0 0.0
    %2708 = vmatpush1.msra.mxu0 0.0
    %2709 = vmatprep.subr.mxu0 0.0
    %2710 = vmatpush1.msra.mxu0 0.0
    %2711 = vmatprep.subr.mxu0 0.0
    %2712 = vmatpush1.msra.mxu0 0.0
    %2713 = vmatprep.subr.mxu0 0.0
    %2714 = vmatpush1.msra.mxu0 0.0
    %2715 = vmatprep.subr.mxu0 0.0
    %2716 = vmatpush1.msra.mxu0 0.0
    %2717 = vmatprep.subr.mxu0 0.0
    %2718 = vmatpush1.msra.mxu0 0.0
    %2719 = vmatprep.subr.mxu0 0.0
    %2720 = vmatpush1.msra.mxu0 0.0
    %2721 = vmatprep.subr.mxu0 0.0
    %2722 = vmatpush1.msra.mxu0 0.0
    %2723 = vmatprep.subr.mxu0 0.0
    %2724 = vmatpush1.msra.mxu0 0.0
    %2725 = vmatprep.subr.mxu0 0.0
    %2726 = vmatpush1.msra.mxu0 0.0
    %2727 = vmatprep.subr.mxu0 0.0
    %2728 = vmatpush1.msra.mxu0 0.0
    %2729 = vmatprep.mubr.f32.mxu0 0.0
    %2730 = vmatmul.mubr.f32.gmra.mrb[0].mxu0 %v2352
    %v2731 = vpop.f32.mrb[0].mxu0
    %v2732 = vadd.f32 0.0, %v2731
    %v2733 = vpop.f32.mrb[0].mxu0
    %2734 = vdwg.mxu0
    %v2735 = vld [vmem:[%s2305] sm:$0xff]
    %v2736 = vld [vmem:[%s2305 + $0x8] sm:$0xff]
    %v2737 = vld [vmem:[%s2305 + $0x10] sm:$0xff]
    %v2738 = vld [vmem:[%s2301 + $0x18] sm:$0xff]
    %v2739 = vld [vmem:[%s2301 + $0x20] sm:$0xff]
    %v2740 = vld [vmem:[%s2301 + $0x28] sm:$0xff]
    %v2741 = vadd.f32 %v2735, %v2472
    %v2742 = vxor.u32 %v2741, 2147483648
    %v2743 = vmul.f32 %v2742, 1.442695
    %v2744 = vpow.pop %v2743
    %v2745 = vadd.f32 %v2744, 1.0
    %v2746 = vrcp.pop %v2745
    %v2747 = vmul.f32 1.0, %v2746
    %v2748 = vadd.f32 %v2736, %v2474
    %v2749 = vxor.u32 %v2748, 2147483648
    %v2750 = vmul.f32 %v2749, 1.442695
    %v2751 = vpow.pop %v2750
    %v2752 = vadd.f32 %v2751, 1.0
    %v2753 = vrcp.pop %v2752
    %v2754 = vmul.f32 1.0, %v2753
    %v2755 = vadd.f32 %v2543, %v614
    %v2756 = vmul.f32 %v2747, %v2755
    %v2757 = vadd.f32 %v2737, %v2756
    %v2758 = vtanh.pop %v2757
    %v2759 = vsub.f32 1.0, %v2754
    %v2760 = vmul.f32 %v2759, %v2758
    %v2761 = vmul.f32 %v2754, %v2330
    %v2762 = vadd.f32 %v2760, %v2761
    %v2763 = vadd.f32 %v2738, %v2661
    %v2764 = vxor.u32 %v2763, 2147483648
    %v2765 = vmul.f32 %v2764, 1.442695
    %v2766 = vpow.pop %v2765
    %v2767 = vadd.f32 %v2766, 1.0
    %v2768 = vrcp.pop %v2767
    %v2769 = vmul.f32 1.0, %v2768
    %v2770 = vadd.f32 %v2739, %v2663
    %v2771 = vxor.u32 %v2770, 2147483648
    %v2772 = vmul.f32 %v2771, 1.442695
    %v2773 = vpow.pop %v2772
    %v2774 = vadd.f32 %v2773, 1.0
    %v2775 = vrcp.pop %v2774
    %v2776 = vmul.f32 1.0, %v2775
    %v2777 = vadd.f32 %v2732, %v621
    %v2778 = vmul.f32 %v2769, %v2777
    %v2779 = vadd.f32 %v2740, %v2778
    %v2780 = vtanh.pop %v2779
    %v2781 = vsub.f32 1.0, %v2776
    %v2782 = vmul.f32 %v2781, %v2780
    %v2783 = vmul.f32 %v2776, %v2352
    %v2784 = vadd.f32 %v2782, %v2783
    %2785 = vst [vmem:[%s2355] sm:$0xff] %v2762
    %2786 = vst [vmem:[%s2353 + $0x8] sm:$0xff] %v2784
    %v2787 = vld [vmem:[#allocation8] sm:$0xff]
    %v2788 = vld [vmem:[#allocation8 + $0x8] sm:$0xff]
    %v2789 = vld [vmem:[#allocation8 + $0x10] sm:$0xff]
    %v2790 = vld [vmem:[#allocation8 + $0x18] sm:$0xff]
    %v2791 = vld [vmem:[#allocation8 + $0x20] sm:$0xff]
    %v2792 = vld [vmem:[#allocation8 + $0x28] sm:$0xff]
    %v2793 = vld [vmem:[#allocation8 + $0x30] sm:$0xff]
    %v2794 = vld [vmem:[#allocation8 + $0x38] sm:$0xff]
    %v2795 = vld [vmem:[#allocation8 + $0x40] sm:$0xff]
    %v2796 = vld [vmem:[#allocation8 + $0x48] sm:$0xff]
    %v2797 = vld [vmem:[#allocation8 + $0x50] sm:$0xff]
    %v2798 = vld [vmem:[#allocation8 + $0x58] sm:$0xff]
    %v2799 = vld [vmem:[#allocation8 + $0x60] sm:$0xff]
    %v2800 = vld [vmem:[#allocation8 + $0x68] sm:$0xff]
    %v2801 = vld [vmem:[#allocation8 + $0x70] sm:$0xff]
    %v2802 = vld [vmem:[#allocation8 + $0x78] sm:$0xff]
    %v2803 = vld [vmem:[#allocation8 + $0x80] sm:$0xff]
    %v2804 = vld [vmem:[#allocation8 + $0x88] sm:$0xff]
    %v2805 = vld [vmem:[#allocation8 + $0x90] sm:$0xff]
    %v2806 = vld [vmem:[#allocation8 + $0x98] sm:$0xff]
    %v2807 = vld [vmem:[#allocation8 + $0xa0] sm:$0xff]
    %v2808 = vld [vmem:[#allocation8 + $0xa8] sm:$0xff]
    %v2809 = vld [vmem:[#allocation8 + $0xb0] sm:$0xff]
    %v2810 = vld [vmem:[#allocation8 + $0xb8] sm:$0xff]
    %v2811 = vld [vmem:[#allocation8 + $0xc0] sm:$0xff]
    %v2812 = vld [vmem:[#allocation8 + $0xc8] sm:$0xff]
    %v2813 = vld [vmem:[#allocation8 + $0xd0] sm:$0xff]
    %v2814 = vld [vmem:[#allocation8 + $0xd8] sm:$0xff]
    %v2815 = vld [vmem:[#allocation8 + $0xe0] sm:$0xff]
    %v2816 = vld [vmem:[#allocation8 + $0xe8] sm:$0xff]
    %v2817 = vld [vmem:[#allocation8 + $0xf0] sm:$0xff]
    %v2818 = vld [vmem:[#allocation8 + $0xf8] sm:$0xff]
    %v2819 = vld [vmem:[#allocation8 + $0x100] sm:$0xff]
    %v2820 = vld [vmem:[#allocation8 + $0x108] sm:$0xff]
    %v2821 = vld [vmem:[#allocation8 + $0x110] sm:$0xff]
    %v2822 = vld [vmem:[#allocation8 + $0x118] sm:$0xff]
    %v2823 = vld [vmem:[#allocation8 + $0x120] sm:$0xff]
    %v2824 = vld [vmem:[#allocation8 + $0x128] sm:$0xff]
    %v2825 = vld [vmem:[#allocation8 + $0x130] sm:$0xff]
    %v2826 = vld [vmem:[#allocation8 + $0x138] sm:$0xff]
    %v2827 = vld [vmem:[#allocation8 + $0x140] sm:$0xff]
    %v2828 = vld [vmem:[#allocation8 + $0x148] sm:$0xff]
    %v2829 = vld [vmem:[#allocation8 + $0x150] sm:$0xff]
    %v2830 = vld [vmem:[#allocation8 + $0x158] sm:$0xff]
    %v2831 = vld [vmem:[#allocation8 + $0x160] sm:$0xff]
    %v2832 = vld [vmem:[#allocation8 + $0x168] sm:$0xff]
    %v2833 = vld [vmem:[#allocation8 + $0x170] sm:$0xff]
    %v2834 = vld [vmem:[#allocation8 + $0x178] sm:$0xff]
    %2835 = vmatprep.subr.mxu0 %v2788
    %2836 = vmatpush1.msra.mxu0 %v2787
    %2837 = vmatprep.subr.mxu0 %v2791
    %2838 = vmatpush1.msra.mxu0 %v2790
    %2839 = vmatprep.subr.mxu0 %v2794
    %2840 = vmatpush1.msra.mxu0 %v2793
    %2841 = vmatprep.subr.mxu0 %v2797
    %2842 = vmatpush1.msra.mxu0 %v2796
    %2843 = vmatprep.subr.mxu0 %v2800
    %2844 = vmatpush1.msra.mxu0 %v2799
    %2845 = vmatprep.subr.mxu0 %v2803
    %2846 = vmatpush1.msra.mxu0 %v2802
    %2847 = vmatprep.subr.mxu0 %v2806
    %2848 = vmatpush1.msra.mxu0 %v2805
    %2849 = vmatprep.subr.mxu0 %v2809
    %2850 = vmatpush1.msra.mxu0 %v2808
    %2851 = vmatprep.subr.mxu0 %v2812
    %2852 = vmatpush1.msra.mxu0 %v2811
    %2853 = vmatprep.subr.mxu0 %v2815
    %2854 = vmatpush1.msra.mxu0 %v2814
    %2855 = vmatprep.subr.mxu0 %v2818
    %2856 = vmatpush1.msra.mxu0 %v2817
    %2857 = vmatprep.subr.mxu0 %v2821
    %2858 = vmatpush1.msra.mxu0 %v2820
    %2859 = vmatprep.subr.mxu0 %v2824
    %2860 = vmatpush1.msra.mxu0 %v2823
    %2861 = vmatprep.subr.mxu0 %v2827
    %2862 = vmatpush1.msra.mxu0 %v2826
    %2863 = vmatprep.subr.mxu0 %v2830
    %2864 = vmatpush1.msra.mxu0 %v2829
    %2865 = vmatprep.subr.mxu0 %v2833
    %2866 = vmatpush1.msra.mxu0 %v2832
    %2867 = vmatprep.subr.mxu0 0.0
    %2868 = vmatpush1.msra.mxu0 0.0
    %2869 = vmatprep.subr.mxu0 0.0
    %2870 = vmatpush1.msra.mxu0 0.0
    %2871 = vmatprep.subr.mxu0 0.0
    %2872 = vmatpush1.msra.mxu0 0.0
    %2873 = vmatprep.subr.mxu0 0.0
    %2874 = vmatpush1.msra.mxu0 0.0
    %2875 = vmatprep.subr.mxu0 0.0
    %2876 = vmatpush1.msra.mxu0 0.0
    %2877 = vmatprep.subr.mxu0 0.0
    %2878 = vmatpush1.msra.mxu0 0.0
    %2879 = vmatprep.subr.mxu0 0.0
    %2880 = vmatpush1.msra.mxu0 0.0
    %2881 = vmatprep.subr.mxu0 0.0
    %2882 = vmatpush1.msra.mxu0 0.0
    %2883 = vmatprep.subr.mxu0 0.0
    %2884 = vmatpush1.msra.mxu0 0.0
    %2885 = vmatprep.subr.mxu0 0.0
    %2886 = vmatpush1.msra.mxu0 0.0
    %2887 = vmatprep.subr.mxu0 0.0
    %2888 = vmatpush1.msra.mxu0 0.0
    %2889 = vmatprep.subr.mxu0 0.0
    %2890 = vmatpush1.msra.mxu0 0.0
    %2891 = vmatprep.subr.mxu0 0.0
    %2892 = vmatpush1.msra.mxu0 0.0
    %2893 = vmatprep.subr.mxu0 0.0
    %2894 = vmatpush1.msra.mxu0 0.0
    %2895 = vmatprep.subr.mxu0 0.0
    %2896 = vmatpush1.msra.mxu0 0.0
    %2897 = vmatprep.subr.mxu0 0.0
    %2898 = vmatpush1.msra.mxu0 0.0
    %2899 = vmatprep.mubr.f32.mxu0 0.0
    %2900 = vmatmul.mubr.f32.gmra.mrb[0].mxu0 %v2762
    %v2901 = vpop.f32.mrb[0].mxu0
    %v2902 = vadd.f32 0.0, %v2901
    %v2903 = vpop.f32.mrb[0].mxu0
    %v2904 = vadd.f32 0.0, %v2903
    %2905 = vdwg.mxu0
    %2906 = vmatprep.subr.mxu0 0.0
    %2907 = vmatpush1.msra.mxu0 %v2789
    %2908 = vmatprep.subr.mxu0 0.0
    %2909 = vmatpush1.msra.mxu0 %v2792
    %2910 = vmatprep.subr.mxu0 0.0
    %2911 = vmatpush1.msra.mxu0 %v2795
    %2912 = vmatprep.subr.mxu0 0.0
    %2913 = vmatpush1.msra.mxu0 %v2798
    %2914 = vmatprep.subr.mxu0 0.0
    %2915 = vmatpush1.msra.mxu0 %v2801
    %2916 = vmatprep.subr.mxu0 0.0
    %2917 = vmatpush1.msra.mxu0 %v2804
    %2918 = vmatprep.subr.mxu0 0.0
    %2919 = vmatpush1.msra.mxu0 %v2807
    %2920 = vmatprep.subr.mxu0 0.0
    %2921 = vmatpush1.msra.mxu0 %v2810
    %2922 = vmatprep.subr.mxu0 0.0
    %2923 = vmatpush1.msra.mxu0 %v2813
    %2924 = vmatprep.subr.mxu0 0.0
    %2925 = vmatpush1.msra.mxu0 %v2816
    %2926 = vmatprep.subr.mxu0 0.0
    %2927 = vmatpush1.msra.mxu0 %v2819
    %2928 = vmatprep.subr.mxu0 0.0
    %2929 = vmatpush1.msra.mxu0 %v2822
    %2930 = vmatprep.subr.mxu0 0.0
    %2931 = vmatpush1.msra.mxu0 %v2825
    %2932 = vmatprep.subr.mxu0 0.0
    %2933 = vmatpush1.msra.mxu0 %v2828
    %2934 = vmatprep.subr.mxu0 0.0
    %2935 = vmatpush1.msra.mxu0 %v2831
    %2936 = vmatprep.subr.mxu0 0.0
    %2937 = vmatpush1.msra.mxu0 %v2834
    %2938 = vmatprep.subr.mxu0 0.0
    %2939 = vmatpush1.msra.mxu0 0.0
    %2940 = vmatprep.subr.mxu0 0.0
    %2941 = vmatpush1.msra.mxu0 0.0
    %2942 = vmatprep.subr.mxu0 0.0
    %2943 = vmatpush1.msra.mxu0 0.0
    %2944 = vmatprep.subr.mxu0 0.0
    %2945 = vmatpush1.msra.mxu0 0.0
    %2946 = vmatprep.subr.mxu0 0.0
    %2947 = vmatpush1.msra.mxu0 0.0
    %2948 = vmatprep.subr.mxu0 0.0
    %2949 = vmatpush1.msra.mxu0 0.0
    %2950 = vmatprep.subr.mxu0 0.0
    %2951 = vmatpush1.msra.mxu0 0.0
    %2952 = vmatprep.subr.mxu0 0.0
    %2953 = vmatpush1.msra.mxu0 0.0
    %2954 = vmatprep.subr.mxu0 0.0
    %2955 = vmatpush1.msra.mxu0 0.0
    %2956 = vmatprep.subr.mxu0 0.0
    %2957 = vmatpush1.msra.mxu0 0.0
    %2958 = vmatprep.subr.mxu0 0.0
    %2959 = vmatpush1.msra.mxu0 0.0
    %2960 = vmatprep.subr.mxu0 0.0
    %2961 = vmatpush1.msra.mxu0 0.0
    %2962 = vmatprep.subr.mxu0 0.0
    %2963 = vmatpush1.msra.mxu0 0.0
    %2964 = vmatprep.subr.mxu0 0.0
    %2965 = vmatpush1.msra.mxu0 0.0
    %2966 = vmatprep.subr.mxu0 0.0
    %2967 = vmatpush1.msra.mxu0 0.0
    %2968 = vmatprep.subr.mxu0 0.0
    %2969 = vmatpush1.msra.mxu0 0.0
    %2970 = vmatprep.mubr.f32.mxu0 0.0
    %2971 = vmatmul.mubr.f32.gmra.mrb[0].mxu0 %v2762
    %v2972 = vpop.f32.mrb[0].mxu0
    %v2973 = vadd.f32 0.0, %v2972
    %v2974 = vpop.f32.mrb[0].mxu0
    %2975 = vdwg.mxu0
    %v2976 = vld [vmem:[#allocation9] sm:$0xff]
    %v2977 = vld [vmem:[#allocation9 + $0x8] sm:$0xff]
    %v2978 = vld [vmem:[#allocation9 + $0x10] sm:$0xff]
    %v2979 = vld [vmem:[#allocation9 + $0x18] sm:$0xff]
    %v2980 = vld [vmem:[#allocation9 + $0x20] sm:$0xff]
    %v2981 = vld [vmem:[#allocation9 + $0x28] sm:$0xff]
    %v2982 = vld [vmem:[#allocation9 + $0x30] sm:$0xff]
    %v2983 = vld [vmem:[#allocation9 + $0x38] sm:$0xff]
    %v2984 = vld [vmem:[#allocation9 + $0x40] sm:$0xff]
    %v2985 = vld [vmem:[#allocation9 + $0x48] sm:$0xff]
    %v2986 = vld [vmem:[#allocation9 + $0x50] sm:$0xff]
    %v2987 = vld [vmem:[#allocation9 + $0x58] sm:$0xff]
    %v2988 = vld [vmem:[#allocation9 + $0x60] sm:$0xff]
    %v2989 = vld [vmem:[#allocation9 + $0x68] sm:$0xff]
    %v2990 = vld [vmem:[#allocation9 + $0x70] sm:$0xff]
    %v2991 = vld [vmem:[#allocation9 + $0x78] sm:$0xff]
    %v2992 = vld [vmem:[#allocation9 + $0x80] sm:$0xff]
    %v2993 = vld [vmem:[#allocation9 + $0x88] sm:$0xff]
    %v2994 = vld [vmem:[#allocation9 + $0x90] sm:$0xff]
    %v2995 = vld [vmem:[#allocation9 + $0x98] sm:$0xff]
    %v2996 = vld [vmem:[#allocation9 + $0xa0] sm:$0xff]
    %v2997 = vld [vmem:[#allocation9 + $0xa8] sm:$0xff]
    %v2998 = vld [vmem:[#allocation9 + $0xb0] sm:$0xff]
    %v2999 = vld [vmem:[#allocation9 + $0xb8] sm:$0xff]
    %v3000 = vld [vmem:[#allocation9 + $0xc0] sm:$0xff]
    %v3001 = vld [vmem:[#allocation9 + $0xc8] sm:$0xff]
    %v3002 = vld [vmem:[#allocation9 + $0xd0] sm:$0xff]
    %v3003 = vld [vmem:[#allocation9 + $0xd8] sm:$0xff]
    %v3004 = vld [vmem:[#allocation9 + $0xe0] sm:$0xff]
    %v3005 = vld [vmem:[#allocation9 + $0xe8] sm:$0xff]
    %v3006 = vld [vmem:[#allocation9 + $0xf0] sm:$0xff]
    %v3007 = vld [vmem:[#allocation9 + $0xf8] sm:$0xff]
    %v3008 = vld [vmem:[#allocation9 + $0x100] sm:$0xff]
    %v3009 = vld [vmem:[#allocation9 + $0x108] sm:$0xff]
    %v3010 = vld [vmem:[#allocation9 + $0x110] sm:$0xff]
    %v3011 = vld [vmem:[#allocation9 + $0x118] sm:$0xff]
    %v3012 = vld [vmem:[#allocation9 + $0x120] sm:$0xff]
    %v3013 = vld [vmem:[#allocation9 + $0x128] sm:$0xff]
    %v3014 = vld [vmem:[#allocation9 + $0x130] sm:$0xff]
    %v3015 = vld [vmem:[#allocation9 + $0x138] sm:$0xff]
    %v3016 = vld [vmem:[#allocation9 + $0x140] sm:$0xff]
    %v3017 = vld [vmem:[#allocation9 + $0x148] sm:$0xff]
    %v3018 = vld [vmem:[#allocation9 + $0x150] sm:$0xff]
    %v3019 = vld [vmem:[#allocation9 + $0x158] sm:$0xff]
    %v3020 = vld [vmem:[#allocation9 + $0x160] sm:$0xff]
    %v3021 = vld [vmem:[#allocation9 + $0x168] sm:$0xff]
    %v3022 = vld [vmem:[#allocation9 + $0x170] sm:$0xff]
    %v3023 = vld [vmem:[#allocation9 + $0x178] sm:$0xff]
    %3024 = vmatprep.subr.mxu0 %v2977
    %3025 = vmatpush1.msra.mxu0 %v2976
    %3026 = vmatprep.subr.mxu0 %v2980
    %3027 = vmatpush1.msra.mxu0 %v2979
    %3028 = vmatprep.subr.mxu0 %v2983
    %3029 = vmatpush1.msra.mxu0 %v2982
    %3030 = vmatprep.subr.mxu0 %v2986
    %3031 = vmatpush1.msra.mxu0 %v2985
    %3032 = vmatprep.subr.mxu0 %v2989
    %3033 = vmatpush1.msra.mxu0 %v2988
    %3034 = vmatprep.subr.mxu0 %v2992
    %3035 = vmatpush1.msra.mxu0 %v2991
    %3036 = vmatprep.subr.mxu0 %v2995
    %3037 = vmatpush1.msra.mxu0 %v2994
    %3038 = vmatprep.subr.mxu0 %v2998
    %3039 = vmatpush1.msra.mxu0 %v2997
    %3040 = vmatprep.subr.mxu0 %v3001
    %3041 = vmatpush1.msra.mxu0 %v3000
    %3042 = vmatprep.subr.mxu0 %v3004
    %3043 = vmatpush1.msra.mxu0 %v3003
    %3044 = vmatprep.subr.mxu0 %v3007
    %3045 = vmatpush1.msra.mxu0 %v3006
    %3046 = vmatprep.subr.mxu0 %v3010
    %3047 = vmatpush1.msra.mxu0 %v3009
    %3048 = vmatprep.subr.mxu0 %v3013
    %3049 = vmatpush1.msra.mxu0 %v3012
    %3050 = vmatprep.subr.mxu0 %v3016
    %3051 = vmatpush1.msra.mxu0 %v3015
    %3052 = vmatprep.subr.mxu0 %v3019
    %3053 = vmatpush1.msra.mxu0 %v3018
    %3054 = vmatprep.subr.mxu0 %v3022
    %3055 = vmatpush1.msra.mxu0 %v3021
    %3056 = vmatprep.subr.mxu0 0.0
    %3057 = vmatpush1.msra.mxu0 0.0
    %3058 = vmatprep.subr.mxu0 0.0
    %3059 = vmatpush1.msra.mxu0 0.0
    %3060 = vmatprep.subr.mxu0 0.0
    %3061 = vmatpush1.msra.mxu0 0.0
    %3062 = vmatprep.subr.mxu0 0.0
    %3063 = vmatpush1.msra.mxu0 0.0
    %3064 = vmatprep.subr.mxu0 0.0
    %3065 = vmatpush1.msra.mxu0 0.0
    %3066 = vmatprep.subr.mxu0 0.0
    %3067 = vmatpush1.msra.mxu0 0.0
    %3068 = vmatprep.subr.mxu0 0.0
    %3069 = vmatpush1.msra.mxu0 0.0
    %3070 = vmatprep.subr.mxu0 0.0
    %3071 = vmatpush1.msra.mxu0 0.0
    %3072 = vmatprep.subr.mxu0 0.0
    %3073 = vmatpush1.msra.mxu0 0.0
    %3074 = vmatprep.subr.mxu0 0.0
    %3075 = vmatpush1.msra.mxu0 0.0
    %3076 = vmatprep.subr.mxu0 0.0
    %3077 = vmatpush1.msra.mxu0 0.0
    %3078 = vmatprep.subr.mxu0 0.0
    %3079 = vmatpush1.msra.mxu0 0.0
    %3080 = vmatprep.subr.mxu0 0.0
    %3081 = vmatpush1.msra.mxu0 0.0
    %3082 = vmatprep.subr.mxu0 0.0
    %3083 = vmatpush1.msra.mxu0 0.0
    %3084 = vmatprep.subr.mxu0 0.0
    %3085 = vmatpush1.msra.mxu0 0.0
    %3086 = vmatprep.subr.mxu0 0.0
    %3087 = vmatpush1.msra.mxu0 0.0
    %3088 = vmatprep.mubr.f32.mxu0 0.0
    %3089 = vmatmul.mubr.f32.gmra.mrb[0].mxu0 %v2784
    %v3090 = vpop.f32.mrb[0].mxu0
    %v3091 = vadd.f32 0.0, %v3090
    %v3092 = vpop.f32.mrb[0].mxu0
    %v3093 = vadd.f32 0.0, %v3092
    %3094 = vdwg.mxu0
    %3095 = vmatprep.subr.mxu0 0.0
    %3096 = vmatpush1.msra.mxu0 %v2978
    %3097 = vmatprep.subr.mxu0 0.0
    %3098 = vmatpush1.msra.mxu0 %v2981
    %3099 = vmatprep.subr.mxu0 0.0
    %3100 = vmatpush1.msra.mxu0 %v2984
    %3101 = vmatprep.subr.mxu0 0.0
    %3102 = vmatpush1.msra.mxu0 %v2987
    %3103 = vmatprep.subr.mxu0 0.0
    %3104 = vmatpush1.msra.mxu0 %v2990
    %3105 = vmatprep.subr.mxu0 0.0
    %3106 = vmatpush1.msra.mxu0 %v2993
    %3107 = vmatprep.subr.mxu0 0.0
    %3108 = vmatpush1.msra.mxu0 %v2996
    %3109 = vmatprep.subr.mxu0 0.0
    %3110 = vmatpush1.msra.mxu0 %v2999
    %3111 = vmatprep.subr.mxu0 0.0
    %3112 = vmatpush1.msra.mxu0 %v3002
    %3113 = vmatprep.subr.mxu0 0.0
    %3114 = vmatpush1.msra.mxu0 %v3005
    %3115 = vmatprep.subr.mxu0 0.0
    %3116 = vmatpush1.msra.mxu0 %v3008
    %3117 = vmatprep.subr.mxu0 0.0
    %3118 = vmatpush1.msra.mxu0 %v3011
    %3119 = vmatprep.subr.mxu0 0.0
    %3120 = vmatpush1.msra.mxu0 %v3014
    %3121 = vmatprep.subr.mxu0 0.0
    %3122 = vmatpush1.msra.mxu0 %v3017
    %3123 = vmatprep.subr.mxu0 0.0
    %3124 = vmatpush1.msra.mxu0 %v3020
    %3125 = vmatprep.subr.mxu0 0.0
    %3126 = vmatpush1.msra.mxu0 %v3023
    %3127 = vmatprep.subr.mxu0 0.0
    %3128 = vmatpush1.msra.mxu0 0.0
    %3129 = vmatprep.subr.mxu0 0.0
    %3130 = vmatpush1.msra.mxu0 0.0
    %3131 = vmatprep.subr.mxu0 0.0
    %3132 = vmatpush1.msra.mxu0 0.0
    %3133 = vmatprep.subr.mxu0 0.0
    %3134 = vmatpush1.msra.mxu0 0.0
    %3135 = vmatprep.subr.mxu0 0.0
    %3136 = vmatpush1.msra.mxu0 0.0
    %3137 = vmatprep.subr.mxu0 0.0
    %3138 = vmatpush1.msra.mxu0 0.0
    %3139 = vmatprep.subr.mxu0 0.0
    %3140 = vmatpush1.msra.mxu0 0.0
    %3141 = vmatprep.subr.mxu0 0.0
    %3142 = vmatpush1.msra.mxu0 0.0
    %3143 = vmatprep.subr.mxu0 0.0
    %3144 = vmatpush1.msra.mxu0 0.0
    %3145 = vmatprep.subr.mxu0 0.0
    %3146 = vmatpush1.msra.mxu0 0.0
    %3147 = vmatprep.subr.mxu0 0.0
    %3148 = vmatpush1.msra.mxu0 0.0
    %3149 = vmatprep.subr.mxu0 0.0
    %3150 = vmatpush1.msra.mxu0 0.0
    %3151 = vmatprep.subr.mxu0 0.0
    %3152 = vmatpush1.msra.mxu0 0.0
    %3153 = vmatprep.subr.mxu0 0.0
    %3154 = vmatpush1.msra.mxu0 0.0
    %3155 = vmatprep.subr.mxu0 0.0
    %3156 = vmatpush1.msra.mxu0 0.0
    %3157 = vmatprep.subr.mxu0 0.0
    %3158 = vmatpush1.msra.mxu0 0.0
    %3159 = vmatprep.mubr.f32.mxu0 0.0
    %3160 = vmatmul.mubr.f32.gmra.mrb[0].mxu0 %v2784
    %v3161 = vpop.f32.mrb[0].mxu0
    %v3162 = vadd.f32 0.0, %v3161
    %v3163 = vpop.f32.mrb[0].mxu0
    %3164 = vdwg.mxu0
    %v3165 = vld [vmem:[%s1871] sm:$0xff]
    %v3166 = vld [vmem:[%s1871 + $0x8] sm:$0xff]
    %v3167 = vld [vmem:[%s1871 + $0x10] sm:$0xff]
    %v3168 = vld [vmem:[%s1867 + $0x18] sm:$0xff]
    %v3169 = vld [vmem:[%s1867 + $0x20] sm:$0xff]
    %v3170 = vld [vmem:[%s1867 + $0x28] sm:$0xff]
    %v3171 = vadd.f32 %v3165, %v2902
    %v3172 = vxor.u32 %v3171, 2147483648
    %v3173 = vmul.f32 %v3172, 1.442695
    %v3174 = vpow.pop %v3173
    %v3175 = vadd.f32 %v3174, 1.0
    %v3176 = vrcp.pop %v3175
    %v3177 = vmul.f32 1.0, %v3176
    %v3178 = vadd.f32 %v3166, %v2904
    %v3179 = vxor.u32 %v3178, 2147483648
    %v3180 = vmul.f32 %v3179, 1.442695
    %v3181 = vpow.pop %v3180
    %v3182 = vadd.f32 %v3181, 1.0
    %v3183 = vrcp.pop %v3182
    %v3184 = vmul.f32 1.0, %v3183
    %v3185 = vadd.f32 %v2973, %v614
    %v3186 = vmul.f32 %v3177, %v3185
    %v3187 = vadd.f32 %v3167, %v3186
    %v3188 = vtanh.pop %v3187
    %v3189 = vsub.f32 1.0, %v3184
    %v3190 = vmul.f32 %v3189, %v3188
    %v3191 = vmul.f32 %v3184, %v2762
    %v3192 = vadd.f32 %v3190, %v3191
    %v3193 = vadd.f32 %v3168, %v3091
    %v3194 = vxor.u32 %v3193, 2147483648
    %v3195 = vmul.f32 %v3194, 1.442695
    %v3196 = vpow.pop %v3195
    %v3197 = vadd.f32 %v3196, 1.0
    %v3198 = vrcp.pop %v3197
    %v3199 = vmul.f32 1.0, %v3198
    %v3200 = vadd.f32 %v3169, %v3093
    %v3201 = vxor.u32 %v3200, 2147483648
    %v3202 = vmul.f32 %v3201, 1.442695
    %v3203 = vpow.pop %v3202
    %v3204 = vadd.f32 %v3203, 1.0
    %v3205 = vrcp.pop %v3204
    %v3206 = vmul.f32 1.0, %v3205
    %v3207 = vadd.f32 %v3162, %v621
    %v3208 = vmul.f32 %v3199, %v3207
    %v3209 = vadd.f32 %v3170, %v3208
    %v3210 = vtanh.pop %v3209
    %v3211 = vsub.f32 1.0, %v3206
    %v3212 = vmul.f32 %v3211, %v3210
    %v3213 = vmul.f32 %v3206, %v2784
    %v3214 = vadd.f32 %v3212, %v3213
    %3215 = vst [vmem:[%s1921] sm:$0xff] %v3192
    %3216 = vst [vmem:[%s1919 + $0x8] sm:$0xff] %v3214
    %v3217 = vld [vmem:[#allocation8] sm:$0xff]
    %v3218 = vld [vmem:[#allocation8 + $0x8] sm:$0xff]
    %v3219 = vld [vmem:[#allocation8 + $0x10] sm:$0xff]
    %v3220 = vld [vmem:[#allocation8 + $0x18] sm:$0xff]
    %v3221 = vld [vmem:[#allocation8 + $0x20] sm:$0xff]
    %v3222 = vld [vmem:[#allocation8 + $0x28] sm:$0xff]
    %v3223 = vld [vmem:[#allocation8 + $0x30] sm:$0xff]
    %v3224 = vld [vmem:[#allocation8 + $0x38] sm:$0xff]
    %v3225 = vld [vmem:[#allocation8 + $0x40] sm:$0xff]
    %v3226 = vld [vmem:[#allocation8 + $0x48] sm:$0xff]
    %v3227 = vld [vmem:[#allocation8 + $0x50] sm:$0xff]
    %v3228 = vld [vmem:[#allocation8 + $0x58] sm:$0xff]
    %v3229 = vld [vmem:[#allocation8 + $0x60] sm:$0xff]
    %v3230 = vld [vmem:[#allocation8 + $0x68] sm:$0xff]
    %v3231 = vld [vmem:[#allocation8 + $0x70] sm:$0xff]
    %v3232 = vld [vmem:[#allocation8 + $0x78] sm:$0xff]
    %v3233 = vld [vmem:[#allocation8 + $0x80] sm:$0xff]
    %v3234 = vld [vmem:[#allocation8 + $0x88] sm:$0xff]
    %v3235 = vld [vmem:[#allocation8 + $0x90] sm:$0xff]
    %v3236 = vld [vmem:[#allocation8 + $0x98] sm:$0xff]
    %v3237 = vld [vmem:[#allocation8 + $0xa0] sm:$0xff]
    %v3238 = vld [vmem:[#allocation8 + $0xa8] sm:$0xff]
    %v3239 = vld [vmem:[#allocation8 + $0xb0] sm:$0xff]
    %v3240 = vld [vmem:[#allocation8 + $0xb8] sm:$0xff]
    %v3241 = vld [vmem:[#allocation8 + $0xc0] sm:$0xff]
    %v3242 = vld [vmem:[#allocation8 + $0xc8] sm:$0xff]
    %v3243 = vld [vmem:[#allocation8 + $0xd0] sm:$0xff]
    %v3244 = vld [vmem:[#allocation8 + $0xd8] sm:$0xff]
    %v3245 = vld [vmem:[#allocation8 + $0xe0] sm:$0xff]
    %v3246 = vld [vmem:[#allocation8 + $0xe8] sm:$0xff]
    %v3247 = vld [vmem:[#allocation8 + $0xf0] sm:$0xff]
    %v3248 = vld [vmem:[#allocation8 + $0xf8] sm:$0xff]
    %v3249 = vld [vmem:[#allocation8 + $0x100] sm:$0xff]
    %v3250 = vld [vmem:[#allocation8 + $0x108] sm:$0xff]
    %v3251 = vld [vmem:[#allocation8 + $0x110] sm:$0xff]
    %v3252 = vld [vmem:[#allocation8 + $0x118] sm:$0xff]
    %v3253 = vld [vmem:[#allocation8 + $0x120] sm:$0xff]
    %v3254 = vld [vmem:[#allocation8 + $0x128] sm:$0xff]
    %v3255 = vld [vmem:[#allocation8 + $0x130] sm:$0xff]
    %v3256 = vld [vmem:[#allocation8 + $0x138] sm:$0xff]
    %v3257 = vld [vmem:[#allocation8 + $0x140] sm:$0xff]
    %v3258 = vld [vmem:[#allocation8 + $0x148] sm:$0xff]
    %v3259 = vld [vmem:[#allocation8 + $0x150] sm:$0xff]
    %v3260 = vld [vmem:[#allocation8 + $0x158] sm:$0xff]
    %v3261 = vld [vmem:[#allocation8 + $0x160] sm:$0xff]
    %v3262 = vld [vmem:[#allocation8 + $0x168] sm:$0xff]
    %v3263 = vld [vmem:[#allocation8 + $0x170] sm:$0xff]
    %v3264 = vld [vmem:[#allocation8 + $0x178] sm:$0xff]
    %3265 = vmatprep.subr.mxu0 %v3218
    %3266 = vmatpush1.msra.mxu0 %v3217
    %3267 = vmatprep.subr.mxu0 %v3221
    %3268 = vmatpush1.msra.mxu0 %v3220
    %3269 = vmatprep.subr.mxu0 %v3224
    %3270 = vmatpush1.msra.mxu0 %v3223
    %3271 = vmatprep.subr.mxu0 %v3227
    %3272 = vmatpush1.msra.mxu0 %v3226
    %3273 = vmatprep.subr.mxu0 %v3230
    %3274 = vmatpush1.msra.mxu0 %v3229
    %3275 = vmatprep.subr.mxu0 %v3233
    %3276 = vmatpush1.msra.mxu0 %v3232
    %3277 = vmatprep.subr.mxu0 %v3236
    %3278 = vmatpush1.msra.mxu0 %v3235
    %3279 = vmatprep.subr.mxu0 %v3239
    %3280 = vmatpush1.msra.mxu0 %v3238
    %3281 = vmatprep.subr.mxu0 %v3242
    %3282 = vmatpush1.msra.mxu0 %v3241
    %3283 = vmatprep.subr.mxu0 %v3245
    %3284 = vmatpush1.msra.mxu0 %v3244
    %3285 = vmatprep.subr.mxu0 %v3248
    %3286 = vmatpush1.msra.mxu0 %v3247
    %3287 = vmatprep.subr.mxu0 %v3251
    %3288 = vmatpush1.msra.mxu0 %v3250
    %3289 = vmatprep.subr.mxu0 %v3254
    %3290 = vmatpush1.msra.mxu0 %v3253
    %3291 = vmatprep.subr.mxu0 %v3257
    %3292 = vmatpush1.msra.mxu0 %v3256
    %3293 = vmatprep.subr.mxu0 %v3260
    %3294 = vmatpush1.msra.mxu0 %v3259
    %3295 = vmatprep.subr.mxu0 %v3263
    %3296 = vmatpush1.msra.mxu0 %v3262
    %3297 = vmatprep.subr.mxu0 0.0
    %3298 = vmatpush1.msra.mxu0 0.0
    %3299 = vmatprep.subr.mxu0 0.0
    %3300 = vmatpush1.msra.mxu0 0.0
    %3301 = vmatprep.subr.mxu0 0.0
    %3302 = vmatpush1.msra.mxu0 0.0
    %3303 = vmatprep.subr.mxu0 0.0
    %3304 = vmatpush1.msra.mxu0 0.0
    %3305 = vmatprep.subr.mxu0 0.0
    %3306 = vmatpush1.msra.mxu0 0.0
    %3307 = vmatprep.subr.mxu0 0.0
    %3308 = vmatpush1.msra.mxu0 0.0
    %3309 = vmatprep.subr.mxu0 0.0
    %3310 = vmatpush1.msra.mxu0 0.0
    %3311 = vmatprep.subr.mxu0 0.0
    %3312 = vmatpush1.msra.mxu0 0.0
    %3313 = vmatprep.subr.mxu0 0.0
    %3314 = vmatpush1.msra.mxu0 0.0
    %3315 = vmatprep.subr.mxu0 0.0
    %3316 = vmatpush1.msra.mxu0 0.0
    %3317 = vmatprep.subr.mxu0 0.0
    %3318 = vmatpush1.msra.mxu0 0.0
    %3319 = vmatprep.subr.mxu0 0.0
    %3320 = vmatpush1.msra.mxu0 0.0
    %3321 = vmatprep.subr.mxu0 0.0
    %3322 = vmatpush1.msra.mxu0 0.0
    %3323 = vmatprep.subr.mxu0 0.0
    %3324 = vmatpush1.msra.mxu0 0.0
    %3325 = vmatprep.subr.mxu0 0.0
    %3326 = vmatpush1.msra.mxu0 0.0
    %3327 = vmatprep.subr.mxu0 0.0
    %3328 = vmatpush1.msra.mxu0 0.0
    %3329 = vmatprep.mubr.f32.mxu0 0.0
    %3330 = vmatmul.mubr.f32.gmra.mrb[0].mxu0 %v3192
    %v3331 = vpop.f32.mrb[0].mxu0
    %v3332 = vadd.f32 0.0, %v3331
    %v3333 = vpop.f32.mrb[0].mxu0
    %v3334 = vadd.f32 0.0, %v3333
    %3335 = vdwg.mxu0
    %3336 = vmatprep.subr.mxu0 0.0
    %3337 = vmatpush1.msra.mxu0 %v3219
    %3338 = vmatprep.subr.mxu0 0.0
    %3339 = vmatpush1.msra.mxu0 %v3222
    %3340 = vmatprep.subr.mxu0 0.0
    %3341 = vmatpush1.msra.mxu0 %v3225
    %3342 = vmatprep.subr.mxu0 0.0
    %3343 = vmatpush1.msra.mxu0 %v3228
    %3344 = vmatprep.subr.mxu0 0.0
    %3345 = vmatpush1.msra.mxu0 %v3231
    %3346 = vmatprep.subr.mxu0 0.0
    %3347 = vmatpush1.msra.mxu0 %v3234
    %3348 = vmatprep.subr.mxu0 0.0
    %3349 = vmatpush1.msra.mxu0 %v3237
    %3350 = vmatprep.subr.mxu0 0.0
    %3351 = vmatpush1.msra.mxu0 %v3240
    %3352 = vmatprep.subr.mxu0 0.0
    %3353 = vmatpush1.msra.mxu0 %v3243
    %3354 = vmatprep.subr.mxu0 0.0
    %3355 = vmatpush1.msra.mxu0 %v3246
    %3356 = vmatprep.subr.mxu0 0.0
    %3357 = vmatpush1.msra.mxu0 %v3249
    %3358 = vmatprep.subr.mxu0 0.0
    %3359 = vmatpush1.msra.mxu0 %v3252
    %3360 = vmatprep.subr.mxu0 0.0
    %3361 = vmatpush1.msra.mxu0 %v3255
    %3362 = vmatprep.subr.mxu0 0.0
    %3363 = vmatpush1.msra.mxu0 %v3258
    %3364 = vmatprep.subr.mxu0 0.0
    %3365 = vmatpush1.msra.mxu0 %v3261
    %3366 = vmatprep.subr.mxu0 0.0
    %3367 = vmatpush1.msra.mxu0 %v3264
    %3368 = vmatprep.subr.mxu0 0.0
    %3369 = vmatpush1.msra.mxu0 0.0
    %3370 = vmatprep.subr.mxu0 0.0
    %3371 = vmatpush1.msra.mxu0 0.0
    %3372 = vmatprep.subr.mxu0 0.0
    %3373 = vmatpush1.msra.mxu0 0.0
    %3374 = vmatprep.subr.mxu0 0.0
    %3375 = vmatpush1.msra.mxu0 0.0
    %3376 = vmatprep.subr.mxu0 0.0
    %3377 = vmatpush1.msra.mxu0 0.0
    %3378 = vmatprep.subr.mxu0 0.0
    %3379 = vmatpush1.msra.mxu0 0.0
    %3380 = vmatprep.subr.mxu0 0.0
    %3381 = vmatpush1.msra.mxu0 0.0
    %3382 = vmatprep.subr.mxu0 0.0
    %3383 = vmatpush1.msra.mxu0 0.0
    %3384 = vmatprep.subr.mxu0 0.0
    %3385 = vmatpush1.msra.mxu0 0.0
    %3386 = vmatprep.subr.mxu0 0.0
    %3387 = vmatpush1.msra.mxu0 0.0
    %3388 = vmatprep.subr.mxu0 0.0
    %3389 = vmatpush1.msra.mxu0 0.0
    %3390 = vmatprep.subr.mxu0 0.0
    %3391 = vmatpush1.msra.mxu0 0.0
    %3392 = vmatprep.subr.mxu0 0.0
    %3393 = vmatpush1.msra.mxu0 0.0
    %3394 = vmatprep.subr.mxu0 0.0
    %3395 = vmatpush1.msra.mxu0 0.0
    %3396 = vmatprep.subr.mxu0 0.0
    %3397 = vmatpush1.msra.mxu0 0.0
    %3398 = vmatprep.subr.mxu0 0.0
    %3399 = vmatpush1.msra.mxu0 0.0
    %3400 = vmatprep.mubr.f32.mxu0 0.0
    %3401 = vmatmul.mubr.f32.gmra.mrb[0].mxu0 %v3192
    %v3402 = vpop.f32.mrb[0].mxu0
    %v3403 = vadd.f32 0.0, %v3402
    %v3404 = vpop.f32.mrb[0].mxu0
    %3405 = vdwg.mxu0
    %v3406 = vld [vmem:[#allocation9] sm:$0xff]
    %v3407 = vld [vmem:[#allocation9 + $0x8] sm:$0xff]
    %v3408 = vld [vmem:[#allocation9 + $0x10] sm:$0xff]
    %v3409 = vld [vmem:[#allocation9 + $0x18] sm:$0xff]
    %v3410 = vld [vmem:[#allocation9 + $0x20] sm:$0xff]
    %v3411 = vld [vmem:[#allocation9 + $0x28] sm:$0xff]
    %v3412 = vld [vmem:[#allocation9 + $0x30] sm:$0xff]
    %v3413 = vld [vmem:[#allocation9 + $0x38] sm:$0xff]
    %v3414 = vld [vmem:[#allocation9 + $0x40] sm:$0xff]
    %v3415 = vld [vmem:[#allocation9 + $0x48] sm:$0xff]
    %v3416 = vld [vmem:[#allocation9 + $0x50] sm:$0xff]
    %v3417 = vld [vmem:[#allocation9 + $0x58] sm:$0xff]
    %v3418 = vld [vmem:[#allocation9 + $0x60] sm:$0xff]
    %v3419 = vld [vmem:[#allocation9 + $0x68] sm:$0xff]
    %v3420 = vld [vmem:[#allocation9 + $0x70] sm:$0xff]
    %v3421 = vld [vmem:[#allocation9 + $0x78] sm:$0xff]
    %v3422 = vld [vmem:[#allocation9 + $0x80] sm:$0xff]
    %v3423 = vld [vmem:[#allocation9 + $0x88] sm:$0xff]
    %v3424 = vld [vmem:[#allocation9 + $0x90] sm:$0xff]
    %v3425 = vld [vmem:[#allocation9 + $0x98] sm:$0xff]
    %v3426 = vld [vmem:[#allocation9 + $0xa0] sm:$0xff]
    %v3427 = vld [vmem:[#allocation9 + $0xa8] sm:$0xff]
    %v3428 = vld [vmem:[#allocation9 + $0xb0] sm:$0xff]
    %v3429 = vld [vmem:[#allocation9 + $0xb8] sm:$0xff]
    %v3430 = vld [vmem:[#allocation9 + $0xc0] sm:$0xff]
    %v3431 = vld [vmem:[#allocation9 + $0xc8] sm:$0xff]
    %v3432 = vld [vmem:[#allocation9 + $0xd0] sm:$0xff]
    %v3433 = vld [vmem:[#allocation9 + $0xd8] sm:$0xff]
    %v3434 = vld [vmem:[#allocation9 + $0xe0] sm:$0xff]
    %v3435 = vld [vmem:[#allocation9 + $0xe8] sm:$0xff]
    %v3436 = vld [vmem:[#allocation9 + $0xf0] sm:$0xff]
    %v3437 = vld [vmem:[#allocation9 + $0xf8] sm:$0xff]
    %v3438 = vld [vmem:[#allocation9 + $0x100] sm:$0xff]
    %v3439 = vld [vmem:[#allocation9 + $0x108] sm:$0xff]
    %v3440 = vld [vmem:[#allocation9 + $0x110] sm:$0xff]
    %v3441 = vld [vmem:[#allocation9 + $0x118] sm:$0xff]
    %v3442 = vld [vmem:[#allocation9 + $0x120] sm:$0xff]
    %v3443 = vld [vmem:[#allocation9 + $0x128] sm:$0xff]
    %v3444 = vld [vmem:[#allocation9 + $0x130] sm:$0xff]
    %v3445 = vld [vmem:[#allocation9 + $0x138] sm:$0xff]
    %v3446 = vld [vmem:[#allocation9 + $0x140] sm:$0xff]
    %v3447 = vld [vmem:[#allocation9 + $0x148] sm:$0xff]
    %v3448 = vld [vmem:[#allocation9 + $0x150] sm:$0xff]
    %v3449 = vld [vmem:[#allocation9 + $0x158] sm:$0xff]
    %v3450 = vld [vmem:[#allocation9 + $0x160] sm:$0xff]
    %v3451 = vld [vmem:[#allocation9 + $0x168] sm:$0xff]
    %v3452 = vld [vmem:[#allocation9 + $0x170] sm:$0xff]
    %v3453 = vld [vmem:[#allocation9 + $0x178] sm:$0xff]
    %3454 = vmatprep.subr.mxu0 %v3407
    %3455 = vmatpush1.msra.mxu0 %v3406
    %3456 = vmatprep.subr.mxu0 %v3410
    %3457 = vmatpush1.msra.mxu0 %v3409
    %3458 = vmatprep.subr.mxu0 %v3413
    %3459 = vmatpush1.msra.mxu0 %v3412
    %3460 = vmatprep.subr.mxu0 %v3416
    %3461 = vmatpush1.msra.mxu0 %v3415
    %3462 = vmatprep.subr.mxu0 %v3419
    %3463 = vmatpush1.msra.mxu0 %v3418
    %3464 = vmatprep.subr.mxu0 %v3422
    %3465 = vmatpush1.msra.mxu0 %v3421
    %3466 = vmatprep.subr.mxu0 %v3425
    %3467 = vmatpush1.msra.mxu0 %v3424
    %3468 = vmatprep.subr.mxu0 %v3428
    %3469 = vmatpush1.msra.mxu0 %v3427
    %3470 = vmatprep.subr.mxu0 %v3431
    %3471 = vmatpush1.msra.mxu0 %v3430
    %3472 = vmatprep.subr.mxu0 %v3434
    %3473 = vmatpush1.msra.mxu0 %v3433
    %3474 = vmatprep.subr.mxu0 %v3437
    %3475 = vmatpush1.msra.mxu0 %v3436
    %3476 = vmatprep.subr.mxu0 %v3440
    %3477 = vmatpush1.msra.mxu0 %v3439
    %3478 = vmatprep.subr.mxu0 %v3443
    %3479 = vmatpush1.msra.mxu0 %v3442
    %3480 = vmatprep.subr.mxu0 %v3446
    %3481 = vmatpush1.msra.mxu0 %v3445
    %3482 = vmatprep.subr.mxu0 %v3449
    %3483 = vmatpush1.msra.mxu0 %v3448
    %3484 = vmatprep.subr.mxu0 %v3452
    %3485 = vmatpush1.msra.mxu0 %v3451
    %3486 = vmatprep.subr.mxu0 0.0
    %3487 = vmatpush1.msra.mxu0 0.0
    %3488 = vmatprep.subr.mxu0 0.0
    %3489 = vmatpush1.msra.mxu0 0.0
    %3490 = vmatprep.subr.mxu0 0.0
    %3491 = vmatpush1.msra.mxu0 0.0
    %3492 = vmatprep.subr.mxu0 0.0
    %3493 = vmatpush1.msra.mxu0 0.0
    %3494 = vmatprep.subr.mxu0 0.0
    %3495 = vmatpush1.msra.mxu0 0.0
    %3496 = vmatprep.subr.mxu0 0.0
    %3497 = vmatpush1.msra.mxu0 0.0
    %3498 = vmatprep.subr.mxu0 0.0
    %3499 = vmatpush1.msra.mxu0 0.0
    %3500 = vmatprep.subr.mxu0 0.0
    %3501 = vmatpush1.msra.mxu0 0.0
    %3502 = vmatprep.subr.mxu0 0.0
    %3503 = vmatpush1.msra.mxu0 0.0
    %3504 = vmatprep.subr.mxu0 0.0
    %3505 = vmatpush1.msra.mxu0 0.0
    %3506 = vmatprep.subr.mxu0 0.0
    %3507 = vmatpush1.msra.mxu0 0.0
    %3508 = vmatprep.subr.mxu0 0.0
    %3509 = vmatpush1.msra.mxu0 0.0
    %3510 = vmatprep.subr.mxu0 0.0
    %3511 = vmatpush1.msra.mxu0 0.0
    %3512 = vmatprep.subr.mxu0 0.0
    %3513 = vmatpush1.msra.mxu0 0.0
    %3514 = vmatprep.subr.mxu0 0.0
    %3515 = vmatpush1.msra.mxu0 0.0
    %3516 = vmatprep.subr.mxu0 0.0
    %3517 = vmatpush1.msra.mxu0 0.0
    %3518 = vmatprep.mubr.f32.mxu0 0.0
    %3519 = vmatmul.mubr.f32.gmra.mrb[0].mxu0 %v3214
    %v3520 = vpop.f32.mrb[0].mxu0
    %v3521 = vadd.f32 0.0, %v3520
    %v3522 = vpop.f32.mrb[0].mxu0
    %v3523 = vadd.f32 0.0, %v3522
    %3524 = vdwg.mxu0
    %3525 = vmatprep.subr.mxu0 0.0
    %3526 = vmatpush1.msra.mxu0 %v3408
    %3527 = vmatprep.subr.mxu0 0.0
    %3528 = vmatpush1.msra.mxu0 %v3411
    %3529 = vmatprep.subr.mxu0 0.0
    %3530 = vmatpush1.msra.mxu0 %v3414
    %3531 = vmatprep.subr.mxu0 0.0
    %3532 = vmatpush1.msra.mxu0 %v3417
    %3533 = vmatprep.subr.mxu0 0.0
    %3534 = vmatpush1.msra.mxu0 %v3420
    %3535 = vmatprep.subr.mxu0 0.0
    %3536 = vmatpush1.msra.mxu0 %v3423
    %3537 = vmatprep.subr.mxu0 0.0
    %3538 = vmatpush1.msra.mxu0 %v3426
    %3539 = vmatprep.subr.mxu0 0.0
    %3540 = vmatpush1.msra.mxu0 %v3429
    %3541 = vmatprep.subr.mxu0 0.0
    %3542 = vmatpush1.msra.mxu0 %v3432
    %3543 = vmatprep.subr.mxu0 0.0
    %3544 = vmatpush1.msra.mxu0 %v3435
    %3545 = vmatprep.subr.mxu0 0.0
    %3546 = vmatpush1.msra.mxu0 %v3438
    %3547 = vmatprep.subr.mxu0 0.0
    %3548 = vmatpush1.msra.mxu0 %v3441
    %3549 = vmatprep.subr.mxu0 0.0
    %3550 = vmatpush1.msra.mxu0 %v3444
    %3551 = vmatprep.subr.mxu0 0.0
    %3552 = vmatpush1.msra.mxu0 %v3447
    %3553 = vmatprep.subr.mxu0 0.0
    %3554 = vmatpush1.msra.mxu0 %v3450
    %3555 = vmatprep.subr.mxu0 0.0
    %3556 = vmatpush1.msra.mxu0 %v3453
    %3557 = vmatprep.subr.mxu0 0.0
    %3558 = vmatpush1.msra.mxu0 0.0
    %3559 = vmatprep.subr.mxu0 0.0
    %3560 = vmatpush1.msra.mxu0 0.0
    %3561 = vmatprep.subr.mxu0 0.0
    %3562 = vmatpush1.msra.mxu0 0.0
    %3563 = vmatprep.subr.mxu0 0.0
    %3564 = vmatpush1.msra.mxu0 0.0
    %3565 = vmatprep.subr.mxu0 0.0
    %3566 = vmatpush1.msra.mxu0 0.0
    %3567 = vmatprep.subr.mxu0 0.0
    %3568 = vmatpush1.msra.mxu0 0.0
    %3569 = vmatprep.subr.mxu0 0.0
    %3570 = vmatpush1.msra.mxu0 0.0
    %3571 = vmatprep.subr.mxu0 0.0
    %3572 = vmatpush1.msra.mxu0 0.0
    %3573 = vmatprep.subr.mxu0 0.0
    %3574 = vmatpush1.msra.mxu0 0.0
    %3575 = vmatprep.subr.mxu0 0.0
    %3576 = vmatpush1.msra.mxu0 0.0
    %3577 = vmatprep.subr.mxu0 0.0
    %3578 = vmatpush1.msra.mxu0 0.0
    %3579 = vmatprep.subr.mxu0 0.0
    %3580 = vmatpush1.msra.mxu0 0.0
    %3581 = vmatprep.subr.mxu0 0.0
    %3582 = vmatpush1.msra.mxu0 0.0
    %3583 = vmatprep.subr.mxu0 0.0
    %3584 = vmatpush1.msra.mxu0 0.0
    %3585 = vmatprep.subr.mxu0 0.0
    %3586 = vmatpush1.msra.mxu0 0.0
    %3587 = vmatprep.subr.mxu0 0.0
    %3588 = vmatpush1.msra.mxu0 0.0
    %3589 = vmatprep.mubr.f32.mxu0 0.0
    %3590 = vmatmul.mubr.f32.gmra.mrb[0].mxu0 %v3214
    %v3591 = vpop.f32.mrb[0].mxu0
    %v3592 = vadd.f32 0.0, %v3591
    %v3593 = vpop.f32.mrb[0].mxu0
    %3594 = vdwg.mxu0
    %v3595 = vld [vmem:[%s1437] sm:$0xff]
    %v3596 = vld [vmem:[%s1437 + $0x8] sm:$0xff]
    %v3597 = vld [vmem:[%s1437 + $0x10] sm:$0xff]
    %v3598 = vld [vmem:[%s1433 + $0x18] sm:$0xff]
    %v3599 = vld [vmem:[%s1433 + $0x20] sm:$0xff]
    %v3600 = vld [vmem:[%s1433 + $0x28] sm:$0xff]
    %v3601 = vadd.f32 %v3595, %v3332
    %v3602 = vxor.u32 %v3601, 2147483648
    %v3603 = vmul.f32 %v3602, 1.442695
    %v3604 = vpow.pop %v3603
    %v3605 = vadd.f32 %v3604, 1.0
    %v3606 = vrcp.pop %v3605
    %v3607 = vmul.f32 1.0, %v3606
    %v3608 = vadd.f32 %v3596, %v3334
    %v3609 = vxor.u32 %v3608, 2147483648
    %v3610 = vmul.f32 %v3609, 1.442695
    %v3611 = vpow.pop %v3610
    %v3612 = vadd.f32 %v3611, 1.0
    %v3613 = vrcp.pop %v3612
    %v3614 = vmul.f32 1.0, %v3613
    %v3615 = vadd.f32 %v3403, %v614
    %v3616 = vmul.f32 %v3607, %v3615
    %v3617 = vadd.f32 %v3597, %v3616
    %v3618 = vtanh.pop %v3617
    %v3619 = vsub.f32 1.0, %v3614
    %v3620 = vmul.f32 %v3619, %v3618
    %v3621 = vmul.f32 %v3614, %v3192
    %v3622 = vadd.f32 %v3620, %v3621
    %v3623 = vadd.f32 %v3598, %v3521
    %v3624 = vxor.u32 %v3623, 2147483648
    %v3625 = vmul.f32 %v3624, 1.442695
    %v3626 = vpow.pop %v3625
    %v3627 = vadd.f32 %v3626, 1.0
    %v3628 = vrcp.pop %v3627
    %v3629 = vmul.f32 1.0, %v3628
    %v3630 = vadd.f32 %v3599, %v3523
    %v3631 = vxor.u32 %v3630, 2147483648
    %v3632 = vmul.f32 %v3631, 1.442695
    %v3633 = vpow.pop %v3632
    %v3634 = vadd.f32 %v3633, 1.0
    %v3635 = vrcp.pop %v3634
    %v3636 = vmul.f32 1.0, %v3635
    %v3637 = vadd.f32 %v3592, %v621
    %v3638 = vmul.f32 %v3629, %v3637
    %v3639 = vadd.f32 %v3600, %v3638
    %v3640 = vtanh.pop %v3639
    %v3641 = vsub.f32 1.0, %v3636
    %v3642 = vmul.f32 %v3641, %v3640
    %v3643 = vmul.f32 %v3636, %v3214
    %v3644 = vadd.f32 %v3642, %v3643
    %3645 = vst [vmem:[%s1487] sm:$0xff] %v3622
    %3646 = vst [vmem:[%s1485 + $0x8] sm:$0xff] %v3644
    %v3647 = vld [vmem:[#allocation8] sm:$0xff]
    %v3648 = vld [vmem:[#allocation8 + $0x8] sm:$0xff]
    %v3649 = vld [vmem:[#allocation8 + $0x10] sm:$0xff]
    %v3650 = vld [vmem:[#allocation8 + $0x18] sm:$0xff]
    %v3651 = vld [vmem:[#allocation8 + $0x20] sm:$0xff]
    %v3652 = vld [vmem:[#allocation8 + $0x28] sm:$0xff]
    %v3653 = vld [vmem:[#allocation8 + $0x30] sm:$0xff]
    %v3654 = vld [vmem:[#allocation8 + $0x38] sm:$0xff]
    %v3655 = vld [vmem:[#allocation8 + $0x40] sm:$0xff]
    %v3656 = vld [vmem:[#allocation8 + $0x48] sm:$0xff]
    %v3657 = vld [vmem:[#allocation8 + $0x50] sm:$0xff]
    %v3658 = vld [vmem:[#allocation8 + $0x58] sm:$0xff]
    %v3659 = vld [vmem:[#allocation8 + $0x60] sm:$0xff]
    %v3660 = vld [vmem:[#allocation8 + $0x68] sm:$0xff]
    %v3661 = vld [vmem:[#allocation8 + $0x70] sm:$0xff]
    %v3662 = vld [vmem:[#allocation8 + $0x78] sm:$0xff]
    %v3663 = vld [vmem:[#allocation8 + $0x80] sm:$0xff]
    %v3664 = vld [vmem:[#allocation8 + $0x88] sm:$0xff]
    %v3665 = vld [vmem:[#allocation8 + $0x90] sm:$0xff]
    %v3666 = vld [vmem:[#allocation8 + $0x98] sm:$0xff]
    %v3667 = vld [vmem:[#allocation8 + $0xa0] sm:$0xff]
    %v3668 = vld [vmem:[#allocation8 + $0xa8] sm:$0xff]
    %v3669 = vld [vmem:[#allocation8 + $0xb0] sm:$0xff]
    %v3670 = vld [vmem:[#allocation8 + $0xb8] sm:$0xff]
    %v3671 = vld [vmem:[#allocation8 + $0xc0] sm:$0xff]
    %v3672 = vld [vmem:[#allocation8 + $0xc8] sm:$0xff]
    %v3673 = vld [vmem:[#allocation8 + $0xd0] sm:$0xff]
    %v3674 = vld [vmem:[#allocation8 + $0xd8] sm:$0xff]
    %v3675 = vld [vmem:[#allocation8 + $0xe0] sm:$0xff]
    %v3676 = vld [vmem:[#allocation8 + $0xe8] sm:$0xff]
    %v3677 = vld [vmem:[#allocation8 + $0xf0] sm:$0xff]
    %v3678 = vld [vmem:[#allocation8 + $0xf8] sm:$0xff]
    %v3679 = vld [vmem:[#allocation8 + $0x100] sm:$0xff]
    %v3680 = vld [vmem:[#allocation8 + $0x108] sm:$0xff]
    %v3681 = vld [vmem:[#allocation8 + $0x110] sm:$0xff]
    %v3682 = vld [vmem:[#allocation8 + $0x118] sm:$0xff]
    %v3683 = vld [vmem:[#allocation8 + $0x120] sm:$0xff]
    %v3684 = vld [vmem:[#allocation8 + $0x128] sm:$0xff]
    %v3685 = vld [vmem:[#allocation8 + $0x130] sm:$0xff]
    %v3686 = vld [vmem:[#allocation8 + $0x138] sm:$0xff]
    %v3687 = vld [vmem:[#allocation8 + $0x140] sm:$0xff]
    %v3688 = vld [vmem:[#allocation8 + $0x148] sm:$0xff]
    %v3689 = vld [vmem:[#allocation8 + $0x150] sm:$0xff]
    %v3690 = vld [vmem:[#allocation8 + $0x158] sm:$0xff]
    %v3691 = vld [vmem:[#allocation8 + $0x160] sm:$0xff]
    %v3692 = vld [vmem:[#allocation8 + $0x168] sm:$0xff]
    %v3693 = vld [vmem:[#allocation8 + $0x170] sm:$0xff]
    %v3694 = vld [vmem:[#allocation8 + $0x178] sm:$0xff]
    %3695 = vmatprep.subr.mxu0 %v3648
    %3696 = vmatpush1.msra.mxu0 %v3647
    %3697 = vmatprep.subr.mxu0 %v3651
    %3698 = vmatpush1.msra.mxu0 %v3650
    %3699 = vmatprep.subr.mxu0 %v3654
    %3700 = vmatpush1.msra.mxu0 %v3653
    %3701 = vmatprep.subr.mxu0 %v3657
    %3702 = vmatpush1.msra.mxu0 %v3656
    %3703 = vmatprep.subr.mxu0 %v3660
    %3704 = vmatpush1.msra.mxu0 %v3659
    %3705 = vmatprep.subr.mxu0 %v3663
    %3706 = vmatpush1.msra.mxu0 %v3662
    %3707 = vmatprep.subr.mxu0 %v3666
    %3708 = vmatpush1.msra.mxu0 %v3665
    %3709 = vmatprep.subr.mxu0 %v3669
    %3710 = vmatpush1.msra.mxu0 %v3668
    %3711 = vmatprep.subr.mxu0 %v3672
    %3712 = vmatpush1.msra.mxu0 %v3671
    %3713 = vmatprep.subr.mxu0 %v3675
    %3714 = vmatpush1.msra.mxu0 %v3674
    %3715 = vmatprep.subr.mxu0 %v3678
    %3716 = vmatpush1.msra.mxu0 %v3677
    %3717 = vmatprep.subr.mxu0 %v3681
    %3718 = vmatpush1.msra.mxu0 %v3680
    %3719 = vmatprep.subr.mxu0 %v3684
    %3720 = vmatpush1.msra.mxu0 %v3683
    %3721 = vmatprep.subr.mxu0 %v3687
    %3722 = vmatpush1.msra.mxu0 %v3686
    %3723 = vmatprep.subr.mxu0 %v3690
    %3724 = vmatpush1.msra.mxu0 %v3689
    %3725 = vmatprep.subr.mxu0 %v3693
    %3726 = vmatpush1.msra.mxu0 %v3692
    %3727 = vmatprep.subr.mxu0 0.0
    %3728 = vmatpush1.msra.mxu0 0.0
    %3729 = vmatprep.subr.mxu0 0.0
    %3730 = vmatpush1.msra.mxu0 0.0
    %3731 = vmatprep.subr.mxu0 0.0
    %3732 = vmatpush1.msra.mxu0 0.0
    %3733 = vmatprep.subr.mxu0 0.0
    %3734 = vmatpush1.msra.mxu0 0.0
    %3735 = vmatprep.subr.mxu0 0.0
    %3736 = vmatpush1.msra.mxu0 0.0
    %3737 = vmatprep.subr.mxu0 0.0
    %3738 = vmatpush1.msra.mxu0 0.0
    %3739 = vmatprep.subr.mxu0 0.0
    %3740 = vmatpush1.msra.mxu0 0.0
    %3741 = vmatprep.subr.mxu0 0.0
    %3742 = vmatpush1.msra.mxu0 0.0
    %3743 = vmatprep.subr.mxu0 0.0
    %3744 = vmatpush1.msra.mxu0 0.0
    %3745 = vmatprep.subr.mxu0 0.0
    %3746 = vmatpush1.msra.mxu0 0.0
    %3747 = vmatprep.subr.mxu0 0.0
    %3748 = vmatpush1.msra.mxu0 0.0
    %3749 = vmatprep.subr.mxu0 0.0
    %3750 = vmatpush1.msra.mxu0 0.0
    %3751 = vmatprep.subr.mxu0 0.0
    %3752 = vmatpush1.msra.mxu0 0.0
    %3753 = vmatprep.subr.mxu0 0.0
    %3754 = vmatpush1.msra.mxu0 0.0
    %3755 = vmatprep.subr.mxu0 0.0
    %3756 = vmatpush1.msra.mxu0 0.0
    %3757 = vmatprep.subr.mxu0 0.0
    %3758 = vmatpush1.msra.mxu0 0.0
    %3759 = vmatprep.mubr.f32.mxu0 0.0
    %3760 = vmatmul.mubr.f32.gmra.mrb[0].mxu0 %v3622
    %v3761 = vpop.f32.mrb[0].mxu0
    %v3762 = vadd.f32 0.0, %v3761
    %v3763 = vpop.f32.mrb[0].mxu0
    %v3764 = vadd.f32 0.0, %v3763
    %3765 = vdwg.mxu0
    %3766 = vmatprep.subr.mxu0 0.0
    %3767 = vmatpush1.msra.mxu0 %v3649
    %3768 = vmatprep.subr.mxu0 0.0
    %3769 = vmatpush1.msra.mxu0 %v3652
    %3770 = vmatprep.subr.mxu0 0.0
    %3771 = vmatpush1.msra.mxu0 %v3655
    %3772 = vmatprep.subr.mxu0 0.0
    %3773 = vmatpush1.msra.mxu0 %v3658
    %3774 = vmatprep.subr.mxu0 0.0
    %3775 = vmatpush1.msra.mxu0 %v3661
    %3776 = vmatprep.subr.mxu0 0.0
    %3777 = vmatpush1.msra.mxu0 %v3664
    %3778 = vmatprep.subr.mxu0 0.0
    %3779 = vmatpush1.msra.mxu0 %v3667
    %3780 = vmatprep.subr.mxu0 0.0
    %3781 = vmatpush1.msra.mxu0 %v3670
    %3782 = vmatprep.subr.mxu0 0.0
    %3783 = vmatpush1.msra.mxu0 %v3673
    %3784 = vmatprep.subr.mxu0 0.0
    %3785 = vmatpush1.msra.mxu0 %v3676
    %3786 = vmatprep.subr.mxu0 0.0
    %3787 = vmatpush1.msra.mxu0 %v3679
    %3788 = vmatprep.subr.mxu0 0.0
    %3789 = vmatpush1.msra.mxu0 %v3682
    %3790 = vmatprep.subr.mxu0 0.0
    %3791 = vmatpush1.msra.mxu0 %v3685
    %3792 = vmatprep.subr.mxu0 0.0
    %3793 = vmatpush1.msra.mxu0 %v3688
    %3794 = vmatprep.subr.mxu0 0.0
    %3795 = vmatpush1.msra.mxu0 %v3691
    %3796 = vmatprep.subr.mxu0 0.0
    %3797 = vmatpush1.msra.mxu0 %v3694
    %3798 = vmatprep.subr.mxu0 0.0
    %3799 = vmatpush1.msra.mxu0 0.0
    %3800 = vmatprep.subr.mxu0 0.0
    %3801 = vmatpush1.msra.mxu0 0.0
    %3802 = vmatprep.subr.mxu0 0.0
    %3803 = vmatpush1.msra.mxu0 0.0
    %3804 = vmatprep.subr.mxu0 0.0
    %3805 = vmatpush1.msra.mxu0 0.0
    %3806 = vmatprep.subr.mxu0 0.0
    %3807 = vmatpush1.msra.mxu0 0.0
    %3808 = vmatprep.subr.mxu0 0.0
    %3809 = vmatpush1.msra.mxu0 0.0
    %3810 = vmatprep.subr.mxu0 0.0
    %3811 = vmatpush1.msra.mxu0 0.0
    %3812 = vmatprep.subr.mxu0 0.0
    %3813 = vmatpush1.msra.mxu0 0.0
    %3814 = vmatprep.subr.mxu0 0.0
    %3815 = vmatpush1.msra.mxu0 0.0
    %3816 = vmatprep.subr.mxu0 0.0
    %3817 = vmatpush1.msra.mxu0 0.0
    %3818 = vmatprep.subr.mxu0 0.0
    %3819 = vmatpush1.msra.mxu0 0.0
    %3820 = vmatprep.subr.mxu0 0.0
    %3821 = vmatpush1.msra.mxu0 0.0
    %3822 = vmatprep.subr.mxu0 0.0
    %3823 = vmatpush1.msra.mxu0 0.0
    %3824 = vmatprep.subr.mxu0 0.0
    %3825 = vmatpush1.msra.mxu0 0.0
    %3826 = vmatprep.subr.mxu0 0.0
    %3827 = vmatpush1.msra.mxu0 0.0
    %3828 = vmatprep.subr.mxu0 0.0
    %3829 = vmatpush1.msra.mxu0 0.0
    %3830 = vmatprep.mubr.f32.mxu0 0.0
    %3831 = vmatmul.mubr.f32.gmra.mrb[0].mxu0 %v3622
    %v3832 = vpop.f32.mrb[0].mxu0
    %v3833 = vadd.f32 0.0, %v3832
    %v3834 = vpop.f32.mrb[0].mxu0
    %3835 = vdwg.mxu0
    %v3836 = vld [vmem:[#allocation9] sm:$0xff]
    %v3837 = vld [vmem:[#allocation9 + $0x8] sm:$0xff]
    %v3838 = vld [vmem:[#allocation9 + $0x10] sm:$0xff]
    %v3839 = vld [vmem:[#allocation9 + $0x18] sm:$0xff]
    %v3840 = vld [vmem:[#allocation9 + $0x20] sm:$0xff]
    %v3841 = vld [vmem:[#allocation9 + $0x28] sm:$0xff]
    %v3842 = vld [vmem:[#allocation9 + $0x30] sm:$0xff]
    %v3843 = vld [vmem:[#allocation9 + $0x38] sm:$0xff]
    %v3844 = vld [vmem:[#allocation9 + $0x40] sm:$0xff]
    %v3845 = vld [vmem:[#allocation9 + $0x48] sm:$0xff]
    %v3846 = vld [vmem:[#allocation9 + $0x50] sm:$0xff]
    %v3847 = vld [vmem:[#allocation9 + $0x58] sm:$0xff]
    %v3848 = vld [vmem:[#allocation9 + $0x60] sm:$0xff]
    %v3849 = vld [vmem:[#allocation9 + $0x68] sm:$0xff]
    %v3850 = vld [vmem:[#allocation9 + $0x70] sm:$0xff]
    %v3851 = vld [vmem:[#allocation9 + $0x78] sm:$0xff]
    %v3852 = vld [vmem:[#allocation9 + $0x80] sm:$0xff]
    %v3853 = vld [vmem:[#allocation9 + $0x88] sm:$0xff]
    %v3854 = vld [vmem:[#allocation9 + $0x90] sm:$0xff]
    %v3855 = vld [vmem:[#allocation9 + $0x98] sm:$0xff]
    %v3856 = vld [vmem:[#allocation9 + $0xa0] sm:$0xff]
    %v3857 = vld [vmem:[#allocation9 + $0xa8] sm:$0xff]
    %v3858 = vld [vmem:[#allocation9 + $0xb0] sm:$0xff]
    %v3859 = vld [vmem:[#allocation9 + $0xb8] sm:$0xff]
    %v3860 = vld [vmem:[#allocation9 + $0xc0] sm:$0xff]
    %v3861 = vld [vmem:[#allocation9 + $0xc8] sm:$0xff]
    %v3862 = vld [vmem:[#allocation9 + $0xd0] sm:$0xff]
    %v3863 = vld [vmem:[#allocation9 + $0xd8] sm:$0xff]
    %v3864 = vld [vmem:[#allocation9 + $0xe0] sm:$0xff]
    %v3865 = vld [vmem:[#allocation9 + $0xe8] sm:$0xff]
    %v3866 = vld [vmem:[#allocation9 + $0xf0] sm:$0xff]
    %v3867 = vld [vmem:[#allocation9 + $0xf8] sm:$0xff]
    %v3868 = vld [vmem:[#allocation9 + $0x100] sm:$0xff]
    %v3869 = vld [vmem:[#allocation9 + $0x108] sm:$0xff]
    %v3870 = vld [vmem:[#allocation9 + $0x110] sm:$0xff]
    %v3871 = vld [vmem:[#allocation9 + $0x118] sm:$0xff]
    %v3872 = vld [vmem:[#allocation9 + $0x120] sm:$0xff]
    %v3873 = vld [vmem:[#allocation9 + $0x128] sm:$0xff]
    %v3874 = vld [vmem:[#allocation9 + $0x130] sm:$0xff]
    %v3875 = vld [vmem:[#allocation9 + $0x138] sm:$0xff]
    %v3876 = vld [vmem:[#allocation9 + $0x140] sm:$0xff]
    %v3877 = vld [vmem:[#allocation9 + $0x148] sm:$0xff]
    %v3878 = vld [vmem:[#allocation9 + $0x150] sm:$0xff]
    %v3879 = vld [vmem:[#allocation9 + $0x158] sm:$0xff]
    %v3880 = vld [vmem:[#allocation9 + $0x160] sm:$0xff]
    %v3881 = vld [vmem:[#allocation9 + $0x168] sm:$0xff]
    %v3882 = vld [vmem:[#allocation9 + $0x170] sm:$0xff]
    %v3883 = vld [vmem:[#allocation9 + $0x178] sm:$0xff]
    %3884 = vmatprep.subr.mxu0 %v3837
    %3885 = vmatpush1.msra.mxu0 %v3836
    %3886 = vmatprep.subr.mxu0 %v3840
    %3887 = vmatpush1.msra.mxu0 %v3839
    %3888 = vmatprep.subr.mxu0 %v3843
    %3889 = vmatpush1.msra.mxu0 %v3842
    %3890 = vmatprep.subr.mxu0 %v3846
    %3891 = vmatpush1.msra.mxu0 %v3845
    %3892 = vmatprep.subr.mxu0 %v3849
    %3893 = vmatpush1.msra.mxu0 %v3848
    %3894 = vmatprep.subr.mxu0 %v3852
    %3895 = vmatpush1.msra.mxu0 %v3851
    %3896 = vmatprep.subr.mxu0 %v3855
    %3897 = vmatpush1.msra.mxu0 %v3854
    %3898 = vmatprep.subr.mxu0 %v3858
    %3899 = vmatpush1.msra.mxu0 %v3857
    %3900 = vmatprep.subr.mxu0 %v3861
    %3901 = vmatpush1.msra.mxu0 %v3860
    %3902 = vmatprep.subr.mxu0 %v3864
    %3903 = vmatpush1.msra.mxu0 %v3863
    %3904 = vmatprep.subr.mxu0 %v3867
    %3905 = vmatpush1.msra.mxu0 %v3866
    %3906 = vmatprep.subr.mxu0 %v3870
    %3907 = vmatpush1.msra.mxu0 %v3869
    %3908 = vmatprep.subr.mxu0 %v3873
    %3909 = vmatpush1.msra.mxu0 %v3872
    %3910 = vmatprep.subr.mxu0 %v3876
    %3911 = vmatpush1.msra.mxu0 %v3875
    %3912 = vmatprep.subr.mxu0 %v3879
    %3913 = vmatpush1.msra.mxu0 %v3878
    %3914 = vmatprep.subr.mxu0 %v3882
    %3915 = vmatpush1.msra.mxu0 %v3881
    %3916 = vmatprep.subr.mxu0 0.0
    %3917 = vmatpush1.msra.mxu0 0.0
    %3918 = vmatprep.subr.mxu0 0.0
    %3919 = vmatpush1.msra.mxu0 0.0
    %3920 = vmatprep.subr.mxu0 0.0
    %3921 = vmatpush1.msra.mxu0 0.0
    %3922 = vmatprep.subr.mxu0 0.0
    %3923 = vmatpush1.msra.mxu0 0.0
    %3924 = vmatprep.subr.mxu0 0.0
    %3925 = vmatpush1.msra.mxu0 0.0
    %3926 = vmatprep.subr.mxu0 0.0
    %3927 = vmatpush1.msra.mxu0 0.0
    %3928 = vmatprep.subr.mxu0 0.0
    %3929 = vmatpush1.msra.mxu0 0.0
    %3930 = vmatprep.subr.mxu0 0.0
    %3931 = vmatpush1.msra.mxu0 0.0
    %3932 = vmatprep.subr.mxu0 0.0
    %3933 = vmatpush1.msra.mxu0 0.0
    %3934 = vmatprep.subr.mxu0 0.0
    %3935 = vmatpush1.msra.mxu0 0.0
    %3936 = vmatprep.subr.mxu0 0.0
    %3937 = vmatpush1.msra.mxu0 0.0
    %3938 = vmatprep.subr.mxu0 0.0
    %3939 = vmatpush1.msra.mxu0 0.0
    %3940 = vmatprep.subr.mxu0 0.0
    %3941 = vmatpush1.msra.mxu0 0.0
    %3942 = vmatprep.subr.mxu0 0.0
    %3943 = vmatpush1.msra.mxu0 0.0
    %3944 = vmatprep.subr.mxu0 0.0
    %3945 = vmatpush1.msra.mxu0 0.0
    %3946 = vmatprep.subr.mxu0 0.0
    %3947 = vmatpush1.msra.mxu0 0.0
    %3948 = vmatprep.mubr.f32.mxu0 0.0
    %3949 = vmatmul.mubr.f32.gmra.mrb[0].mxu0 %v3644
    %v3950 = vpop.f32.mrb[0].mxu0
    %v3951 = vadd.f32 0.0, %v3950
    %v3952 = vpop.f32.mrb[0].mxu0
    %v3953 = vadd.f32 0.0, %v3952
    %3954 = vdwg.mxu0
    %3955 = vmatprep.subr.mxu0 0.0
    %3956 = vmatpush1.msra.mxu0 %v3838
    %3957 = vmatprep.subr.mxu0 0.0
    %3958 = vmatpush1.msra.mxu0 %v3841
    %3959 = vmatprep.subr.mxu0 0.0
    %3960 = vmatpush1.msra.mxu0 %v3844
    %3961 = vmatprep.subr.mxu0 0.0
    %3962 = vmatpush1.msra.mxu0 %v3847
    %3963 = vmatprep.subr.mxu0 0.0
    %3964 = vmatpush1.msra.mxu0 %v3850
    %3965 = vmatprep.subr.mxu0 0.0
    %3966 = vmatpush1.msra.mxu0 %v3853
    %3967 = vmatprep.subr.mxu0 0.0
    %3968 = vmatpush1.msra.mxu0 %v3856
    %3969 = vmatprep.subr.mxu0 0.0
    %3970 = vmatpush1.msra.mxu0 %v3859
    %3971 = vmatprep.subr.mxu0 0.0
    %3972 = vmatpush1.msra.mxu0 %v3862
    %3973 = vmatprep.subr.mxu0 0.0
    %3974 = vmatpush1.msra.mxu0 %v3865
    %3975 = vmatprep.subr.mxu0 0.0
    %3976 = vmatpush1.msra.mxu0 %v3868
    %3977 = vmatprep.subr.mxu0 0.0
    %3978 = vmatpush1.msra.mxu0 %v3871
    %3979 = vmatprep.subr.mxu0 0.0
    %3980 = vmatpush1.msra.mxu0 %v3874
    %3981 = vmatprep.subr.mxu0 0.0
    %3982 = vmatpush1.msra.mxu0 %v3877
    %3983 = vmatprep.subr.mxu0 0.0
    %3984 = vmatpush1.msra.mxu0 %v3880
    %3985 = vmatprep.subr.mxu0 0.0
    %3986 = vmatpush1.msra.mxu0 %v3883
    %3987 = vmatprep.subr.mxu0 0.0
    %3988 = vmatpush1.msra.mxu0 0.0
    %3989 = vmatprep.subr.mxu0 0.0
    %3990 = vmatpush1.msra.mxu0 0.0
    %3991 = vmatprep.subr.mxu0 0.0
    %3992 = vmatpush1.msra.mxu0 0.0
    %3993 = vmatprep.subr.mxu0 0.0
    %3994 = vmatpush1.msra.mxu0 0.0
    %3995 = vmatprep.subr.mxu0 0.0
    %3996 = vmatpush1.msra.mxu0 0.0
    %3997 = vmatprep.subr.mxu0 0.0
    %3998 = vmatpush1.msra.mxu0 0.0
    %3999 = vmatprep.subr.mxu0 0.0
    %4000 = vmatpush1.msra.mxu0 0.0
    %4001 = vmatprep.subr.mxu0 0.0
    %4002 = vmatpush1.msra.mxu0 0.0
    %4003 = vmatprep.subr.mxu0 0.0
    %4004 = vmatpush1.msra.mxu0 0.0
    %4005 = vmatprep.subr.mxu0 0.0
    %4006 = vmatpush1.msra.mxu0 0.0
    %4007 = vmatprep.subr.mxu0 0.0
    %4008 = vmatpush1.msra.mxu0 0.0
    %4009 = vmatprep.subr.mxu0 0.0
    %4010 = vmatpush1.msra.mxu0 0.0
    %4011 = vmatprep.subr.mxu0 0.0
    %4012 = vmatpush1.msra.mxu0 0.0
    %4013 = vmatprep.subr.mxu0 0.0
    %4014 = vmatpush1.msra.mxu0 0.0
    %4015 = vmatprep.subr.mxu0 0.0
    %4016 = vmatpush1.msra.mxu0 0.0
    %4017 = vmatprep.subr.mxu0 0.0
    %4018 = vmatpush1.msra.mxu0 0.0
    %4019 = vmatprep.mubr.f32.mxu0 0.0
    %4020 = vmatmul.mubr.f32.gmra.mrb[0].mxu0 %v3644
    %v4021 = vpop.f32.mrb[0].mxu0
    %v4022 = vadd.f32 0.0, %v4021
    %v4023 = vpop.f32.mrb[0].mxu0
    %4024 = vdwg.mxu0
    %v4025 = vld [vmem:[%s1004] sm:$0xff]
    %v4026 = vld [vmem:[%s1004 + $0x8] sm:$0xff]
    %v4027 = vld [vmem:[%s1004 + $0x10] sm:$0xff]
    %v4028 = vld [vmem:[#allocation2 + $0x18] sm:$0xff]
    %v4029 = vld [vmem:[#allocation2 + $0x20] sm:$0xff]
    %v4030 = vld [vmem:[#allocation2 + $0x28] sm:$0xff]
    %v4031 = vadd.f32 %v4025, %v3762
    %v4032 = vxor.u32 %v4031, 2147483648
    %v4033 = vmul.f32 %v4032, 1.442695
    %v4034 = vpow.pop %v4033
    %v4035 = vadd.f32 %v4034, 1.0
    %v4036 = vrcp.pop %v4035
    %v4037 = vmul.f32 1.0, %v4036
    %v4038 = vadd.f32 %v4026, %v3764
    %v4039 = vxor.u32 %v4038, 2147483648
    %v4040 = vmul.f32 %v4039, 1.442695
    %v4041 = vpow.pop %v4040
    %v4042 = vadd.f32 %v4041, 1.0
    %v4043 = vrcp.pop %v4042
    %v4044 = vmul.f32 1.0, %v4043
    %v4045 = vadd.f32 %v3833, %v614
    %v4046 = vmul.f32 %v4037, %v4045
    %v4047 = vadd.f32 %v4027, %v4046
    %v4048 = vtanh.pop %v4047
    %v4049 = vsub.f32 1.0, %v4044
    %v4050 = vmul.f32 %v4049, %v4048
    %v4051 = vmul.f32 %v4044, %v3622
    %v4052 = vadd.f32 %v4050, %v4051
    %v4053 = vadd.f32 %v4028, %v3951
    %v4054 = vxor.u32 %v4053, 2147483648
    %v4055 = vmul.f32 %v4054, 1.442695
    %v4056 = vpow.pop %v4055
    %v4057 = vadd.f32 %v4056, 1.0
    %v4058 = vrcp.pop %v4057
    %v4059 = vmul.f32 1.0, %v4058
    %v4060 = vadd.f32 %v4029, %v3953
    %v4061 = vxor.u32 %v4060, 2147483648
    %v4062 = vmul.f32 %v4061, 1.442695
    %v4063 = vpow.pop %v4062
    %v4064 = vadd.f32 %v4063, 1.0
    %v4065 = vrcp.pop %v4064
    %v4066 = vmul.f32 1.0, %v4065
    %v4067 = vadd.f32 %v4022, %v621
    %v4068 = vmul.f32 %v4059, %v4067
    %v4069 = vadd.f32 %v4030, %v4068
    %v4070 = vtanh.pop %v4069
    %v4071 = vsub.f32 1.0, %v4066
    %v4072 = vmul.f32 %v4071, %v4070
    %v4073 = vmul.f32 %v4066, %v3644
    %v4074 = vadd.f32 %v4072, %v4073
    %4075 = vst [vmem:[%s1053] sm:$0xff] %v4052
    %4076 = vst [vmem:[#allocation11 + $0x8] sm:$0xff] %v4074
    %4077 = vst [vmem:[#allocation12] sm:$0xff] %v4052
    %4078 = vst [vmem:[#allocation14] sm:$0xff] %v4074
    // Predicated region
    $region46: #{tpu_custom_call.1} parent=1 // pred_check
      _
    $region47: #{tpu_custom_call.1} parent=1 // pred_check_branch
      %4080 = sbr.rel (0) target = $region49
    $region48: #{tpu_custom_call.1} parent=1 // pred_region
      %s4082 = ssub.s32 2048, 2048
      %4083 = vsyncadd [#allocation5], %s4082
      %s4084 = sshll.u32 [#allocation11], 4
      %s4085 = int_to_ptr.vmem [resolvable:$true] %s4084
      %4090 = dma.vmem_to_hbm [thread:$0]  %s4085, 2048, %s7, [#allocation5], 256, 256, 16
    $region49: #{tpu_custom_call.1} parent=1 // pred_fallthru
      _
    // Predicated region
    $region50: #{tpu_custom_call.1} parent=1 // pred_check
      _
    $region51: #{tpu_custom_call.1} parent=1 // pred_check_branch
      %4092 = sbr.rel (0) target = $region53
    $region52: #{tpu_custom_call.1} parent=1 // pred_region
      %s4094 = ssub.s32 128, 128
      %4095 = vsyncadd [#allocation13], %s4094
      %s4097 = sshll.u32 [#allocation12], 4
      %s4098 = int_to_ptr.vmem [resolvable:$true] %s4097
      %4100 = dma.vmem_to_hbm [thread:$0]  %s4098, 128, %s8, [#allocation13]
    $region53: #{tpu_custom_call.1} parent=1 // pred_fallthru
      _
    // Predicated region
    $region54: #{tpu_custom_call.1} parent=1 // pred_check
      _
    $region55: #{tpu_custom_call.1} parent=1 // pred_check_branch
      %4102 = sbr.rel (0) target = $region57
    $region56: #{tpu_custom_call.1} parent=1 // pred_region
      %s4104 = ssub.s32 128, 128
      %4105 = vsyncadd [#allocation13], %s4104
      %s4107 = sshll.u32 [#allocation14], 4
      %s4108 = int_to_ptr.vmem [resolvable:$true] %s4107
      %4110 = dma.vmem_to_hbm [thread:$0]  %s4108, 128, %s9, [#allocation13]
    $region57: #{tpu_custom_call.1} parent=1 // pred_fallthru
      _
    // Predicated region
    $region58: #{tpu_custom_call.1} parent=1 // pred_check
      _
    $region59: #{tpu_custom_call.1} parent=1 // pred_check_branch
      %4112 = sbr.rel (0) target = $region61
    $region60: #{tpu_custom_call.1} parent=1 // pred_region
      %4113 = dma.done [#allocation5], 2048
    $region61: #{tpu_custom_call.1} parent=1 // pred_fallthru
      _
    // Predicated region
    $region62: #{tpu_custom_call.1} parent=1 // pred_check
      _
    $region63: #{tpu_custom_call.1} parent=1 // pred_check_branch
      %4115 = sbr.rel (0) target = $region65
    $region64: #{tpu_custom_call.1} parent=1 // pred_region
      %4116 = dma.done [#allocation13], 128
    $region65: #{tpu_custom_call.1} parent=1 // pred_fallthru
      _
    // Predicated region
    $region66: #{tpu_custom_call.1} parent=1 // pred_check
      _
    $region67: #{tpu_custom_call.1} parent=1 // pred_check_branch
      %4118 = sbr.rel (0) target = $region69
    $region68: #{tpu_custom_call.1} parent=1 // pred_region
      %4119 = dma.done [#allocation13], 128
    $region69: #{tpu_custom_call.1} parent=1 // pred_fallthru
      _
    %4120 = vsyncpa [#allocation4], 1
    %4121 = vsyncpa [#allocation7], 1
    %4122 = vsyncpa [#allocation10], 1
    %4123 = vsyncpa [#allocation5], 1
    %4124 = vsyncpa [#allocation13], 1

</llo_original>
